<compile_context>
chip_gen: v7x
topology: tpu7x:2x2x1
jax: 0.10.0
libtpu: 0.0.40
codegen_flags: <defaults>
</compile_context>

<pallas_src>
import numpy as np

import jax
import jax.numpy as jnp
from jax import lax
from jax.experimental import pallas as pl
from jax.experimental.pallas import tpu as pltpu


# The original module reads an (undefined-in-snippet) global; fix it here.
HEAD_FPN_OUTPUT_STRIDE = 4                      # -> pyramid_features[2] (C3 res)
_STRIDE_TO_PYRAMID_IDX = {16: 0, 8: 1, 4: 2, 2: 3, 1: 4}

# 3x3 tap offsets, tap index t = ky*3 + kx, (dy, dx) = (ky-1, kx-1).
_TAPS = tuple((ky - 1, kx - 1) for ky in range(3) for kx in range(3))


# --------------------------------------------------------------------------
# Host-side operator builders (tiny trace-time constants fed to the kernel).
# --------------------------------------------------------------------------
def _interp_weights_1d(in_size, out_size):
    """1-D interpolation matrix (out, in) matching PyTorch bilinear,
    align_corners=False (half-pixel centers, edge clamped)."""
    m = np.zeros((out_size, in_size), np.float32)
    scale = in_size / out_size
    for i in range(out_size):
        src = max((i + 0.5) * scale - 0.5, 0.0)
        i0 = min(int(np.floor(src)), in_size - 1)
        i1 = min(i0 + 1, in_size - 1)
        w1 = src - i0
        m[i, i0] += 1.0 - w1
        m[i, i1] += w1
    return m


def _bilinear_upsample_matrix(src_hw, dst_hw):
    """(Hs*Ws, Hd*Wd) operator so that x(C, Hs*Ws) @ U == bilinear resize.
    2x bilinear weights (0.25 / 0.75 and their products) are exact in bf16.
    TODO(synk): at production sizes replace with a separable / roll-based 2x
    stencil; the dense operator is O(S^2) and would blow VMEM (v7x first)."""
    mh = _interp_weights_1d(src_hw[0], dst_hw[0])
    mw = _interp_weights_1d(src_hw[1], dst_hw[1])
    return np.kron(mh, mw).T.astype(np.float32)


def _tap_masks(h, w):
    """(9, 1, H*W) 0/1 edge masks: mask[t, 0, hh*W+ww] == 1 iff the tap source
    pixel (hh+dy, ww+dx) is in bounds (padding=1 zero-padding semantics)."""
    m = np.zeros((9, 1, h * w), np.float32)
    for t, (dy, dx) in enumerate(_TAPS):
        for hh in range(h):
            for ww in range(w):
                if 0 <= hh + dy < h and 0 <= ww + dx < w:
                    m[t, 0, hh * w + ww] = 1.0
    return m


def _conv3x3_tap_weights(wgt):
    """(Cout, Cin, 3, 3) -> (9, Cout, Cin); tap index t = ky*3 + kx."""
    cout, cin = wgt.shape[0], wgt.shape[1]
    return jnp.transpose(wgt, (2, 3, 0, 1)).reshape(9, cout, cin)


# --------------------------------------------------------------------------
# In-kernel helpers.
# --------------------------------------------------------------------------
def _shift_lanes(x, off):
    """y[:, s] = x[:, s + off] for 0 <= s + off < S, else 0 (no wrap-around).

    Static lane slice + concat with zeros: Mosaic lowers this to in-vreg lane
    shifts/selects (XLU/VPU), so it co-issues with the MXU matmuls and needs
    no O(S^2) shift operators.
    """
    if off == 0:
        return x
    c, s = x.shape
    fill = jnp.zeros((c, abs(off)), x.dtype)
    if off > 0:
        return jnp.concatenate([x[:, off:], fill], axis=1)
    return jnp.concatenate([fill, x[:, :s + off]], axis=1)


def _conv3x3(x_bf16, w9_ref, b_ref, mask_ref, wdim, relu):
    """3x3 conv (padding=1) on a lane-dense (Cin, S=H*W) bf16 activation.

    Per-tap accumulation: 9 small (Cout,Cin)@(Cin,S) MXU matmuls accumulated
    in f32 (no im2col concat, no shift matrices). Taps = lane shift + 0/1
    edge mask; dx==0 taps need no mask because the zero-fill of the shift
    already blanks the out-of-range rows exactly.
    """
    acc = None
    for t, (dy, dx) in enumerate(_TAPS):
        tap = _shift_lanes(x_bf16, dy * wdim + dx)
        if dx != 0:
            tap = tap * mask_ref[t]                     # (1, S) bf16 broadcast
        y = jnp.dot(w9_ref[t], tap, preferred_element_type=jnp.float32)
        acc = y if acc is None else acc + y
    acc = acc + b_ref[...]                              # f32 bias add (VPU)
    if relu:
        acc = jnp.maximum(acc, 0.0)
    return acc


# --------------------------------------------------------------------------
# Fused FPNDecoder forward.
# --------------------------------------------------------------------------
def fpn_decoder_forward(x_top_fused_c5, encoder_features_c1_c4, params):
    """Pallas forward pass matching FPNDecoder. All tensors are NCHW."""
    c1, c2, c3, c4 = encoder_features_c1_c4
    levels = [c1, c2, c3, c4, x_top_fused_c5]           # same ordering as module
    sel = _STRIDE_TO_PYRAMID_IDX[HEAD_FPN_OUTPUT_STRIDE]
    num_stages = sel + 1
    # Pyramid levels beyond `sel` never reach the returned output, so the fused
    # kernel only computes the chain that matters (output-equivalent).

    fpn = params["lateral"][0]["w"].shape[0]
    out_ch = params["final"]["b"].shape[0]
    n = levels[0].shape[0]

    enc_td = [levels[len(levels) - 1 - i] for i in range(num_stages)]  # C5, C4, ...
    hw_td = [(e.shape[2], e.shape[3]) for e in enc_td]
    s_td = [hh * ww for hh, ww in hw_td]
    w_td = [ww for _, ww in hw_td]

    inputs, in_specs = [], []

    def add_invariant(arr, dtype):
        arr = jnp.asarray(arr, dtype)
        inputs.append(arr)
        # TODO(synk): at production sizes mark these grid-invariant operands
        # pipeline_mode=pl.Buffered(1) (or DMA once into scratch) to avoid the
        # default 2x double-buffered VMEM; irrelevant at these toy sizes.
        in_specs.append(
            pl.BlockSpec(arr.shape, lambda b, _nd=arr.ndim: (0,) * _nd))

    for i in range(num_stages):
        ci = enc_td[i].shape[1]
        si = s_td[i]
        # Lane-dense activation: NCHW -> (N, C, H*W) is a free metadata
        # reshape; cast to bf16 in the wrapper (halves DMA bytes, MXU dtype).
        inputs.append(enc_td[i].reshape(n, ci, si).astype(jnp.bfloat16))
        in_specs.append(pl.BlockSpec((1, ci, si), lambda b: (b, 0, 0)))
        add_invariant(params["lateral"][i]["w"], jnp.bfloat16)           # (F, Cin)
        add_invariant(params["lateral"][i]["b"].reshape(fpn, 1), jnp.float32)
        add_invariant(_conv3x3_tap_weights(params["smooth"][i]["w"]),
                      jnp.bfloat16)                                      # (9, F, F)
        add_invariant(params["smooth"][i]["b"].reshape(fpn, 1), jnp.float32)
        add_invariant(_tap_masks(*hw_td[i]), jnp.bfloat16)               # (9, 1, S)
        if i > 0:
            add_invariant(_bilinear_upsample_matrix(hw_td[i - 1], hw_td[i]),
                          jnp.bfloat16)                                  # (S_prev, S)
    add_invariant(_conv3x3_tap_weights(params["final"]["w"]), jnp.bfloat16)
    add_invariant(params["final"]["b"].reshape(out_ch, 1), jnp.float32)

    s_last = s_td[-1]
    h_last, w_last = hw_td[-1]

    def kernel(*args):
        refs, out_ref = args[:-1], args[-1]
        k = 0
        p = None
        last_mask = None
        for i in range(num_stages):
            enc = refs[k][0]                    # (Cin_i, S_i) bf16
            wl = refs[k + 1][...]               # (F, Cin_i) bf16
            bl = refs[k + 2][...]               # (F, 1)     f32
            w9 = refs[k + 3]                    # ref (9, F, F) bf16
            bs = refs[k + 4]                    # ref (F, 1)    f32
            mask = refs[k + 5]                  # ref (9, 1, S) bf16
            k += 6
            lat = jnp.dot(wl, enc, preferred_element_type=jnp.float32) + bl
            if i == 0:
                td = lat
            else:
                up = refs[k][...]               # (S_prev, S_i) bf16
                k += 1
                td = jnp.dot(p.astype(jnp.bfloat16), up,
                             preferred_element_type=jnp.float32) + lat
            p = _conv3x3(td.astype(jnp.bfloat16), w9, bs, mask, w_td[i],
                         relu=False)
            last_mask = mask
        wf = refs[k]                            # ref (9, out_ch, F) bf16
        bf = refs[k + 1]                        # ref (out_ch, 1)    f32
        out = _conv3x3(p.astype(jnp.bfloat16), wf, bf, last_mask, w_td[-1],
                       relu=True)
        out_ref[0] = out.astype(out_ref.dtype)

    out_flat = pl.pallas_call(
        kernel,
        out_shape=jax.ShapeDtypeStruct((n, out_ch, s_last), jnp.float32),
        grid_spec=pltpu.PrefetchScalarGridSpec(
            num_scalar_prefetch=0,
            grid=(n,),
            in_specs=in_specs,
            out_specs=pl.BlockSpec((1, out_ch, s_last), lambda b: (b, 0, 0)),
        ),
        compiler_params=pltpu.CompilerParams(
            dimension_semantics=("parallel",),
            vmem_limit_bytes=64 * 1024 * 1024,
        ),
    )(*inputs)
    return out_flat.reshape(n, out_ch, h_last, w_last)


# --------------------------------------------------------------------------
# Parameters (deterministic, synthetic).
# --------------------------------------------------------------------------
def init_params(key, encoder_channels, fpn_channels, out_channels_final_conv):
    assert len(encoder_channels) == 5
    keys = iter(jax.random.split(key, 4 * len(encoder_channels) + 2))

    def conv_w(k, cout, cin, ksize):
        fan_in = cin * ksize * ksize
        return (jax.random.normal(k, (cout, cin, ksize, ksize), jnp.float32)
                / np.sqrt(fan_in))

    lateral, smooth = [], []
    for enc_ch in reversed(encoder_channels):      # lateral[0] consumes C5
        lateral.append({
            "w": (jax.random.normal(next(keys), (fpn_channels, enc_ch),
                                    jnp.float32) / np.sqrt(enc_ch)),
            "b": jax.random.normal(next(keys), (fpn_channels,),
                                   jnp.float32) * 0.05,
        })
    for _ in encoder_channels:
        smooth.append({
            "w": conv_w(next(keys), fpn_channels, fpn_channels, 3),
            "b": jax.random.normal(next(keys), (fpn_channels,),
                                   jnp.float32) * 0.05,
        })
    final = {
        "w": conv_w(next(keys), out_channels_final_conv, fpn_channels, 3),
        "b": jax.random.normal(next(keys), (out_channels_final_conv,),
                               jnp.float32) * 0.05,
    }
    return {"lateral": lateral, "smooth": smooth, "final": final}


# --------------------------------------------------------------------------
# Pure-JAX (XLA, f32) reference mirroring the PyTorch forward.
# --------------------------------------------------------------------------
def _reference(x_top_fused_c5, encoder_features_c1_c4, params):
    c1, c2, c3, c4 = encoder_features_c1_c4
    levels = [c1, c2, c3, c4, x_top_fused_c5]
    sel = _STRIDE_TO_PYRAMID_IDX[HEAD_FPN_OUTPUT_STRIDE]

    def conv1x1(x, w, b):
        return jnp.einsum("oc,nchw->nohw", w, x) + b.reshape(1, -1, 1, 1)

    def conv3x3(x, w, b):
        y = lax.conv_general_dilated(
            x, jnp.transpose(w, (2, 3, 1, 0)), (1, 1), "SAME",
            dimension_numbers=("NCHW", "HWIO", "NCHW"))
        return y + b.reshape(1, -1, 1, 1)

    def upsample(x, dst_hw):
        nb, c, hh, ww = x.shape
        u = jnp.asarray(_bilinear_upsample_matrix((hh, ww), dst_hw))
        y = jnp.einsum("ncs,st->nct", x.reshape(nb, c, hh * ww), u)
        return y.reshape(nb, c, dst_hw[0], dst_hw[1])

    p = conv1x1(levels[-1], params["lateral"][0]["w"], params["lateral"][0]["b"])
    p = conv3x3(p, params["smooth"][0]["w"], params["smooth"][0]["b"])
    for i in range(1, sel + 1):
        lat = conv1x1(levels[len(levels) - 1 - i],
                      params["lateral"][i]["w"], params["lateral"][i]["b"])
        td = upsample(p, lat.shape[2:]) + lat
        p = conv3x3(td, params["smooth"][i]["w"], params["smooth"][i]["b"])
    return jax.nn.relu(conv3x3(p, params["final"]["w"], params["final"]["b"]))


# --------------------------------------------------------------------------
if __name__ == "__main__":
    n = 2
    encoder_channels = [4, 8, 16, 32, 32]   # small stand-ins for [64..512]
    fpn_channels = 32
    out_channels_final_conv = 16
    spatial = [(32, 32), (16, 16), (8, 8), (4, 4), (2, 2)]   # C1 .. C5

    root = jax.random.PRNGKey(0)
    kfeat, kparam = jax.random.split(root)
    fkeys = jax.random.split(kfeat, 5)
    feats = [
        jax.random.normal(fkeys[i], (n, encoder_channels[i]) + spatial[i],
                          jnp.float32)
        for i in range(5)
    ]
    c1, c2, c3, c4, c5 = feats
    params = init_params(kparam, encoder_channels, fpn_channels,
                         out_channels_final_conv)

    out = fpn_decoder_forward(c5, (c1, c2, c3, c4), params)
    out = jax.block_until_ready(out)

    sel = _STRIDE_TO_PYRAMID_IDX[HEAD_FPN_OUTPUT_STRIDE]
    exp_hw = spatial[len(spatial) - 1 - sel]
    assert out.shape == (n, out_channels_final_conv) + exp_hw, out.shape

    ref = jax.block_until_ready(_reference(c5, (c1, c2, c3, c4), params))
    # bf16 MXU operands (f32 accumulation) => tolerance is looser than the old
    # all-f32 kernel; structural errors would be O(1), this catches them.
    max_err = float(jnp.max(jnp.abs(out - ref)))
    rel_err = float(jnp.linalg.norm(out - ref) /
                    (jnp.linalg.norm(ref) + 1e-12))
    assert max_err < 0.25 and rel_err < 0.03, (max_err, rel_err)

    print("KERNEL_OK")
</pallas_src>

<mosaic_0001>
module attributes {stable_mosaic.version = 11 : i64} {
  func.func @kernel(%arg0: i32, %arg1: memref<1x32x4xbf16, #tpu.memory_space<vmem>>, %arg2: memref<32x32xbf16, #tpu.memory_space<vmem>>, %arg3: memref<32x1xf32, #tpu.memory_space<vmem>>, %arg4: memref<9x32x32xbf16, #tpu.memory_space<vmem>>, %arg5: memref<32x1xf32, #tpu.memory_space<vmem>>, %arg6: memref<9x1x4xbf16, #tpu.memory_space<vmem>>, %arg7: memref<1x32x16xbf16, #tpu.memory_space<vmem>>, %arg8: memref<32x32xbf16, #tpu.memory_space<vmem>>, %arg9: memref<32x1xf32, #tpu.memory_space<vmem>>, %arg10: memref<9x32x32xbf16, #tpu.memory_space<vmem>>, %arg11: memref<32x1xf32, #tpu.memory_space<vmem>>, %arg12: memref<9x1x16xbf16, #tpu.memory_space<vmem>>, %arg13: memref<4x16xbf16, #tpu.memory_space<vmem>>, %arg14: memref<1x16x64xbf16, #tpu.memory_space<vmem>>, %arg15: memref<32x16xbf16, #tpu.memory_space<vmem>>, %arg16: memref<32x1xf32, #tpu.memory_space<vmem>>, %arg17: memref<9x32x32xbf16, #tpu.memory_space<vmem>>, %arg18: memref<32x1xf32, #tpu.memory_space<vmem>>, %arg19: memref<9x1x64xbf16, #tpu.memory_space<vmem>>, %arg20: memref<16x64xbf16, #tpu.memory_space<vmem>>, %arg21: memref<9x16x32xbf16, #tpu.memory_space<vmem>>, %arg22: memref<16x1xf32, #tpu.memory_space<vmem>>, %arg23: memref<1x16x64xf32, #tpu.memory_space<vmem>>) attributes {dimension_semantics = [#tpu.dimension_semantics<parallel>], iteration_bounds = array<i64: 2>, scalar_prefetch = 0 : i64, scratch_operands = 0 : i64, tpu.core_type = #tpu.core_type<tc>, window_params = [{transform_indices = @transform_0, window_bounds = array<i64: 1, 32, 4>}, {pipeline_mode = #tpu.pipeline_mode<synchronous>, transform_indices = @transform_1, window_bounds = array<i64: 32, 32>}, {pipeline_mode = #tpu.pipeline_mode<synchronous>, transform_indices = @transform_2, window_bounds = array<i64: 32, 1>}, {pipeline_mode = #tpu.pipeline_mode<synchronous>, transform_indices = @transform_3, window_bounds = array<i64: 9, 32, 32>}, {pipeline_mode = #tpu.pipeline_mode<synchronous>, transform_indices = @transform_4, window_bounds = array<i64: 32, 1>}, {pipeline_mode = #tpu.pipeline_mode<synchronous>, transform_indices = @transform_5, window_bounds = array<i64: 9, 1, 4>}, {transform_indices = @transform_6, window_bounds = array<i64: 1, 32, 16>}, {pipeline_mode = #tpu.pipeline_mode<synchronous>, transform_indices = @transform_7, window_bounds = array<i64: 32, 32>}, {pipeline_mode = #tpu.pipeline_mode<synchronous>, transform_indices = @transform_8, window_bounds = array<i64: 32, 1>}, {pipeline_mode = #tpu.pipeline_mode<synchronous>, transform_indices = @transform_9, window_bounds = array<i64: 9, 32, 32>}, {pipeline_mode = #tpu.pipeline_mode<synchronous>, transform_indices = @transform_10, window_bounds = array<i64: 32, 1>}, {pipeline_mode = #tpu.pipeline_mode<synchronous>, transform_indices = @transform_11, window_bounds = array<i64: 9, 1, 16>}, {pipeline_mode = #tpu.pipeline_mode<synchronous>, transform_indices = @transform_12, window_bounds = array<i64: 4, 16>}, {transform_indices = @transform_13, window_bounds = array<i64: 1, 16, 64>}, {pipeline_mode = #tpu.pipeline_mode<synchronous>, transform_indices = @transform_14, window_bounds = array<i64: 32, 16>}, {pipeline_mode = #tpu.pipeline_mode<synchronous>, transform_indices = @transform_15, window_bounds = array<i64: 32, 1>}, {pipeline_mode = #tpu.pipeline_mode<synchronous>, transform_indices = @transform_16, window_bounds = array<i64: 9, 32, 32>}, {pipeline_mode = #tpu.pipeline_mode<synchronous>, transform_indices = @transform_17, window_bounds = array<i64: 32, 1>}, {pipeline_mode = #tpu.pipeline_mode<synchronous>, transform_indices = @transform_18, window_bounds = array<i64: 9, 1, 64>}, {pipeline_mode = #tpu.pipeline_mode<synchronous>, transform_indices = @transform_19, window_bounds = array<i64: 16, 64>}, {pipeline_mode = #tpu.pipeline_mode<synchronous>, transform_indices = @transform_20, window_bounds = array<i64: 9, 16, 32>}, {pipeline_mode = #tpu.pipeline_mode<synchronous>, transform_indices = @transform_21, window_bounds = array<i64: 16, 1>}, {transform_indices = @transform_22, window_bounds = array<i64: 1, 16, 64>}]} {
    %c0 = arith.constant 0 : index
    %c0_0 = arith.constant 0 : index
    %c0_1 = arith.constant 0 : index
    %0 = vector.load %arg1[%c0, %c0_0, %c0_1] : memref<1x32x4xbf16, #tpu.memory_space<vmem>>, vector<1x32x4xbf16>
    %1 = vector.shape_cast %0 : vector<1x32x4xbf16> to vector<32x4xbf16>
    %c0_2 = arith.constant 0 : index
    %c0_3 = arith.constant 0 : index
    %2 = vector.load %arg2[%c0_2, %c0_3] : memref<32x32xbf16, #tpu.memory_space<vmem>>, vector<32x32xbf16>
    %c0_4 = arith.constant 0 : index
    %c0_5 = arith.constant 0 : index
    %3 = vector.load %arg3[%c0_4, %c0_5] : memref<32x1xf32, #tpu.memory_space<vmem>>, vector<32x1xf32>
    %cst = arith.constant dense<0.000000e+00> : vector<32x4xf32>
    %4 = tpu.matmul %2, %1, %cst {dimension_numbers = #tpu.dot_dimension_numbers<[1], [0], [0], [1], [0, 0, 1, 1], [], []>} : vector<32x32xbf16>, vector<32x4xbf16>, vector<32x4xf32> -> vector<32x4xf32>
    %5 = vector.broadcast %3 : vector<32x1xf32> to vector<32x4xf32>
    %6 = arith.addf %4, %5 : vector<32x4xf32>
    %7 = arith.truncf %6 : vector<32x4xf32> to vector<32x4xbf16>
    %cst_6 = arith.constant 0.000000e+00 : bf16
    %8 = vector.broadcast %cst_6 : bf16 to vector<32x3xbf16>
    %9 = vector.extract_strided_slice %7 {offsets = [0, 0], sizes = [32, 1], strides = [1, 1]} : vector<32x4xbf16> to vector<32x1xbf16>
    %10 = tpu.concatenate %8, %9 in 1 : vector<32x3xbf16>, vector<32x1xbf16> -> vector<32x4xbf16>
    %c0_7 = arith.constant 0 : index
    %c0_8 = arith.constant 0 : index
    %c0_9 = arith.constant 0 : index
    %11 = vector.load %arg6[%c0_7, %c0_8, %c0_9] : memref<9x1x4xbf16, #tpu.memory_space<vmem>>, vector<1x1x4xbf16>
    %12 = vector.shape_cast %11 : vector<1x1x4xbf16> to vector<1x4xbf16>
    %13 = vector.broadcast %12 : vector<1x4xbf16> to vector<32x4xbf16>
    %14 = arith.mulf %10, %13 : vector<32x4xbf16>
    %c0_10 = arith.constant 0 : index
    %c0_11 = arith.constant 0 : index
    %c0_12 = arith.constant 0 : index
    %15 = vector.load %arg4[%c0_10, %c0_11, %c0_12] : memref<9x32x32xbf16, #tpu.memory_space<vmem>>, vector<1x32x32xbf16>
    %16 = vector.shape_cast %15 : vector<1x32x32xbf16> to vector<32x32xbf16>
    %cst_13 = arith.constant dense<0.000000e+00> : vector<32x4xf32>
    %17 = tpu.matmul %16, %14, %cst_13 {dimension_numbers = #tpu.dot_dimension_numbers<[1], [0], [0], [1], [0, 0, 1, 1], [], []>} : vector<32x32xbf16>, vector<32x4xbf16>, vector<32x4xf32> -> vector<32x4xf32>
    %cst_14 = arith.constant 0.000000e+00 : bf16
    %18 = vector.broadcast %cst_14 : bf16 to vector<32x2xbf16>
    %19 = vector.extract_strided_slice %7 {offsets = [0, 0], sizes = [32, 2], strides = [1, 1]} : vector<32x4xbf16> to vector<32x2xbf16>
    %20 = tpu.concatenate %18, %19 in 1 : vector<32x2xbf16>, vector<32x2xbf16> -> vector<32x4xbf16>
    %c1 = arith.constant 1 : index
    %c0_15 = arith.constant 0 : index
    %c0_16 = arith.constant 0 : index
    %21 = vector.load %arg4[%c1, %c0_15, %c0_16] : memref<9x32x32xbf16, #tpu.memory_space<vmem>>, vector<1x32x32xbf16>
    %22 = vector.shape_cast %21 : vector<1x32x32xbf16> to vector<32x32xbf16>
    %cst_17 = arith.constant dense<0.000000e+00> : vector<32x4xf32>
    %23 = tpu.matmul %22, %20, %cst_17 {dimension_numbers = #tpu.dot_dimension_numbers<[1], [0], [0], [1], [0, 0, 1, 1], [], []>} : vector<32x32xbf16>, vector<32x4xbf16>, vector<32x4xf32> -> vector<32x4xf32>
    %24 = arith.addf %17, %23 : vector<32x4xf32>
    %cst_18 = arith.constant 0.000000e+00 : bf16
    %25 = vector.broadcast %cst_18 : bf16 to vector<32x1xbf16>
    %26 = vector.extract_strided_slice %7 {offsets = [0, 0], sizes = [32, 3], strides = [1, 1]} : vector<32x4xbf16> to vector<32x3xbf16>
    %27 = tpu.concatenate %25, %26 in 1 : vector<32x1xbf16>, vector<32x3xbf16> -> vector<32x4xbf16>
    %c2 = arith.constant 2 : index
    %c0_19 = arith.constant 0 : index
    %c0_20 = arith.constant 0 : index
    %28 = vector.load %arg6[%c2, %c0_19, %c0_20] : memref<9x1x4xbf16, #tpu.memory_space<vmem>>, vector<1x1x4xbf16>
    %29 = vector.shape_cast %28 : vector<1x1x4xbf16> to vector<1x4xbf16>
    %30 = vector.broadcast %29 : vector<1x4xbf16> to vector<32x4xbf16>
    %31 = arith.mulf %27, %30 : vector<32x4xbf16>
    %c2_21 = arith.constant 2 : index
    %c0_22 = arith.constant 0 : index
    %c0_23 = arith.constant 0 : index
    %32 = vector.load %arg4[%c2_21, %c0_22, %c0_23] : memref<9x32x32xbf16, #tpu.memory_space<vmem>>, vector<1x32x32xbf16>
    %33 = vector.shape_cast %32 : vector<1x32x32xbf16> to vector<32x32xbf16>
    %cst_24 = arith.constant dense<0.000000e+00> : vector<32x4xf32>
    %34 = tpu.matmul %33, %31, %cst_24 {dimension_numbers = #tpu.dot_dimension_numbers<[1], [0], [0], [1], [0, 0, 1, 1], [], []>} : vector<32x32xbf16>, vector<32x4xbf16>, vector<32x4xf32> -> vector<32x4xf32>
    %35 = arith.addf %24, %34 : vector<32x4xf32>
    %cst_25 = arith.constant 0.000000e+00 : bf16
    %36 = vector.broadcast %cst_25 : bf16 to vector<32x1xbf16>
    %37 = vector.extract_strided_slice %7 {offsets = [0, 0], sizes = [32, 3], strides = [1, 1]} : vector<32x4xbf16> to vector<32x3xbf16>
    %38 = tpu.concatenate %36, %37 in 1 : vector<32x1xbf16>, vector<32x3xbf16> -> vector<32x4xbf16>
    %c3 = arith.constant 3 : index
    %c0_26 = arith.constant 0 : index
    %c0_27 = arith.constant 0 : index
    %39 = vector.load %arg6[%c3, %c0_26, %c0_27] : memref<9x1x4xbf16, #tpu.memory_space<vmem>>, vector<1x1x4xbf16>
    %40 = vector.shape_cast %39 : vector<1x1x4xbf16> to vector<1x4xbf16>
    %41 = vector.broadcast %40 : vector<1x4xbf16> to vector<32x4xbf16>
    %42 = arith.mulf %38, %41 : vector<32x4xbf16>
    %c3_28 = arith.constant 3 : index
    %c0_29 = arith.constant 0 : index
    %c0_30 = arith.constant 0 : index
    %43 = vector.load %arg4[%c3_28, %c0_29, %c0_30] : memref<9x32x32xbf16, #tpu.memory_space<vmem>>, vector<1x32x32xbf16>
    %44 = vector.shape_cast %43 : vector<1x32x32xbf16> to vector<32x32xbf16>
    %cst_31 = arith.constant dense<0.000000e+00> : vector<32x4xf32>
    %45 = tpu.matmul %44, %42, %cst_31 {dimension_numbers = #tpu.dot_dimension_numbers<[1], [0], [0], [1], [0, 0, 1, 1], [], []>} : vector<32x32xbf16>, vector<32x4xbf16>, vector<32x4xf32> -> vector<32x4xf32>
    %46 = arith.addf %35, %45 : vector<32x4xf32>
    %c4 = arith.constant 4 : index
    %c0_32 = arith.constant 0 : index
    %c0_33 = arith.constant 0 : index
    %47 = vector.load %arg4[%c4, %c0_32, %c0_33] : memref<9x32x32xbf16, #tpu.memory_space<vmem>>, vector<1x32x32xbf16>
    %48 = vector.shape_cast %47 : vector<1x32x32xbf16> to vector<32x32xbf16>
    %cst_34 = arith.constant dense<0.000000e+00> : vector<32x4xf32>
    %49 = tpu.matmul %48, %7, %cst_34 {dimension_numbers = #tpu.dot_dimension_numbers<[1], [0], [0], [1], [0, 0, 1, 1], [], []>} : vector<32x32xbf16>, vector<32x4xbf16>, vector<32x4xf32> -> vector<32x4xf32>
    %50 = arith.addf %46, %49 : vector<32x4xf32>
    %cst_35 = arith.constant 0.000000e+00 : bf16
    %51 = vector.broadcast %cst_35 : bf16 to vector<32x1xbf16>
    %52 = vector.extract_strided_slice %7 {offsets = [0, 1], sizes = [32, 3], strides = [1, 1]} : vector<32x4xbf16> to vector<32x3xbf16>
    %53 = tpu.concatenate %52, %51 in 1 : vector<32x3xbf16>, vector<32x1xbf16> -> vector<32x4xbf16>
    %c5 = arith.constant 5 : index
    %c0_36 = arith.constant 0 : index
    %c0_37 = arith.constant 0 : index
    %54 = vector.load %arg6[%c5, %c0_36, %c0_37] : memref<9x1x4xbf16, #tpu.memory_space<vmem>>, vector<1x1x4xbf16>
    %55 = vector.shape_cast %54 : vector<1x1x4xbf16> to vector<1x4xbf16>
    %56 = vector.broadcast %55 : vector<1x4xbf16> to vector<32x4xbf16>
    %57 = arith.mulf %53, %56 : vector<32x4xbf16>
    %c5_38 = arith.constant 5 : index
    %c0_39 = arith.constant 0 : index
    %c0_40 = arith.constant 0 : index
    %58 = vector.load %arg4[%c5_38, %c0_39, %c0_40] : memref<9x32x32xbf16, #tpu.memory_space<vmem>>, vector<1x32x32xbf16>
    %59 = vector.shape_cast %58 : vector<1x32x32xbf16> to vector<32x32xbf16>
    %cst_41 = arith.constant dense<0.000000e+00> : vector<32x4xf32>
    %60 = tpu.matmul %59, %57, %cst_41 {dimension_numbers = #tpu.dot_dimension_numbers<[1], [0], [0], [1], [0, 0, 1, 1], [], []>} : vector<32x32xbf16>, vector<32x4xbf16>, vector<32x4xf32> -> vector<32x4xf32>
    %61 = arith.addf %50, %60 : vector<32x4xf32>
    %cst_42 = arith.constant 0.000000e+00 : bf16
    %62 = vector.broadcast %cst_42 : bf16 to vector<32x1xbf16>
    %63 = vector.extract_strided_slice %7 {offsets = [0, 1], sizes = [32, 3], strides = [1, 1]} : vector<32x4xbf16> to vector<32x3xbf16>
    %64 = tpu.concatenate %63, %62 in 1 : vector<32x3xbf16>, vector<32x1xbf16> -> vector<32x4xbf16>
    %c6 = arith.constant 6 : index
    %c0_43 = arith.constant 0 : index
    %c0_44 = arith.constant 0 : index
    %65 = vector.load %arg6[%c6, %c0_43, %c0_44] : memref<9x1x4xbf16, #tpu.memory_space<vmem>>, vector<1x1x4xbf16>
    %66 = vector.shape_cast %65 : vector<1x1x4xbf16> to vector<1x4xbf16>
    %67 = vector.broadcast %66 : vector<1x4xbf16> to vector<32x4xbf16>
    %68 = arith.mulf %64, %67 : vector<32x4xbf16>
    %c6_45 = arith.constant 6 : index
    %c0_46 = arith.constant 0 : index
    %c0_47 = arith.constant 0 : index
    %69 = vector.load %arg4[%c6_45, %c0_46, %c0_47] : memref<9x32x32xbf16, #tpu.memory_space<vmem>>, vector<1x32x32xbf16>
    %70 = vector.shape_cast %69 : vector<1x32x32xbf16> to vector<32x32xbf16>
    %cst_48 = arith.constant dense<0.000000e+00> : vector<32x4xf32>
    %71 = tpu.matmul %70, %68, %cst_48 {dimension_numbers = #tpu.dot_dimension_numbers<[1], [0], [0], [1], [0, 0, 1, 1], [], []>} : vector<32x32xbf16>, vector<32x4xbf16>, vector<32x4xf32> -> vector<32x4xf32>
    %72 = arith.addf %61, %71 : vector<32x4xf32>
    %cst_49 = arith.constant 0.000000e+00 : bf16
    %73 = vector.broadcast %cst_49 : bf16 to vector<32x2xbf16>
    %74 = vector.extract_strided_slice %7 {offsets = [0, 2], sizes = [32, 2], strides = [1, 1]} : vector<32x4xbf16> to vector<32x2xbf16>
    %75 = tpu.concatenate %74, %73 in 1 : vector<32x2xbf16>, vector<32x2xbf16> -> vector<32x4xbf16>
    %c7 = arith.constant 7 : index
    %c0_50 = arith.constant 0 : index
    %c0_51 = arith.constant 0 : index
    %76 = vector.load %arg4[%c7, %c0_50, %c0_51] : memref<9x32x32xbf16, #tpu.memory_space<vmem>>, vector<1x32x32xbf16>
    %77 = vector.shape_cast %76 : vector<1x32x32xbf16> to vector<32x32xbf16>
    %cst_52 = arith.constant dense<0.000000e+00> : vector<32x4xf32>
    %78 = tpu.matmul %77, %75, %cst_52 {dimension_numbers = #tpu.dot_dimension_numbers<[1], [0], [0], [1], [0, 0, 1, 1], [], []>} : vector<32x32xbf16>, vector<32x4xbf16>, vector<32x4xf32> -> vector<32x4xf32>
    %79 = arith.addf %72, %78 : vector<32x4xf32>
    %cst_53 = arith.constant 0.000000e+00 : bf16
    %80 = vector.broadcast %cst_53 : bf16 to vector<32x3xbf16>
    %81 = vector.extract_strided_slice %7 {offsets = [0, 3], sizes = [32, 1], strides = [1, 1]} : vector<32x4xbf16> to vector<32x1xbf16>
    %82 = tpu.concatenate %81, %80 in 1 : vector<32x1xbf16>, vector<32x3xbf16> -> vector<32x4xbf16>
    %c8 = arith.constant 8 : index
    %c0_54 = arith.constant 0 : index
    %c0_55 = arith.constant 0 : index
    %83 = vector.load %arg6[%c8, %c0_54, %c0_55] : memref<9x1x4xbf16, #tpu.memory_space<vmem>>, vector<1x1x4xbf16>
    %84 = vector.shape_cast %83 : vector<1x1x4xbf16> to vector<1x4xbf16>
    %85 = vector.broadcast %84 : vector<1x4xbf16> to vector<32x4xbf16>
    %86 = arith.mulf %82, %85 : vector<32x4xbf16>
    %c8_56 = arith.constant 8 : index
    %c0_57 = arith.constant 0 : index
    %c0_58 = arith.constant 0 : index
    %87 = vector.load %arg4[%c8_56, %c0_57, %c0_58] : memref<9x32x32xbf16, #tpu.memory_space<vmem>>, vector<1x32x32xbf16>
    %88 = vector.shape_cast %87 : vector<1x32x32xbf16> to vector<32x32xbf16>
    %cst_59 = arith.constant dense<0.000000e+00> : vector<32x4xf32>
    %89 = tpu.matmul %88, %86, %cst_59 {dimension_numbers = #tpu.dot_dimension_numbers<[1], [0], [0], [1], [0, 0, 1, 1], [], []>} : vector<32x32xbf16>, vector<32x4xbf16>, vector<32x4xf32> -> vector<32x4xf32>
    %90 = arith.addf %79, %89 : vector<32x4xf32>
    %c0_60 = arith.constant 0 : index
    %c0_61 = arith.constant 0 : index
    %91 = vector.load %arg5[%c0_60, %c0_61] : memref<32x1xf32, #tpu.memory_space<vmem>>, vector<32x1xf32>
    %92 = vector.broadcast %91 : vector<32x1xf32> to vector<32x4xf32>
    %93 = arith.addf %90, %92 : vector<32x4xf32>
    %c0_62 = arith.constant 0 : index
    %c0_63 = arith.constant 0 : index
    %c0_64 = arith.constant 0 : index
    %94 = vector.load %arg7[%c0_62, %c0_63, %c0_64] : memref<1x32x16xbf16, #tpu.memory_space<vmem>>, vector<1x32x16xbf16>
    %95 = vector.shape_cast %94 : vector<1x32x16xbf16> to vector<32x16xbf16>
    %c0_65 = arith.constant 0 : index
    %c0_66 = arith.constant 0 : index
    %96 = vector.load %arg8[%c0_65, %c0_66] : memref<32x32xbf16, #tpu.memory_space<vmem>>, vector<32x32xbf16>
    %c0_67 = arith.constant 0 : index
    %c0_68 = arith.constant 0 : index
    %97 = vector.load %arg9[%c0_67, %c0_68] : memref<32x1xf32, #tpu.memory_space<vmem>>, vector<32x1xf32>
    %cst_69 = arith.constant dense<0.000000e+00> : vector<32x16xf32>
    %98 = tpu.matmul %96, %95, %cst_69 {dimension_numbers = #tpu.dot_dimension_numbers<[1], [0], [0], [1], [0, 0, 1, 1], [], []>} : vector<32x32xbf16>, vector<32x16xbf16>, vector<32x16xf32> -> vector<32x16xf32>
    %99 = vector.broadcast %97 : vector<32x1xf32> to vector<32x16xf32>
    %100 = arith.addf %98, %99 : vector<32x16xf32>
    %c0_70 = arith.constant 0 : index
    %c0_71 = arith.constant 0 : index
    %101 = vector.load %arg13[%c0_70, %c0_71] : memref<4x16xbf16, #tpu.memory_space<vmem>>, vector<4x16xbf16>
    %102 = arith.truncf %93 : vector<32x4xf32> to vector<32x4xbf16>
    %cst_72 = arith.constant dense<0.000000e+00> : vector<32x16xf32>
    %103 = tpu.matmul %102, %101, %cst_72 {dimension_numbers = #tpu.dot_dimension_numbers<[1], [0], [0], [1], [0, 0, 1, 1], [], []>} : vector<32x4xbf16>, vector<4x16xbf16>, vector<32x16xf32> -> vector<32x16xf32>
    %104 = arith.addf %103, %100 : vector<32x16xf32>
    %105 = arith.truncf %104 : vector<32x16xf32> to vector<32x16xbf16>
    %cst_73 = arith.constant 0.000000e+00 : bf16
    %106 = vector.broadcast %cst_73 : bf16 to vector<32x5xbf16>
    %107 = vector.extract_strided_slice %105 {offsets = [0, 0], sizes = [32, 11], strides = [1, 1]} : vector<32x16xbf16> to vector<32x11xbf16>
    %108 = tpu.concatenate %106, %107 in 1 : vector<32x5xbf16>, vector<32x11xbf16> -> vector<32x16xbf16>
    %c0_74 = arith.constant 0 : index
    %c0_75 = arith.constant 0 : index
    %c0_76 = arith.constant 0 : index
    %109 = vector.load %arg12[%c0_74, %c0_75, %c0_76] : memref<9x1x16xbf16, #tpu.memory_space<vmem>>, vector<1x1x16xbf16>
    %110 = vector.shape_cast %109 : vector<1x1x16xbf16> to vector<1x16xbf16>
    %111 = vector.broadcast %110 : vector<1x16xbf16> to vector<32x16xbf16>
    %112 = arith.mulf %108, %111 : vector<32x16xbf16>
    %c0_77 = arith.constant 0 : index
    %c0_78 = arith.constant 0 : index
    %c0_79 = arith.constant 0 : index
    %113 = vector.load %arg10[%c0_77, %c0_78, %c0_79] : memref<9x32x32xbf16, #tpu.memory_space<vmem>>, vector<1x32x32xbf16>
    %114 = vector.shape_cast %113 : vector<1x32x32xbf16> to vector<32x32xbf16>
    %cst_80 = arith.constant dense<0.000000e+00> : vector<32x16xf32>
    %115 = tpu.matmul %114, %112, %cst_80 {dimension_numbers = #tpu.dot_dimension_numbers<[1], [0], [0], [1], [0, 0, 1, 1], [], []>} : vector<32x32xbf16>, vector<32x16xbf16>, vector<32x16xf32> -> vector<32x16xf32>
    %cst_81 = arith.constant 0.000000e+00 : bf16
    %116 = vector.broadcast %cst_81 : bf16 to vector<32x4xbf16>
    %117 = vector.extract_strided_slice %105 {offsets = [0, 0], sizes = [32, 12], strides = [1, 1]} : vector<32x16xbf16> to vector<32x12xbf16>
    %118 = tpu.concatenate %116, %117 in 1 : vector<32x4xbf16>, vector<32x12xbf16> -> vector<32x16xbf16>
    %c1_82 = arith.constant 1 : index
    %c0_83 = arith.constant 0 : index
    %c0_84 = arith.constant 0 : index
    %119 = vector.load %arg10[%c1_82, %c0_83, %c0_84] : memref<9x32x32xbf16, #tpu.memory_space<vmem>>, vector<1x32x32xbf16>
    %120 = vector.shape_cast %119 : vector<1x32x32xbf16> to vector<32x32xbf16>
    %cst_85 = arith.constant dense<0.000000e+00> : vector<32x16xf32>
    %121 = tpu.matmul %120, %118, %cst_85 {dimension_numbers = #tpu.dot_dimension_numbers<[1], [0], [0], [1], [0, 0, 1, 1], [], []>} : vector<32x32xbf16>, vector<32x16xbf16>, vector<32x16xf32> -> vector<32x16xf32>
    %122 = arith.addf %115, %121 : vector<32x16xf32>
    %cst_86 = arith.constant 0.000000e+00 : bf16
    %123 = vector.broadcast %cst_86 : bf16 to vector<32x3xbf16>
    %124 = vector.extract_strided_slice %105 {offsets = [0, 0], sizes = [32, 13], strides = [1, 1]} : vector<32x16xbf16> to vector<32x13xbf16>
    %125 = tpu.concatenate %123, %124 in 1 : vector<32x3xbf16>, vector<32x13xbf16> -> vector<32x16xbf16>
    %c2_87 = arith.constant 2 : index
    %c0_88 = arith.constant 0 : index
    %c0_89 = arith.constant 0 : index
    %126 = vector.load %arg12[%c2_87, %c0_88, %c0_89] : memref<9x1x16xbf16, #tpu.memory_space<vmem>>, vector<1x1x16xbf16>
    %127 = vector.shape_cast %126 : vector<1x1x16xbf16> to vector<1x16xbf16>
    %128 = vector.broadcast %127 : vector<1x16xbf16> to vector<32x16xbf16>
    %129 = arith.mulf %125, %128 : vector<32x16xbf16>
    %c2_90 = arith.constant 2 : index
    %c0_91 = arith.constant 0 : index
    %c0_92 = arith.constant 0 : index
    %130 = vector.load %arg10[%c2_90, %c0_91, %c0_92] : memref<9x32x32xbf16, #tpu.memory_space<vmem>>, vector<1x32x32xbf16>
    %131 = vector.shape_cast %130 : vector<1x32x32xbf16> to vector<32x32xbf16>
    %cst_93 = arith.constant dense<0.000000e+00> : vector<32x16xf32>
    %132 = tpu.matmul %131, %129, %cst_93 {dimension_numbers = #tpu.dot_dimension_numbers<[1], [0], [0], [1], [0, 0, 1, 1], [], []>} : vector<32x32xbf16>, vector<32x16xbf16>, vector<32x16xf32> -> vector<32x16xf32>
    %133 = arith.addf %122, %132 : vector<32x16xf32>
    %cst_94 = arith.constant 0.000000e+00 : bf16
    %134 = vector.broadcast %cst_94 : bf16 to vector<32x1xbf16>
    %135 = vector.extract_strided_slice %105 {offsets = [0, 0], sizes = [32, 15], strides = [1, 1]} : vector<32x16xbf16> to vector<32x15xbf16>
    %136 = tpu.concatenate %134, %135 in 1 : vector<32x1xbf16>, vector<32x15xbf16> -> vector<32x16xbf16>
    %c3_95 = arith.constant 3 : index
    %c0_96 = arith.constant 0 : index
    %c0_97 = arith.constant 0 : index
    %137 = vector.load %arg12[%c3_95, %c0_96, %c0_97] : memref<9x1x16xbf16, #tpu.memory_space<vmem>>, vector<1x1x16xbf16>
    %138 = vector.shape_cast %137 : vector<1x1x16xbf16> to vector<1x16xbf16>
    %139 = vector.broadcast %138 : vector<1x16xbf16> to vector<32x16xbf16>
    %140 = arith.mulf %136, %139 : vector<32x16xbf16>
    %c3_98 = arith.constant 3 : index
    %c0_99 = arith.constant 0 : index
    %c0_100 = arith.constant 0 : index
    %141 = vector.load %arg10[%c3_98, %c0_99, %c0_100] : memref<9x32x32xbf16, #tpu.memory_space<vmem>>, vector<1x32x32xbf16>
    %142 = vector.shape_cast %141 : vector<1x32x32xbf16> to vector<32x32xbf16>
    %cst_101 = arith.constant dense<0.000000e+00> : vector<32x16xf32>
    %143 = tpu.matmul %142, %140, %cst_101 {dimension_numbers = #tpu.dot_dimension_numbers<[1], [0], [0], [1], [0, 0, 1, 1], [], []>} : vector<32x32xbf16>, vector<32x16xbf16>, vector<32x16xf32> -> vector<32x16xf32>
    %144 = arith.addf %133, %143 : vector<32x16xf32>
    %c4_102 = arith.constant 4 : index
    %c0_103 = arith.constant 0 : index
    %c0_104 = arith.constant 0 : index
    %145 = vector.load %arg10[%c4_102, %c0_103, %c0_104] : memref<9x32x32xbf16, #tpu.memory_space<vmem>>, vector<1x32x32xbf16>
    %146 = vector.shape_cast %145 : vector<1x32x32xbf16> to vector<32x32xbf16>
    %cst_105 = arith.constant dense<0.000000e+00> : vector<32x16xf32>
    %147 = tpu.matmul %146, %105, %cst_105 {dimension_numbers = #tpu.dot_dimension_numbers<[1], [0], [0], [1], [0, 0, 1, 1], [], []>} : vector<32x32xbf16>, vector<32x16xbf16>, vector<32x16xf32> -> vector<32x16xf32>
    %148 = arith.addf %144, %147 : vector<32x16xf32>
    %cst_106 = arith.constant 0.000000e+00 : bf16
    %149 = vector.broadcast %cst_106 : bf16 to vector<32x1xbf16>
    %150 = vector.extract_strided_slice %105 {offsets = [0, 1], sizes = [32, 15], strides = [1, 1]} : vector<32x16xbf16> to vector<32x15xbf16>
    %151 = tpu.concatenate %150, %149 in 1 : vector<32x15xbf16>, vector<32x1xbf16> -> vector<32x16xbf16>
    %c5_107 = arith.constant 5 : index
    %c0_108 = arith.constant 0 : index
    %c0_109 = arith.constant 0 : index
    %152 = vector.load %arg12[%c5_107, %c0_108, %c0_109] : memref<9x1x16xbf16, #tpu.memory_space<vmem>>, vector<1x1x16xbf16>
    %153 = vector.shape_cast %152 : vector<1x1x16xbf16> to vector<1x16xbf16>
    %154 = vector.broadcast %153 : vector<1x16xbf16> to vector<32x16xbf16>
    %155 = arith.mulf %151, %154 : vector<32x16xbf16>
    %c5_110 = arith.constant 5 : index
    %c0_111 = arith.constant 0 : index
    %c0_112 = arith.constant 0 : index
    %156 = vector.load %arg10[%c5_110, %c0_111, %c0_112] : memref<9x32x32xbf16, #tpu.memory_space<vmem>>, vector<1x32x32xbf16>
    %157 = vector.shape_cast %156 : vector<1x32x32xbf16> to vector<32x32xbf16>
    %cst_113 = arith.constant dense<0.000000e+00> : vector<32x16xf32>
    %158 = tpu.matmul %157, %155, %cst_113 {dimension_numbers = #tpu.dot_dimension_numbers<[1], [0], [0], [1], [0, 0, 1, 1], [], []>} : vector<32x32xbf16>, vector<32x16xbf16>, vector<32x16xf32> -> vector<32x16xf32>
    %159 = arith.addf %148, %158 : vector<32x16xf32>
    %cst_114 = arith.constant 0.000000e+00 : bf16
    %160 = vector.broadcast %cst_114 : bf16 to vector<32x3xbf16>
    %161 = vector.extract_strided_slice %105 {offsets = [0, 3], sizes = [32, 13], strides = [1, 1]} : vector<32x16xbf16> to vector<32x13xbf16>
    %162 = tpu.concatenate %161, %160 in 1 : vector<32x13xbf16>, vector<32x3xbf16> -> vector<32x16xbf16>
    %c6_115 = arith.constant 6 : index
    %c0_116 = arith.constant 0 : index
    %c0_117 = arith.constant 0 : index
    %163 = vector.load %arg12[%c6_115, %c0_116, %c0_117] : memref<9x1x16xbf16, #tpu.memory_space<vmem>>, vector<1x1x16xbf16>
    %164 = vector.shape_cast %163 : vector<1x1x16xbf16> to vector<1x16xbf16>
    %165 = vector.broadcast %164 : vector<1x16xbf16> to vector<32x16xbf16>
    %166 = arith.mulf %162, %165 : vector<32x16xbf16>
    %c6_118 = arith.constant 6 : index
    %c0_119 = arith.constant 0 : index
    %c0_120 = arith.constant 0 : index
    %167 = vector.load %arg10[%c6_118, %c0_119, %c0_120] : memref<9x32x32xbf16, #tpu.memory_space<vmem>>, vector<1x32x32xbf16>
    %168 = vector.shape_cast %167 : vector<1x32x32xbf16> to vector<32x32xbf16>
    %cst_121 = arith.constant dense<0.000000e+00> : vector<32x16xf32>
    %169 = tpu.matmul %168, %166, %cst_121 {dimension_numbers = #tpu.dot_dimension_numbers<[1], [0], [0], [1], [0, 0, 1, 1], [], []>} : vector<32x32xbf16>, vector<32x16xbf16>, vector<32x16xf32> -> vector<32x16xf32>
    %170 = arith.addf %159, %169 : vector<32x16xf32>
    %cst_122 = arith.constant 0.000000e+00 : bf16
    %171 = vector.broadcast %cst_122 : bf16 to vector<32x4xbf16>
    %172 = vector.extract_strided_slice %105 {offsets = [0, 4], sizes = [32, 12], strides = [1, 1]} : vector<32x16xbf16> to vector<32x12xbf16>
    %173 = tpu.concatenate %172, %171 in 1 : vector<32x12xbf16>, vector<32x4xbf16> -> vector<32x16xbf16>
    %c7_123 = arith.constant 7 : index
    %c0_124 = arith.constant 0 : index
    %c0_125 = arith.constant 0 : index
    %174 = vector.load %arg10[%c7_123, %c0_124, %c0_125] : memref<9x32x32xbf16, #tpu.memory_space<vmem>>, vector<1x32x32xbf16>
    %175 = vector.shape_cast %174 : vector<1x32x32xbf16> to vector<32x32xbf16>
    %cst_126 = arith.constant dense<0.000000e+00> : vector<32x16xf32>
    %176 = tpu.matmul %175, %173, %cst_126 {dimension_numbers = #tpu.dot_dimension_numbers<[1], [0], [0], [1], [0, 0, 1, 1], [], []>} : vector<32x32xbf16>, vector<32x16xbf16>, vector<32x16xf32> -> vector<32x16xf32>
    %177 = arith.addf %170, %176 : vector<32x16xf32>
    %cst_127 = arith.constant 0.000000e+00 : bf16
    %178 = vector.broadcast %cst_127 : bf16 to vector<32x5xbf16>
    %179 = vector.extract_strided_slice %105 {offsets = [0, 5], sizes = [32, 11], strides = [1, 1]} : vector<32x16xbf16> to vector<32x11xbf16>
    %180 = tpu.concatenate %179, %178 in 1 : vector<32x11xbf16>, vector<32x5xbf16> -> vector<32x16xbf16>
    %c8_128 = arith.constant 8 : index
    %c0_129 = arith.constant 0 : index
    %c0_130 = arith.constant 0 : index
    %181 = vector.load %arg12[%c8_128, %c0_129, %c0_130] : memref<9x1x16xbf16, #tpu.memory_space<vmem>>, vector<1x1x16xbf16>
    %182 = vector.shape_cast %181 : vector<1x1x16xbf16> to vector<1x16xbf16>
    %183 = vector.broadcast %182 : vector<1x16xbf16> to vector<32x16xbf16>
    %184 = arith.mulf %180, %183 : vector<32x16xbf16>
    %c8_131 = arith.constant 8 : index
    %c0_132 = arith.constant 0 : index
    %c0_133 = arith.constant 0 : index
    %185 = vector.load %arg10[%c8_131, %c0_132, %c0_133] : memref<9x32x32xbf16, #tpu.memory_space<vmem>>, vector<1x32x32xbf16>
    %186 = vector.shape_cast %185 : vector<1x32x32xbf16> to vector<32x32xbf16>
    %cst_134 = arith.constant dense<0.000000e+00> : vector<32x16xf32>
    %187 = tpu.matmul %186, %184, %cst_134 {dimension_numbers = #tpu.dot_dimension_numbers<[1], [0], [0], [1], [0, 0, 1, 1], [], []>} : vector<32x32xbf16>, vector<32x16xbf16>, vector<32x16xf32> -> vector<32x16xf32>
    %188 = arith.addf %177, %187 : vector<32x16xf32>
    %c0_135 = arith.constant 0 : index
    %c0_136 = arith.constant 0 : index
    %189 = vector.load %arg11[%c0_135, %c0_136] : memref<32x1xf32, #tpu.memory_space<vmem>>, vector<32x1xf32>
    %190 = vector.broadcast %189 : vector<32x1xf32> to vector<32x16xf32>
    %191 = arith.addf %188, %190 : vector<32x16xf32>
    %c0_137 = arith.constant 0 : index
    %c0_138 = arith.constant 0 : index
    %c0_139 = arith.constant 0 : index
    %192 = vector.load %arg14[%c0_137, %c0_138, %c0_139] : memref<1x16x64xbf16, #tpu.memory_space<vmem>>, vector<1x16x64xbf16>
    %193 = vector.shape_cast %192 : vector<1x16x64xbf16> to vector<16x64xbf16>
    %c0_140 = arith.constant 0 : index
    %c0_141 = arith.constant 0 : index
    %194 = vector.load %arg15[%c0_140, %c0_141] : memref<32x16xbf16, #tpu.memory_space<vmem>>, vector<32x16xbf16>
    %c0_142 = arith.constant 0 : index
    %c0_143 = arith.constant 0 : index
    %195 = vector.load %arg16[%c0_142, %c0_143] : memref<32x1xf32, #tpu.memory_space<vmem>>, vector<32x1xf32>
    %cst_144 = arith.constant dense<0.000000e+00> : vector<32x64xf32>
    %196 = tpu.matmul %194, %193, %cst_144 {dimension_numbers = #tpu.dot_dimension_numbers<[1], [0], [0], [1], [0, 0, 1, 1], [], []>} : vector<32x16xbf16>, vector<16x64xbf16>, vector<32x64xf32> -> vector<32x64xf32>
    %197 = vector.broadcast %195 : vector<32x1xf32> to vector<32x64xf32>
    %198 = arith.addf %196, %197 : vector<32x64xf32>
    %c0_145 = arith.constant 0 : index
    %c0_146 = arith.constant 0 : index
    %199 = vector.load %arg20[%c0_145, %c0_146] : memref<16x64xbf16, #tpu.memory_space<vmem>>, vector<16x64xbf16>
    %200 = arith.truncf %191 : vector<32x16xf32> to vector<32x16xbf16>
    %cst_147 = arith.constant dense<0.000000e+00> : vector<32x64xf32>
    %201 = tpu.matmul %200, %199, %cst_147 {dimension_numbers = #tpu.dot_dimension_numbers<[1], [0], [0], [1], [0, 0, 1, 1], [], []>} : vector<32x16xbf16>, vector<16x64xbf16>, vector<32x64xf32> -> vector<32x64xf32>
    %202 = arith.addf %201, %198 : vector<32x64xf32>
    %203 = arith.truncf %202 : vector<32x64xf32> to vector<32x64xbf16>
    %cst_148 = arith.constant 0.000000e+00 : bf16
    %204 = vector.broadcast %cst_148 : bf16 to vector<32x9xbf16>
    %205 = vector.extract_strided_slice %203 {offsets = [0, 0], sizes = [32, 55], strides = [1, 1]} : vector<32x64xbf16> to vector<32x55xbf16>
    %206 = tpu.concatenate %204, %205 in 1 : vector<32x9xbf16>, vector<32x55xbf16> -> vector<32x64xbf16>
    %c0_149 = arith.constant 0 : index
    %c0_150 = arith.constant 0 : index
    %c0_151 = arith.constant 0 : index
    %207 = vector.load %arg19[%c0_149, %c0_150, %c0_151] : memref<9x1x64xbf16, #tpu.memory_space<vmem>>, vector<1x1x64xbf16>
    %208 = vector.shape_cast %207 : vector<1x1x64xbf16> to vector<1x64xbf16>
    %209 = vector.broadcast %208 : vector<1x64xbf16> to vector<32x64xbf16>
    %210 = arith.mulf %206, %209 : vector<32x64xbf16>
    %c0_152 = arith.constant 0 : index
    %c0_153 = arith.constant 0 : index
    %c0_154 = arith.constant 0 : index
    %211 = vector.load %arg17[%c0_152, %c0_153, %c0_154] : memref<9x32x32xbf16, #tpu.memory_space<vmem>>, vector<1x32x32xbf16>
    %212 = vector.shape_cast %211 : vector<1x32x32xbf16> to vector<32x32xbf16>
    %cst_155 = arith.constant dense<0.000000e+00> : vector<32x64xf32>
    %213 = tpu.matmul %212, %210, %cst_155 {dimension_numbers = #tpu.dot_dimension_numbers<[1], [0], [0], [1], [0, 0, 1, 1], [], []>} : vector<32x32xbf16>, vector<32x64xbf16>, vector<32x64xf32> -> vector<32x64xf32>
    %cst_156 = arith.constant 0.000000e+00 : bf16
    %214 = vector.broadcast %cst_156 : bf16 to vector<32x8xbf16>
    %215 = vector.extract_strided_slice %203 {offsets = [0, 0], sizes = [32, 56], strides = [1, 1]} : vector<32x64xbf16> to vector<32x56xbf16>
    %216 = tpu.concatenate %214, %215 in 1 : vector<32x8xbf16>, vector<32x56xbf16> -> vector<32x64xbf16>
    %c1_157 = arith.constant 1 : index
    %c0_158 = arith.constant 0 : index
    %c0_159 = arith.constant 0 : index
    %217 = vector.load %arg17[%c1_157, %c0_158, %c0_159] : memref<9x32x32xbf16, #tpu.memory_space<vmem>>, vector<1x32x32xbf16>
    %218 = vector.shape_cast %217 : vector<1x32x32xbf16> to vector<32x32xbf16>
    %cst_160 = arith.constant dense<0.000000e+00> : vector<32x64xf32>
    %219 = tpu.matmul %218, %216, %cst_160 {dimension_numbers = #tpu.dot_dimension_numbers<[1], [0], [0], [1], [0, 0, 1, 1], [], []>} : vector<32x32xbf16>, vector<32x64xbf16>, vector<32x64xf32> -> vector<32x64xf32>
    %220 = arith.addf %213, %219 : vector<32x64xf32>
    %cst_161 = arith.constant 0.000000e+00 : bf16
    %221 = vector.broadcast %cst_161 : bf16 to vector<32x7xbf16>
    %222 = vector.extract_strided_slice %203 {offsets = [0, 0], sizes = [32, 57], strides = [1, 1]} : vector<32x64xbf16> to vector<32x57xbf16>
    %223 = tpu.concatenate %221, %222 in 1 : vector<32x7xbf16>, vector<32x57xbf16> -> vector<32x64xbf16>
    %c2_162 = arith.constant 2 : index
    %c0_163 = arith.constant 0 : index
    %c0_164 = arith.constant 0 : index
    %224 = vector.load %arg19[%c2_162, %c0_163, %c0_164] : memref<9x1x64xbf16, #tpu.memory_space<vmem>>, vector<1x1x64xbf16>
    %225 = vector.shape_cast %224 : vector<1x1x64xbf16> to vector<1x64xbf16>
    %226 = vector.broadcast %225 : vector<1x64xbf16> to vector<32x64xbf16>
    %227 = arith.mulf %223, %226 : vector<32x64xbf16>
    %c2_165 = arith.constant 2 : index
    %c0_166 = arith.constant 0 : index
    %c0_167 = arith.constant 0 : index
    %228 = vector.load %arg17[%c2_165, %c0_166, %c0_167] : memref<9x32x32xbf16, #tpu.memory_space<vmem>>, vector<1x32x32xbf16>
    %229 = vector.shape_cast %228 : vector<1x32x32xbf16> to vector<32x32xbf16>
    %cst_168 = arith.constant dense<0.000000e+00> : vector<32x64xf32>
    %230 = tpu.matmul %229, %227, %cst_168 {dimension_numbers = #tpu.dot_dimension_numbers<[1], [0], [0], [1], [0, 0, 1, 1], [], []>} : vector<32x32xbf16>, vector<32x64xbf16>, vector<32x64xf32> -> vector<32x64xf32>
    %231 = arith.addf %220, %230 : vector<32x64xf32>
    %cst_169 = arith.constant 0.000000e+00 : bf16
    %232 = vector.broadcast %cst_169 : bf16 to vector<32x1xbf16>
    %233 = vector.extract_strided_slice %203 {offsets = [0, 0], sizes = [32, 63], strides = [1, 1]} : vector<32x64xbf16> to vector<32x63xbf16>
    %234 = tpu.concatenate %232, %233 in 1 : vector<32x1xbf16>, vector<32x63xbf16> -> vector<32x64xbf16>
    %c3_170 = arith.constant 3 : index
    %c0_171 = arith.constant 0 : index
    %c0_172 = arith.constant 0 : index
    %235 = vector.load %arg19[%c3_170, %c0_171, %c0_172] : memref<9x1x64xbf16, #tpu.memory_space<vmem>>, vector<1x1x64xbf16>
    %236 = vector.shape_cast %235 : vector<1x1x64xbf16> to vector<1x64xbf16>
    %237 = vector.broadcast %236 : vector<1x64xbf16> to vector<32x64xbf16>
    %238 = arith.mulf %234, %237 : vector<32x64xbf16>
    %c3_173 = arith.constant 3 : index
    %c0_174 = arith.constant 0 : index
    %c0_175 = arith.constant 0 : index
    %239 = vector.load %arg17[%c3_173, %c0_174, %c0_175] : memref<9x32x32xbf16, #tpu.memory_space<vmem>>, vector<1x32x32xbf16>
    %240 = vector.shape_cast %239 : vector<1x32x32xbf16> to vector<32x32xbf16>
    %cst_176 = arith.constant dense<0.000000e+00> : vector<32x64xf32>
    %241 = tpu.matmul %240, %238, %cst_176 {dimension_numbers = #tpu.dot_dimension_numbers<[1], [0], [0], [1], [0, 0, 1, 1], [], []>} : vector<32x32xbf16>, vector<32x64xbf16>, vector<32x64xf32> -> vector<32x64xf32>
    %242 = arith.addf %231, %241 : vector<32x64xf32>
    %c4_177 = arith.constant 4 : index
    %c0_178 = arith.constant 0 : index
    %c0_179 = arith.constant 0 : index
    %243 = vector.load %arg17[%c4_177, %c0_178, %c0_179] : memref<9x32x32xbf16, #tpu.memory_space<vmem>>, vector<1x32x32xbf16>
    %244 = vector.shape_cast %243 : vector<1x32x32xbf16> to vector<32x32xbf16>
    %cst_180 = arith.constant dense<0.000000e+00> : vector<32x64xf32>
    %245 = tpu.matmul %244, %203, %cst_180 {dimension_numbers = #tpu.dot_dimension_numbers<[1], [0], [0], [1], [0, 0, 1, 1], [], []>} : vector<32x32xbf16>, vector<32x64xbf16>, vector<32x64xf32> -> vector<32x64xf32>
    %246 = arith.addf %242, %245 : vector<32x64xf32>
    %cst_181 = arith.constant 0.000000e+00 : bf16
    %247 = vector.broadcast %cst_181 : bf16 to vector<32x1xbf16>
    %248 = vector.extract_strided_slice %203 {offsets = [0, 1], sizes = [32, 63], strides = [1, 1]} : vector<32x64xbf16> to vector<32x63xbf16>
    %249 = tpu.concatenate %248, %247 in 1 : vector<32x63xbf16>, vector<32x1xbf16> -> vector<32x64xbf16>
    %c5_182 = arith.constant 5 : index
    %c0_183 = arith.constant 0 : index
    %c0_184 = arith.constant 0 : index
    %250 = vector.load %arg19[%c5_182, %c0_183, %c0_184] : memref<9x1x64xbf16, #tpu.memory_space<vmem>>, vector<1x1x64xbf16>
    %251 = vector.shape_cast %250 : vector<1x1x64xbf16> to vector<1x64xbf16>
    %252 = vector.broadcast %251 : vector<1x64xbf16> to vector<32x64xbf16>
    %253 = arith.mulf %249, %252 : vector<32x64xbf16>
    %c5_185 = arith.constant 5 : index
    %c0_186 = arith.constant 0 : index
    %c0_187 = arith.constant 0 : index
    %254 = vector.load %arg17[%c5_185, %c0_186, %c0_187] : memref<9x32x32xbf16, #tpu.memory_space<vmem>>, vector<1x32x32xbf16>
    %255 = vector.shape_cast %254 : vector<1x32x32xbf16> to vector<32x32xbf16>
    %cst_188 = arith.constant dense<0.000000e+00> : vector<32x64xf32>
    %256 = tpu.matmul %255, %253, %cst_188 {dimension_numbers = #tpu.dot_dimension_numbers<[1], [0], [0], [1], [0, 0, 1, 1], [], []>} : vector<32x32xbf16>, vector<32x64xbf16>, vector<32x64xf32> -> vector<32x64xf32>
    %257 = arith.addf %246, %256 : vector<32x64xf32>
    %cst_189 = arith.constant 0.000000e+00 : bf16
    %258 = vector.broadcast %cst_189 : bf16 to vector<32x7xbf16>
    %259 = vector.extract_strided_slice %203 {offsets = [0, 7], sizes = [32, 57], strides = [1, 1]} : vector<32x64xbf16> to vector<32x57xbf16>
    %260 = tpu.concatenate %259, %258 in 1 : vector<32x57xbf16>, vector<32x7xbf16> -> vector<32x64xbf16>
    %c6_190 = arith.constant 6 : index
    %c0_191 = arith.constant 0 : index
    %c0_192 = arith.constant 0 : index
    %261 = vector.load %arg19[%c6_190, %c0_191, %c0_192] : memref<9x1x64xbf16, #tpu.memory_space<vmem>>, vector<1x1x64xbf16>
    %262 = vector.shape_cast %261 : vector<1x1x64xbf16> to vector<1x64xbf16>
    %263 = vector.broadcast %262 : vector<1x64xbf16> to vector<32x64xbf16>
    %264 = arith.mulf %260, %263 : vector<32x64xbf16>
    %c6_193 = arith.constant 6 : index
    %c0_194 = arith.constant 0 : index
    %c0_195 = arith.constant 0 : index
    %265 = vector.load %arg17[%c6_193, %c0_194, %c0_195] : memref<9x32x32xbf16, #tpu.memory_space<vmem>>, vector<1x32x32xbf16>
    %266 = vector.shape_cast %265 : vector<1x32x32xbf16> to vector<32x32xbf16>
    %cst_196 = arith.constant dense<0.000000e+00> : vector<32x64xf32>
    %267 = tpu.matmul %266, %264, %cst_196 {dimension_numbers = #tpu.dot_dimension_numbers<[1], [0], [0], [1], [0, 0, 1, 1], [], []>} : vector<32x32xbf16>, vector<32x64xbf16>, vector<32x64xf32> -> vector<32x64xf32>
    %268 = arith.addf %257, %267 : vector<32x64xf32>
    %cst_197 = arith.constant 0.000000e+00 : bf16
    %269 = vector.broadcast %cst_197 : bf16 to vector<32x8xbf16>
    %270 = vector.extract_strided_slice %203 {offsets = [0, 8], sizes = [32, 56], strides = [1, 1]} : vector<32x64xbf16> to vector<32x56xbf16>
    %271 = tpu.concatenate %270, %269 in 1 : vector<32x56xbf16>, vector<32x8xbf16> -> vector<32x64xbf16>
    %c7_198 = arith.constant 7 : index
    %c0_199 = arith.constant 0 : index
    %c0_200 = arith.constant 0 : index
    %272 = vector.load %arg17[%c7_198, %c0_199, %c0_200] : memref<9x32x32xbf16, #tpu.memory_space<vmem>>, vector<1x32x32xbf16>
    %273 = vector.shape_cast %272 : vector<1x32x32xbf16> to vector<32x32xbf16>
    %cst_201 = arith.constant dense<0.000000e+00> : vector<32x64xf32>
    %274 = tpu.matmul %273, %271, %cst_201 {dimension_numbers = #tpu.dot_dimension_numbers<[1], [0], [0], [1], [0, 0, 1, 1], [], []>} : vector<32x32xbf16>, vector<32x64xbf16>, vector<32x64xf32> -> vector<32x64xf32>
    %275 = arith.addf %268, %274 : vector<32x64xf32>
    %cst_202 = arith.constant 0.000000e+00 : bf16
    %276 = vector.broadcast %cst_202 : bf16 to vector<32x9xbf16>
    %277 = vector.extract_strided_slice %203 {offsets = [0, 9], sizes = [32, 55], strides = [1, 1]} : vector<32x64xbf16> to vector<32x55xbf16>
    %278 = tpu.concatenate %277, %276 in 1 : vector<32x55xbf16>, vector<32x9xbf16> -> vector<32x64xbf16>
    %c8_203 = arith.constant 8 : index
    %c0_204 = arith.constant 0 : index
    %c0_205 = arith.constant 0 : index
    %279 = vector.load %arg19[%c8_203, %c0_204, %c0_205] : memref<9x1x64xbf16, #tpu.memory_space<vmem>>, vector<1x1x64xbf16>
    %280 = vector.shape_cast %279 : vector<1x1x64xbf16> to vector<1x64xbf16>
    %281 = vector.broadcast %280 : vector<1x64xbf16> to vector<32x64xbf16>
    %282 = arith.mulf %278, %281 : vector<32x64xbf16>
    %c8_206 = arith.constant 8 : index
    %c0_207 = arith.constant 0 : index
    %c0_208 = arith.constant 0 : index
    %283 = vector.load %arg17[%c8_206, %c0_207, %c0_208] : memref<9x32x32xbf16, #tpu.memory_space<vmem>>, vector<1x32x32xbf16>
    %284 = vector.shape_cast %283 : vector<1x32x32xbf16> to vector<32x32xbf16>
    %cst_209 = arith.constant dense<0.000000e+00> : vector<32x64xf32>
    %285 = tpu.matmul %284, %282, %cst_209 {dimension_numbers = #tpu.dot_dimension_numbers<[1], [0], [0], [1], [0, 0, 1, 1], [], []>} : vector<32x32xbf16>, vector<32x64xbf16>, vector<32x64xf32> -> vector<32x64xf32>
    %286 = arith.addf %275, %285 : vector<32x64xf32>
    %c0_210 = arith.constant 0 : index
    %c0_211 = arith.constant 0 : index
    %287 = vector.load %arg18[%c0_210, %c0_211] : memref<32x1xf32, #tpu.memory_space<vmem>>, vector<32x1xf32>
    %288 = vector.broadcast %287 : vector<32x1xf32> to vector<32x64xf32>
    %289 = arith.addf %286, %288 : vector<32x64xf32>
    %290 = arith.truncf %289 : vector<32x64xf32> to vector<32x64xbf16>
    %cst_212 = arith.constant 0.000000e+00 : bf16
    %291 = vector.broadcast %cst_212 : bf16 to vector<32x9xbf16>
    %292 = vector.extract_strided_slice %290 {offsets = [0, 0], sizes = [32, 55], strides = [1, 1]} : vector<32x64xbf16> to vector<32x55xbf16>
    %293 = tpu.concatenate %291, %292 in 1 : vector<32x9xbf16>, vector<32x55xbf16> -> vector<32x64xbf16>
    %c0_213 = arith.constant 0 : index
    %c0_214 = arith.constant 0 : index
    %c0_215 = arith.constant 0 : index
    %294 = vector.load %arg19[%c0_213, %c0_214, %c0_215] : memref<9x1x64xbf16, #tpu.memory_space<vmem>>, vector<1x1x64xbf16>
    %295 = vector.shape_cast %294 : vector<1x1x64xbf16> to vector<1x64xbf16>
    %296 = vector.broadcast %295 : vector<1x64xbf16> to vector<32x64xbf16>
    %297 = arith.mulf %293, %296 : vector<32x64xbf16>
    %c0_216 = arith.constant 0 : index
    %c0_217 = arith.constant 0 : index
    %c0_218 = arith.constant 0 : index
    %298 = vector.load %arg21[%c0_216, %c0_217, %c0_218] : memref<9x16x32xbf16, #tpu.memory_space<vmem>>, vector<1x16x32xbf16>
    %299 = vector.shape_cast %298 : vector<1x16x32xbf16> to vector<16x32xbf16>
    %cst_219 = arith.constant dense<0.000000e+00> : vector<16x64xf32>
    %300 = tpu.matmul %299, %297, %cst_219 {dimension_numbers = #tpu.dot_dimension_numbers<[1], [0], [0], [1], [0, 0, 1, 1], [], []>} : vector<16x32xbf16>, vector<32x64xbf16>, vector<16x64xf32> -> vector<16x64xf32>
    %cst_220 = arith.constant 0.000000e+00 : bf16
    %301 = vector.broadcast %cst_220 : bf16 to vector<32x8xbf16>
    %302 = vector.extract_strided_slice %290 {offsets = [0, 0], sizes = [32, 56], strides = [1, 1]} : vector<32x64xbf16> to vector<32x56xbf16>
    %303 = tpu.concatenate %301, %302 in 1 : vector<32x8xbf16>, vector<32x56xbf16> -> vector<32x64xbf16>
    %c1_221 = arith.constant 1 : index
    %c0_222 = arith.constant 0 : index
    %c0_223 = arith.constant 0 : index
    %304 = vector.load %arg21[%c1_221, %c0_222, %c0_223] : memref<9x16x32xbf16, #tpu.memory_space<vmem>>, vector<1x16x32xbf16>
    %305 = vector.shape_cast %304 : vector<1x16x32xbf16> to vector<16x32xbf16>
    %cst_224 = arith.constant dense<0.000000e+00> : vector<16x64xf32>
    %306 = tpu.matmul %305, %303, %cst_224 {dimension_numbers = #tpu.dot_dimension_numbers<[1], [0], [0], [1], [0, 0, 1, 1], [], []>} : vector<16x32xbf16>, vector<32x64xbf16>, vector<16x64xf32> -> vector<16x64xf32>
    %307 = arith.addf %300, %306 : vector<16x64xf32>
    %cst_225 = arith.constant 0.000000e+00 : bf16
    %308 = vector.broadcast %cst_225 : bf16 to vector<32x7xbf16>
    %309 = vector.extract_strided_slice %290 {offsets = [0, 0], sizes = [32, 57], strides = [1, 1]} : vector<32x64xbf16> to vector<32x57xbf16>
    %310 = tpu.concatenate %308, %309 in 1 : vector<32x7xbf16>, vector<32x57xbf16> -> vector<32x64xbf16>
    %c2_226 = arith.constant 2 : index
    %c0_227 = arith.constant 0 : index
    %c0_228 = arith.constant 0 : index
    %311 = vector.load %arg19[%c2_226, %c0_227, %c0_228] : memref<9x1x64xbf16, #tpu.memory_space<vmem>>, vector<1x1x64xbf16>
    %312 = vector.shape_cast %311 : vector<1x1x64xbf16> to vector<1x64xbf16>
    %313 = vector.broadcast %312 : vector<1x64xbf16> to vector<32x64xbf16>
    %314 = arith.mulf %310, %313 : vector<32x64xbf16>
    %c2_229 = arith.constant 2 : index
    %c0_230 = arith.constant 0 : index
    %c0_231 = arith.constant 0 : index
    %315 = vector.load %arg21[%c2_229, %c0_230, %c0_231] : memref<9x16x32xbf16, #tpu.memory_space<vmem>>, vector<1x16x32xbf16>
    %316 = vector.shape_cast %315 : vector<1x16x32xbf16> to vector<16x32xbf16>
    %cst_232 = arith.constant dense<0.000000e+00> : vector<16x64xf32>
    %317 = tpu.matmul %316, %314, %cst_232 {dimension_numbers = #tpu.dot_dimension_numbers<[1], [0], [0], [1], [0, 0, 1, 1], [], []>} : vector<16x32xbf16>, vector<32x64xbf16>, vector<16x64xf32> -> vector<16x64xf32>
    %318 = arith.addf %307, %317 : vector<16x64xf32>
    %cst_233 = arith.constant 0.000000e+00 : bf16
    %319 = vector.broadcast %cst_233 : bf16 to vector<32x1xbf16>
    %320 = vector.extract_strided_slice %290 {offsets = [0, 0], sizes = [32, 63], strides = [1, 1]} : vector<32x64xbf16> to vector<32x63xbf16>
    %321 = tpu.concatenate %319, %320 in 1 : vector<32x1xbf16>, vector<32x63xbf16> -> vector<32x64xbf16>
    %c3_234 = arith.constant 3 : index
    %c0_235 = arith.constant 0 : index
    %c0_236 = arith.constant 0 : index
    %322 = vector.load %arg19[%c3_234, %c0_235, %c0_236] : memref<9x1x64xbf16, #tpu.memory_space<vmem>>, vector<1x1x64xbf16>
    %323 = vector.shape_cast %322 : vector<1x1x64xbf16> to vector<1x64xbf16>
    %324 = vector.broadcast %323 : vector<1x64xbf16> to vector<32x64xbf16>
    %325 = arith.mulf %321, %324 : vector<32x64xbf16>
    %c3_237 = arith.constant 3 : index
    %c0_238 = arith.constant 0 : index
    %c0_239 = arith.constant 0 : index
    %326 = vector.load %arg21[%c3_237, %c0_238, %c0_239] : memref<9x16x32xbf16, #tpu.memory_space<vmem>>, vector<1x16x32xbf16>
    %327 = vector.shape_cast %326 : vector<1x16x32xbf16> to vector<16x32xbf16>
    %cst_240 = arith.constant dense<0.000000e+00> : vector<16x64xf32>
    %328 = tpu.matmul %327, %325, %cst_240 {dimension_numbers = #tpu.dot_dimension_numbers<[1], [0], [0], [1], [0, 0, 1, 1], [], []>} : vector<16x32xbf16>, vector<32x64xbf16>, vector<16x64xf32> -> vector<16x64xf32>
    %329 = arith.addf %318, %328 : vector<16x64xf32>
    %c4_241 = arith.constant 4 : index
    %c0_242 = arith.constant 0 : index
    %c0_243 = arith.constant 0 : index
    %330 = vector.load %arg21[%c4_241, %c0_242, %c0_243] : memref<9x16x32xbf16, #tpu.memory_space<vmem>>, vector<1x16x32xbf16>
    %331 = vector.shape_cast %330 : vector<1x16x32xbf16> to vector<16x32xbf16>
    %cst_244 = arith.constant dense<0.000000e+00> : vector<16x64xf32>
    %332 = tpu.matmul %331, %290, %cst_244 {dimension_numbers = #tpu.dot_dimension_numbers<[1], [0], [0], [1], [0, 0, 1, 1], [], []>} : vector<16x32xbf16>, vector<32x64xbf16>, vector<16x64xf32> -> vector<16x64xf32>
    %333 = arith.addf %329, %332 : vector<16x64xf32>
    %cst_245 = arith.constant 0.000000e+00 : bf16
    %334 = vector.broadcast %cst_245 : bf16 to vector<32x1xbf16>
    %335 = vector.extract_strided_slice %290 {offsets = [0, 1], sizes = [32, 63], strides = [1, 1]} : vector<32x64xbf16> to vector<32x63xbf16>
    %336 = tpu.concatenate %335, %334 in 1 : vector<32x63xbf16>, vector<32x1xbf16> -> vector<32x64xbf16>
    %c5_246 = arith.constant 5 : index
    %c0_247 = arith.constant 0 : index
    %c0_248 = arith.constant 0 : index
    %337 = vector.load %arg19[%c5_246, %c0_247, %c0_248] : memref<9x1x64xbf16, #tpu.memory_space<vmem>>, vector<1x1x64xbf16>
    %338 = vector.shape_cast %337 : vector<1x1x64xbf16> to vector<1x64xbf16>
    %339 = vector.broadcast %338 : vector<1x64xbf16> to vector<32x64xbf16>
    %340 = arith.mulf %336, %339 : vector<32x64xbf16>
    %c5_249 = arith.constant 5 : index
    %c0_250 = arith.constant 0 : index
    %c0_251 = arith.constant 0 : index
    %341 = vector.load %arg21[%c5_249, %c0_250, %c0_251] : memref<9x16x32xbf16, #tpu.memory_space<vmem>>, vector<1x16x32xbf16>
    %342 = vector.shape_cast %341 : vector<1x16x32xbf16> to vector<16x32xbf16>
    %cst_252 = arith.constant dense<0.000000e+00> : vector<16x64xf32>
    %343 = tpu.matmul %342, %340, %cst_252 {dimension_numbers = #tpu.dot_dimension_numbers<[1], [0], [0], [1], [0, 0, 1, 1], [], []>} : vector<16x32xbf16>, vector<32x64xbf16>, vector<16x64xf32> -> vector<16x64xf32>
    %344 = arith.addf %333, %343 : vector<16x64xf32>
    %cst_253 = arith.constant 0.000000e+00 : bf16
    %345 = vector.broadcast %cst_253 : bf16 to vector<32x7xbf16>
    %346 = vector.extract_strided_slice %290 {offsets = [0, 7], sizes = [32, 57], strides = [1, 1]} : vector<32x64xbf16> to vector<32x57xbf16>
    %347 = tpu.concatenate %346, %345 in 1 : vector<32x57xbf16>, vector<32x7xbf16> -> vector<32x64xbf16>
    %c6_254 = arith.constant 6 : index
    %c0_255 = arith.constant 0 : index
    %c0_256 = arith.constant 0 : index
    %348 = vector.load %arg19[%c6_254, %c0_255, %c0_256] : memref<9x1x64xbf16, #tpu.memory_space<vmem>>, vector<1x1x64xbf16>
    %349 = vector.shape_cast %348 : vector<1x1x64xbf16> to vector<1x64xbf16>
    %350 = vector.broadcast %349 : vector<1x64xbf16> to vector<32x64xbf16>
    %351 = arith.mulf %347, %350 : vector<32x64xbf16>
    %c6_257 = arith.constant 6 : index
    %c0_258 = arith.constant 0 : index
    %c0_259 = arith.constant 0 : index
    %352 = vector.load %arg21[%c6_257, %c0_258, %c0_259] : memref<9x16x32xbf16, #tpu.memory_space<vmem>>, vector<1x16x32xbf16>
    %353 = vector.shape_cast %352 : vector<1x16x32xbf16> to vector<16x32xbf16>
    %cst_260 = arith.constant dense<0.000000e+00> : vector<16x64xf32>
    %354 = tpu.matmul %353, %351, %cst_260 {dimension_numbers = #tpu.dot_dimension_numbers<[1], [0], [0], [1], [0, 0, 1, 1], [], []>} : vector<16x32xbf16>, vector<32x64xbf16>, vector<16x64xf32> -> vector<16x64xf32>
    %355 = arith.addf %344, %354 : vector<16x64xf32>
    %cst_261 = arith.constant 0.000000e+00 : bf16
    %356 = vector.broadcast %cst_261 : bf16 to vector<32x8xbf16>
    %357 = vector.extract_strided_slice %290 {offsets = [0, 8], sizes = [32, 56], strides = [1, 1]} : vector<32x64xbf16> to vector<32x56xbf16>
    %358 = tpu.concatenate %357, %356 in 1 : vector<32x56xbf16>, vector<32x8xbf16> -> vector<32x64xbf16>
    %c7_262 = arith.constant 7 : index
    %c0_263 = arith.constant 0 : index
    %c0_264 = arith.constant 0 : index
    %359 = vector.load %arg21[%c7_262, %c0_263, %c0_264] : memref<9x16x32xbf16, #tpu.memory_space<vmem>>, vector<1x16x32xbf16>
    %360 = vector.shape_cast %359 : vector<1x16x32xbf16> to vector<16x32xbf16>
    %cst_265 = arith.constant dense<0.000000e+00> : vector<16x64xf32>
    %361 = tpu.matmul %360, %358, %cst_265 {dimension_numbers = #tpu.dot_dimension_numbers<[1], [0], [0], [1], [0, 0, 1, 1], [], []>} : vector<16x32xbf16>, vector<32x64xbf16>, vector<16x64xf32> -> vector<16x64xf32>
    %362 = arith.addf %355, %361 : vector<16x64xf32>
    %cst_266 = arith.constant 0.000000e+00 : bf16
    %363 = vector.broadcast %cst_266 : bf16 to vector<32x9xbf16>
    %364 = vector.extract_strided_slice %290 {offsets = [0, 9], sizes = [32, 55], strides = [1, 1]} : vector<32x64xbf16> to vector<32x55xbf16>
    %365 = tpu.concatenate %364, %363 in 1 : vector<32x55xbf16>, vector<32x9xbf16> -> vector<32x64xbf16>
    %c8_267 = arith.constant 8 : index
    %c0_268 = arith.constant 0 : index
    %c0_269 = arith.constant 0 : index
    %366 = vector.load %arg19[%c8_267, %c0_268, %c0_269] : memref<9x1x64xbf16, #tpu.memory_space<vmem>>, vector<1x1x64xbf16>
    %367 = vector.shape_cast %366 : vector<1x1x64xbf16> to vector<1x64xbf16>
    %368 = vector.broadcast %367 : vector<1x64xbf16> to vector<32x64xbf16>
    %369 = arith.mulf %365, %368 : vector<32x64xbf16>
    %c8_270 = arith.constant 8 : index
    %c0_271 = arith.constant 0 : index
    %c0_272 = arith.constant 0 : index
    %370 = vector.load %arg21[%c8_270, %c0_271, %c0_272] : memref<9x16x32xbf16, #tpu.memory_space<vmem>>, vector<1x16x32xbf16>
    %371 = vector.shape_cast %370 : vector<1x16x32xbf16> to vector<16x32xbf16>
    %cst_273 = arith.constant dense<0.000000e+00> : vector<16x64xf32>
    %372 = tpu.matmul %371, %369, %cst_273 {dimension_numbers = #tpu.dot_dimension_numbers<[1], [0], [0], [1], [0, 0, 1, 1], [], []>} : vector<16x32xbf16>, vector<32x64xbf16>, vector<16x64xf32> -> vector<16x64xf32>
    %373 = arith.addf %362, %372 : vector<16x64xf32>
    %c0_274 = arith.constant 0 : index
    %c0_275 = arith.constant 0 : index
    %374 = vector.load %arg22[%c0_274, %c0_275] : memref<16x1xf32, #tpu.memory_space<vmem>>, vector<16x1xf32>
    %375 = vector.broadcast %374 : vector<16x1xf32> to vector<16x64xf32>
    %376 = arith.addf %373, %375 : vector<16x64xf32>
    %cst_276 = arith.constant 0.000000e+00 : f32
    %377 = vector.broadcast %cst_276 : f32 to vector<16x64xf32>
    %378 = arith.maximumf %376, %377 : vector<16x64xf32>
    %c0_277 = arith.constant 0 : index
    %c0_278 = arith.constant 0 : index
    %c0_279 = arith.constant 0 : index
    %379 = vector.load %arg23[%c0_277, %c0_278, %c0_279] : memref<1x16x64xf32, #tpu.memory_space<vmem>>, vector<1x16x64xf32>
    %380 = vector.shape_cast %379 : vector<1x16x64xf32> to vector<16x64xf32>
    %381 = vector.shape_cast %378 : vector<16x64xf32> to vector<1x16x64xf32>
    tpu.vector_store %arg23[%c0_277, %c0_278, %c0_279], %381 {strides = array<i32>} : memref<1x16x64xf32, #tpu.memory_space<vmem>>, vector<1x16x64xf32>,
    return
  }
  func.func @transform_0(%arg0: i32) -> (i32, i32, i32) {
    %c0_i32 = arith.constant 0 : i32
    %c0_i32_0 = arith.constant 0 : i32
    %c0_i32_1 = arith.constant 0 : i32
    return %arg0, %c0_i32, %c0_i32_0 : i32, i32, i32
  }
  func.func @transform_1(%arg0: i32) -> (i32, i32) {
    %c0_i32 = arith.constant 0 : i32
    %c0_i32_0 = arith.constant 0 : i32
    %c0_i32_1 = arith.constant 0 : i32
    return %c0_i32, %c0_i32_0 : i32, i32
  }
  func.func @transform_2(%arg0: i32) -> (i32, i32) {
    %c0_i32 = arith.constant 0 : i32
    %c0_i32_0 = arith.constant 0 : i32
    %c0_i32_1 = arith.constant 0 : i32
    return %c0_i32, %c0_i32_0 : i32, i32
  }
  func.func @transform_3(%arg0: i32) -> (i32, i32, i32) {
    %c0_i32 = arith.constant 0 : i32
    %c0_i32_0 = arith.constant 0 : i32
    %c0_i32_1 = arith.constant 0 : i32
    %c0_i32_2 = arith.constant 0 : i32
    return %c0_i32, %c0_i32_0, %c0_i32_1 : i32, i32, i32
  }
  func.func @transform_4(%arg0: i32) -> (i32, i32) {
    %c0_i32 = arith.constant 0 : i32
    %c0_i32_0 = arith.constant 0 : i32
    %c0_i32_1 = arith.constant 0 : i32
    return %c0_i32, %c0_i32_0 : i32, i32
  }
  func.func @transform_5(%arg0: i32) -> (i32, i32, i32) {
    %c0_i32 = arith.constant 0 : i32
    %c0_i32_0 = arith.constant 0 : i32
    %c0_i32_1 = arith.constant 0 : i32
    %c0_i32_2 = arith.constant 0 : i32
    return %c0_i32, %c0_i32_0, %c0_i32_1 : i32, i32, i32
  }
  func.func @transform_6(%arg0: i32) -> (i32, i32, i32) {
    %c0_i32 = arith.constant 0 : i32
    %c0_i32_0 = arith.constant 0 : i32
    %c0_i32_1 = arith.constant 0 : i32
    return %arg0, %c0_i32, %c0_i32_0 : i32, i32, i32
  }
  func.func @transform_7(%arg0: i32) -> (i32, i32) {
    %c0_i32 = arith.constant 0 : i32
    %c0_i32_0 = arith.constant 0 : i32
    %c0_i32_1 = arith.constant 0 : i32
    return %c0_i32, %c0_i32_0 : i32, i32
  }
  func.func @transform_8(%arg0: i32) -> (i32, i32) {
    %c0_i32 = arith.constant 0 : i32
    %c0_i32_0 = arith.constant 0 : i32
    %c0_i32_1 = arith.constant 0 : i32
    return %c0_i32, %c0_i32_0 : i32, i32
  }
  func.func @transform_9(%arg0: i32) -> (i32, i32, i32) {
    %c0_i32 = arith.constant 0 : i32
    %c0_i32_0 = arith.constant 0 : i32
    %c0_i32_1 = arith.constant 0 : i32
    %c0_i32_2 = arith.constant 0 : i32
    return %c0_i32, %c0_i32_0, %c0_i32_1 : i32, i32, i32
  }
  func.func @transform_10(%arg0: i32) -> (i32, i32) {
    %c0_i32 = arith.constant 0 : i32
    %c0_i32_0 = arith.constant 0 : i32
    %c0_i32_1 = arith.constant 0 : i32
    return %c0_i32, %c0_i32_0 : i32, i32
  }
  func.func @transform_11(%arg0: i32) -> (i32, i32, i32) {
    %c0_i32 = arith.constant 0 : i32
    %c0_i32_0 = arith.constant 0 : i32
    %c0_i32_1 = arith.constant 0 : i32
    %c0_i32_2 = arith.constant 0 : i32
    return %c0_i32, %c0_i32_0, %c0_i32_1 : i32, i32, i32
  }
  func.func @transform_12(%arg0: i32) -> (i32, i32) {
    %c0_i32 = arith.constant 0 : i32
    %c0_i32_0 = arith.constant 0 : i32
    %c0_i32_1 = arith.constant 0 : i32
    return %c0_i32, %c0_i32_0 : i32, i32
  }
  func.func @transform_13(%arg0: i32) -> (i32, i32, i32) {
    %c0_i32 = arith.constant 0 : i32
    %c0_i32_0 = arith.constant 0 : i32
    %c0_i32_1 = arith.constant 0 : i32
    return %arg0, %c0_i32, %c0_i32_0 : i32, i32, i32
  }
  func.func @transform_14(%arg0: i32) -> (i32, i32) {
    %c0_i32 = arith.constant 0 : i32
    %c0_i32_0 = arith.constant 0 : i32
    %c0_i32_1 = arith.constant 0 : i32
    return %c0_i32, %c0_i32_0 : i32, i32
  }
  func.func @transform_15(%arg0: i32) -> (i32, i32) {
    %c0_i32 = arith.constant 0 : i32
    %c0_i32_0 = arith.constant 0 : i32
    %c0_i32_1 = arith.constant 0 : i32
    return %c0_i32, %c0_i32_0 : i32, i32
  }
  func.func @transform_16(%arg0: i32) -> (i32, i32, i32) {
    %c0_i32 = arith.constant 0 : i32
    %c0_i32_0 = arith.constant 0 : i32
    %c0_i32_1 = arith.constant 0 : i32
    %c0_i32_2 = arith.constant 0 : i32
    return %c0_i32, %c0_i32_0, %c0_i32_1 : i32, i32, i32
  }
  func.func @transform_17(%arg0: i32) -> (i32, i32) {
    %c0_i32 = arith.constant 0 : i32
    %c0_i32_0 = arith.constant 0 : i32
    %c0_i32_1 = arith.constant 0 : i32
    return %c0_i32, %c0_i32_0 : i32, i32
  }
  func.func @transform_18(%arg0: i32) -> (i32, i32, i32) {
    %c0_i32 = arith.constant 0 : i32
    %c0_i32_0 = arith.constant 0 : i32
    %c0_i32_1 = arith.constant 0 : i32
    %c0_i32_2 = arith.constant 0 : i32
    return %c0_i32, %c0_i32_0, %c0_i32_1 : i32, i32, i32
  }
  func.func @transform_19(%arg0: i32) -> (i32, i32) {
    %c0_i32 = arith.constant 0 : i32
    %c0_i32_0 = arith.constant 0 : i32
    %c0_i32_1 = arith.constant 0 : i32
    return %c0_i32, %c0_i32_0 : i32, i32
  }
  func.func @transform_20(%arg0: i32) -> (i32, i32, i32) {
    %c0_i32 = arith.constant 0 : i32
    %c0_i32_0 = arith.constant 0 : i32
    %c0_i32_1 = arith.constant 0 : i32
    %c0_i32_2 = arith.constant 0 : i32
    return %c0_i32, %c0_i32_0, %c0_i32_1 : i32, i32, i32
  }
  func.func @transform_21(%arg0: i32) -> (i32, i32) {
    %c0_i32 = arith.constant 0 : i32
    %c0_i32_0 = arith.constant 0 : i32
    %c0_i32_1 = arith.constant 0 : i32
    return %c0_i32, %c0_i32_0 : i32, i32
  }
  func.func @transform_22(%arg0: i32) -> (i32, i32, i32) {
    %c0_i32 = arith.constant 0 : i32
    %c0_i32_0 = arith.constant 0 : i32
    %c0_i32_1 = arith.constant 0 : i32
    return %arg0, %c0_i32, %c0_i32_0 : i32, i32, i32
  }
}

</mosaic_0001>

<llo_original>
// kernel: tpu_custom_call.1
$region0: #{tpu_custom_call.1}
  #allocation0 [shape = 'u32[]', space=smem, size = 0x4, offset = 0x4, fixed_abs, tag = 'smem constant byte address 0x4 - core index']
  #allocation1 [shape = 'u32[144,128]{1,0:T(1,128)}', space=vmem, size = 0x12000, scoped, tag = 'internal scratch']
  %s0 = inlined_call_operand.hbm [shape: bf16[2,32,4], index: 0, kind: input, shape index: {}]
  %s1 = inlined_call_operand.hbm [shape: bf16[32,32], index: 1, kind: input, shape index: {}]
  %s2 = inlined_call_operand.hbm [shape: f32[32,1], index: 2, kind: input, shape index: {}]
  %s3 = inlined_call_operand.hbm [shape: bf16[9,32,32], index: 3, kind: input, shape index: {}]
  %s4 = inlined_call_operand.hbm [shape: f32[32,1], index: 4, kind: input, shape index: {}]
  %s5 = inlined_call_operand.hbm [shape: bf16[9,1,4], index: 5, kind: input, shape index: {}]
  %s6 = inlined_call_operand.hbm [shape: bf16[2,32,16], index: 6, kind: input, shape index: {}]
  %s7 = inlined_call_operand.hbm [shape: bf16[32,32], index: 7, kind: input, shape index: {}]
  %s8 = inlined_call_operand.hbm [shape: f32[32,1], index: 8, kind: input, shape index: {}]
  %s9 = inlined_call_operand.hbm [shape: bf16[9,32,32], index: 9, kind: input, shape index: {}]
  %s10 = inlined_call_operand.hbm [shape: f32[32,1], index: 10, kind: input, shape index: {}]
  %s11 = inlined_call_operand.hbm [shape: bf16[9,1,16], index: 11, kind: input, shape index: {}]
  %s12 = inlined_call_operand.hbm [shape: bf16[4,16], index: 12, kind: input, shape index: {}]
  %s13 = inlined_call_operand.hbm [shape: bf16[2,16,64], index: 13, kind: input, shape index: {}]
  %s14 = inlined_call_operand.hbm [shape: bf16[32,16], index: 14, kind: input, shape index: {}]
  %s15 = inlined_call_operand.hbm [shape: f32[32,1], index: 15, kind: input, shape index: {}]
  %s16 = inlined_call_operand.hbm [shape: bf16[9,32,32], index: 16, kind: input, shape index: {}]
  %s17 = inlined_call_operand.hbm [shape: f32[32,1], index: 17, kind: input, shape index: {}]
  %s18 = inlined_call_operand.hbm [shape: bf16[9,1,64], index: 18, kind: input, shape index: {}]
  %s19 = inlined_call_operand.hbm [shape: bf16[16,64], index: 19, kind: input, shape index: {}]
  %s20 = inlined_call_operand.hbm [shape: bf16[9,16,32], index: 20, kind: input, shape index: {}]
  %s21 = inlined_call_operand.hbm [shape: f32[16,1], index: 21, kind: input, shape index: {}]
  %s22 = inlined_call_operand.hbm [shape: f32[2,16,64], index: 22, kind: output, shape index: {}]
  %s23 = sld [smem:[#allocation0]]
  $region209: #{tpu_custom_call.1} parent=0
    _
  %s25 = ssub.s32 1, %s23
  %s26 = scalar_select 0, %s25, %s23
  $region1: #{tpu_custom_call.1} parent=0
    #allocation2 [shape = 'u8[16384]{0}', space=vmem, size = 0x4000, scoped, tag = 'input window, operand 0']
    #allocation3 [shape = 's32[2]{0}', space=sflag, size = 0x8, scoped, tag = 'scoped memory for tpu_custom_call.1']
    #allocation4 [shape = 's32[2]{0}', space=sflag, size = 0x8, scoped, tag = 'scoped memory for tpu_custom_call.1']
    #allocation5 [shape = 'u8[8192]{0}', space=vmem, size = 0x2000, scoped, tag = 'input window, operand 1, single buffered']
    #allocation6 [shape = 's32[1]{0}', space=sflag, size = 0x4, scoped, tag = 'scoped memory for tpu_custom_call.1']
    #allocation7 [shape = 'u8[16384]{0}', space=vmem, size = 0x4000, scoped, tag = 'input window, operand 2, single buffered']
    #allocation8 [shape = 'u8[73728]{0}', space=vmem, size = 0x12000, scoped, tag = 'input window, operand 3, single buffered']
    #allocation9 [shape = 's32[1]{0}', space=sflag, size = 0x4, scoped, tag = 'scoped memory for tpu_custom_call.1']
    #allocation10 [shape = 'u8[16384]{0}', space=vmem, size = 0x4000, scoped, tag = 'input window, operand 4, single buffered']
    #allocation11 [shape = 'u8[4608]{0}', space=vmem, size = 0x1400, scoped, tag = 'input window, operand 5, single buffered']
    #allocation12 [shape = 's32[1]{0}', space=sflag, size = 0x4, scoped, tag = 'scoped memory for tpu_custom_call.1']
    #allocation13 [shape = 'u8[16384]{0}', space=vmem, size = 0x4000, scoped, tag = 'input window, operand 6']
    #allocation14 [shape = 'u8[8192]{0}', space=vmem, size = 0x2000, scoped, tag = 'input window, operand 7, single buffered']
    #allocation15 [shape = 'u8[16384]{0}', space=vmem, size = 0x4000, scoped, tag = 'input window, operand 8, single buffered']
    #allocation16 [shape = 'u8[73728]{0}', space=vmem, size = 0x12000, scoped, tag = 'input window, operand 9, single buffered']
    #allocation17 [shape = 'u8[16384]{0}', space=vmem, size = 0x4000, scoped, tag = 'input window, operand 10, single buffered']
    #allocation18 [shape = 's32[1]{0}', space=sflag, size = 0x4, scoped, tag = 'scoped memory for tpu_custom_call.1']
    #allocation19 [shape = 'u8[4608]{0}', space=vmem, size = 0x1400, scoped, tag = 'input window, operand 11, single buffered']
    #allocation20 [shape = 'u8[1024]{0}', space=vmem, size = 0x400, scoped, tag = 'input window, operand 12, single buffered']
    #allocation21 [shape = 's32[1]{0}', space=sflag, size = 0x4, scoped, tag = 'scoped memory for tpu_custom_call.1']
    #allocation22 [shape = 'u8[8192]{0}', space=vmem, size = 0x2000, scoped, tag = 'input window, operand 13']
    #allocation23 [shape = 'u8[8192]{0}', space=vmem, size = 0x2000, scoped, tag = 'input window, operand 14, single buffered']
    #allocation24 [shape = 'u8[16384]{0}', space=vmem, size = 0x4000, scoped, tag = 'input window, operand 15, single buffered']
    #allocation25 [shape = 'u8[73728]{0}', space=vmem, size = 0x12000, scoped, tag = 'input window, operand 16, single buffered']
    #allocation26 [shape = 'u8[16384]{0}', space=vmem, size = 0x4000, scoped, tag = 'input window, operand 17, single buffered']
    #allocation27 [shape = 'u8[4608]{0}', space=vmem, size = 0x1400, scoped, tag = 'input window, operand 18, single buffered']
    #allocation28 [shape = 'u8[4096]{0}', space=vmem, size = 0x1000, scoped, tag = 'input window, operand 19, single buffered']
    #allocation29 [shape = 's32[1]{0}', space=sflag, size = 0x4, scoped, tag = 'scoped memory for tpu_custom_call.1']
    #allocation30 [shape = 'u8[36864]{0}', space=vmem, size = 0x9000, scoped, tag = 'input window, operand 20, single buffered']
    #allocation31 [shape = 'u8[8192]{0}', space=vmem, size = 0x2000, scoped, tag = 'input window, operand 21, single buffered']
    #allocation32 [shape = 's32[1]{0}', space=sflag, size = 0x4, scoped, tag = 'scoped memory for tpu_custom_call.1']
    #allocation33 [shape = 'u8[16384]{0}', space=vmem, size = 0x4000, scoped, tag = 'output window, operand 0']
    %27 = vsyncpa [#allocation3], 0
    %s28 = scalar_lea.sflag [#allocation3], 1
    %29 = vsyncpa %s28, 0
    %30 = vsyncpa [#allocation6], 0
    %31 = vsyncpa [#allocation9], 0
    %32 = vsyncpa [#allocation12], 0
    %33 = vsyncpa [#allocation18], 0
    %34 = vsyncpa [#allocation21], 0
    %35 = vsyncpa [#allocation29], 0
    %36 = vsyncpa [#allocation32], 0
    %37 = vsyncpa [#allocation4], 0
    %s38 = scalar_lea.sflag [#allocation4], 1
    %39 = vsyncpa %s38, 0
    loop: start=0, step=1, limit=4
    $region2: #{tpu_custom_call.1} parent=1 // loop_pre_header
      _
    $region3: #{tpu_custom_call.1} parent=1 // loop_header
      %s41 = sphi 0, %s45
      %p42 = scmp.ge.s32.totalorder %s41, 4
      %s51 = sphi 0, %s53
      %s54 = sphi 0, %s51
      %s55 = sphi 0, %s54
      %s71 = sphi 0, %s55
      %s75 = sphi 0, %s75
      %s77 = sphi 0, %s75
      %s78 = sphi 0, %s77
      %s92 = sphi 0, %s78
      %s96 = sphi 0, %s96
      %s98 = sphi 0, %s96
      %s99 = sphi 0, %s98
      %s113 = sphi 0, %s99
      %s117 = sphi 0, %s117
      %s119 = sphi 0, %s117
      %s120 = sphi 0, %s119
      %s134 = sphi 0, %s120
      %s138 = sphi 0, %s138
      %s140 = sphi 0, %s138
      %s141 = sphi 0, %s140
      %s155 = sphi 0, %s141
      %s159 = sphi 0, %s159
      %s161 = sphi 0, %s159
      %s162 = sphi 0, %s161
      %s176 = sphi 0, %s162
      %s182 = sphi 0, %s184
      %s185 = sphi 0, %s182
      %s186 = sphi 0, %s185
      %s202 = sphi 0, %s186
      %s206 = sphi 0, %s206
      %s208 = sphi 0, %s206
      %s209 = sphi 0, %s208
      %s223 = sphi 0, %s209
      %s227 = sphi 0, %s227
      %s229 = sphi 0, %s227
      %s230 = sphi 0, %s229
      %s244 = sphi 0, %s230
      %s248 = sphi 0, %s248
      %s250 = sphi 0, %s248
      %s251 = sphi 0, %s250
      %s265 = sphi 0, %s251
      %s269 = sphi 0, %s269
      %s271 = sphi 0, %s269
      %s272 = sphi 0, %s271
      %s286 = sphi 0, %s272
      %s290 = sphi 0, %s290
      %s292 = sphi 0, %s290
      %s293 = sphi 0, %s292
      %s307 = sphi 0, %s293
      %s311 = sphi 0, %s311
      %s313 = sphi 0, %s311
      %s314 = sphi 0, %s313
      %s328 = sphi 0, %s314
      %s334 = sphi 0, %s336
      %s337 = sphi 0, %s334
      %s338 = sphi 0, %s337
      %s354 = sphi 0, %s338
      %s358 = sphi 0, %s358
      %s360 = sphi 0, %s358
      %s361 = sphi 0, %s360
      %s375 = sphi 0, %s361
      %s379 = sphi 0, %s379
      %s381 = sphi 0, %s379
      %s382 = sphi 0, %s381
      %s396 = sphi 0, %s382
      %s400 = sphi 0, %s400
      %s402 = sphi 0, %s400
      %s403 = sphi 0, %s402
      %s417 = sphi 0, %s403
      %s421 = sphi 0, %s421
      %s423 = sphi 0, %s421
      %s424 = sphi 0, %s423
      %s438 = sphi 0, %s424
      %s442 = sphi 0, %s442
      %s444 = sphi 0, %s442
      %s445 = sphi 0, %s444
      %s459 = sphi 0, %s445
      %s463 = sphi 0, %s463
      %s465 = sphi 0, %s463
      %s466 = sphi 0, %s465
      %s480 = sphi 0, %s466
      %s484 = sphi 0, %s484
      %s486 = sphi 0, %s484
      %s487 = sphi 0, %s486
      %s501 = sphi 0, %s487
      %s505 = sphi 0, %s505
      %s507 = sphi 0, %s505
      %s508 = sphi 0, %s507
      %s522 = sphi 0, %s508
      %s528 = sphi 0, %s530
      %s531 = sphi 0, %s528
      %s532 = sphi 0, %s531
      %s548 = sphi 0, %s532
    $region4: #{tpu_custom_call.1} parent=1 // loop_header_branch
      %44 = sbr.rel (%p42) target = $region8
    $region5: #{tpu_custom_call.1} parent=1 // loop_body
      %s46 = ssub.s32 %s41, 1
      %s47 = ssub.s32 %s41, 2
      %s48 = sadd.s32 %s41, 1
      %s49 = ssub.s32 %s41, %s48
      %p50 = scmp.eq.s32.totalorder %s49, 0
      %s52 = sadd.s32 %s51, 1
      %s53 = scalar_select %p50, %s51, %s52
      %p56 = pneg %p50
      %p57 = scmp.eq.s32.totalorder %s41, 1
      %p58 = por %p56, %p57
      %p59 = scmp.ne.s32.totalorder %s51, %s54
      %p60 = scmp.eq.s32.totalorder %s41, 0
      %p61 = por %p59, %p60
      %p62 = scmp.ne.s32.totalorder %s51, %s54
      %p63 = scmp.eq.s32.totalorder %s46, 1
      %p64 = por %p62, %p63
      %p65 = scmp.ne.s32.totalorder %s54, %s55
      %p66 = scmp.eq.s32.totalorder %s46, 0
      %p67 = por %p65, %p66
      %p68 = scmp.ne.s32.totalorder %s54, %s55
      %p69 = scmp.eq.s32.totalorder %s47, 1
      %p70 = por %p68, %p69
      %p72 = scmp.ne.s32.totalorder %s55, %s71
      %p73 = scmp.eq.s32.totalorder %s47, 0
      %p74 = por %p72, %p73
      %s76 = sadd.s32 %s75, 1
      %p79 = scmp.eq.s32.totalorder %s41, 1
      %p80 = scmp.ne.s32.totalorder %s75, %s77
      %p81 = scmp.eq.s32.totalorder %s41, 0
      %p82 = por %p80, %p81
      %p83 = scmp.ne.s32.totalorder %s75, %s77
      %p84 = scmp.eq.s32.totalorder %s46, 1
      %p85 = por %p83, %p84
      %p86 = scmp.ne.s32.totalorder %s77, %s78
      %p87 = scmp.eq.s32.totalorder %s46, 0
      %p88 = por %p86, %p87
      %p89 = scmp.ne.s32.totalorder %s77, %s78
      %p90 = scmp.eq.s32.totalorder %s47, 1
      %p91 = por %p89, %p90
      %p93 = scmp.ne.s32.totalorder %s78, %s92
      %p94 = scmp.eq.s32.totalorder %s47, 0
      %p95 = por %p93, %p94
      %s97 = sadd.s32 %s96, 1
      %p100 = scmp.eq.s32.totalorder %s41, 1
      %p101 = scmp.ne.s32.totalorder %s96, %s98
      %p102 = scmp.eq.s32.totalorder %s41, 0
      %p103 = por %p101, %p102
      %p104 = scmp.ne.s32.totalorder %s96, %s98
      %p105 = scmp.eq.s32.totalorder %s46, 1
      %p106 = por %p104, %p105
      %p107 = scmp.ne.s32.totalorder %s98, %s99
      %p108 = scmp.eq.s32.totalorder %s46, 0
      %p109 = por %p107, %p108
      %p110 = scmp.ne.s32.totalorder %s98, %s99
      %p111 = scmp.eq.s32.totalorder %s47, 1
      %p112 = por %p110, %p111
      %p114 = scmp.ne.s32.totalorder %s99, %s113
      %p115 = scmp.eq.s32.totalorder %s47, 0
      %p116 = por %p114, %p115
      %s118 = sadd.s32 %s117, 1
      %p121 = scmp.eq.s32.totalorder %s41, 1
      %p122 = scmp.ne.s32.totalorder %s117, %s119
      %p123 = scmp.eq.s32.totalorder %s41, 0
      %p124 = por %p122, %p123
      %p125 = scmp.ne.s32.totalorder %s117, %s119
      %p126 = scmp.eq.s32.totalorder %s46, 1
      %p127 = por %p125, %p126
      %p128 = scmp.ne.s32.totalorder %s119, %s120
      %p129 = scmp.eq.s32.totalorder %s46, 0
      %p130 = por %p128, %p129
      %p131 = scmp.ne.s32.totalorder %s119, %s120
      %p132 = scmp.eq.s32.totalorder %s47, 1
      %p133 = por %p131, %p132
      %p135 = scmp.ne.s32.totalorder %s120, %s134
      %p136 = scmp.eq.s32.totalorder %s47, 0
      %p137 = por %p135, %p136
      %s139 = sadd.s32 %s138, 1
      %p142 = scmp.eq.s32.totalorder %s41, 1
      %p143 = scmp.ne.s32.totalorder %s138, %s140
      %p144 = scmp.eq.s32.totalorder %s41, 0
      %p145 = por %p143, %p144
      %p146 = scmp.ne.s32.totalorder %s138, %s140
      %p147 = scmp.eq.s32.totalorder %s46, 1
      %p148 = por %p146, %p147
      %p149 = scmp.ne.s32.totalorder %s140, %s141
      %p150 = scmp.eq.s32.totalorder %s46, 0
      %p151 = por %p149, %p150
      %p152 = scmp.ne.s32.totalorder %s140, %s141
      %p153 = scmp.eq.s32.totalorder %s47, 1
      %p154 = por %p152, %p153
      %p156 = scmp.ne.s32.totalorder %s141, %s155
      %p157 = scmp.eq.s32.totalorder %s47, 0
      %p158 = por %p156, %p157
      %s160 = sadd.s32 %s159, 1
      %p163 = scmp.eq.s32.totalorder %s41, 1
      %p164 = scmp.ne.s32.totalorder %s159, %s161
      %p165 = scmp.eq.s32.totalorder %s41, 0
      %p166 = por %p164, %p165
      %p167 = scmp.ne.s32.totalorder %s159, %s161
      %p168 = scmp.eq.s32.totalorder %s46, 1
      %p169 = por %p167, %p168
      %p170 = scmp.ne.s32.totalorder %s161, %s162
      %p171 = scmp.eq.s32.totalorder %s46, 0
      %p172 = por %p170, %p171
      %p173 = scmp.ne.s32.totalorder %s161, %s162
      %p174 = scmp.eq.s32.totalorder %s47, 1
      %p175 = por %p173, %p174
      %p177 = scmp.ne.s32.totalorder %s162, %s176
      %p178 = scmp.eq.s32.totalorder %s47, 0
      %p179 = por %p177, %p178
      %s180 = ssub.s32 %s41, %s48
      %p181 = scmp.eq.s32.totalorder %s180, 0
      %s183 = sadd.s32 %s182, 1
      %s184 = scalar_select %p181, %s182, %s183
      %p187 = pneg %p181
      %p188 = scmp.eq.s32.totalorder %s41, 1
      %p189 = por %p187, %p188
      %p190 = scmp.ne.s32.totalorder %s182, %s185
      %p191 = scmp.eq.s32.totalorder %s41, 0
      %p192 = por %p190, %p191
      %p193 = scmp.ne.s32.totalorder %s182, %s185
      %p194 = scmp.eq.s32.totalorder %s46, 1
      %p195 = por %p193, %p194
      %p196 = scmp.ne.s32.totalorder %s185, %s186
      %p197 = scmp.eq.s32.totalorder %s46, 0
      %p198 = por %p196, %p197
      %p199 = scmp.ne.s32.totalorder %s185, %s186
      %p200 = scmp.eq.s32.totalorder %s47, 1
      %p201 = por %p199, %p200
      %p203 = scmp.ne.s32.totalorder %s186, %s202
      %p204 = scmp.eq.s32.totalorder %s47, 0
      %p205 = por %p203, %p204
      %s207 = sadd.s32 %s206, 1
      %p210 = scmp.eq.s32.totalorder %s41, 1
      %p211 = scmp.ne.s32.totalorder %s206, %s208
      %p212 = scmp.eq.s32.totalorder %s41, 0
      %p213 = por %p211, %p212
      %p214 = scmp.ne.s32.totalorder %s206, %s208
      %p215 = scmp.eq.s32.totalorder %s46, 1
      %p216 = por %p214, %p215
      %p217 = scmp.ne.s32.totalorder %s208, %s209
      %p218 = scmp.eq.s32.totalorder %s46, 0
      %p219 = por %p217, %p218
      %p220 = scmp.ne.s32.totalorder %s208, %s209
      %p221 = scmp.eq.s32.totalorder %s47, 1
      %p222 = por %p220, %p221
      %p224 = scmp.ne.s32.totalorder %s209, %s223
      %p225 = scmp.eq.s32.totalorder %s47, 0
      %p226 = por %p224, %p225
      %s228 = sadd.s32 %s227, 1
      %p231 = scmp.eq.s32.totalorder %s41, 1
      %p232 = scmp.ne.s32.totalorder %s227, %s229
      %p233 = scmp.eq.s32.totalorder %s41, 0
      %p234 = por %p232, %p233
      %p235 = scmp.ne.s32.totalorder %s227, %s229
      %p236 = scmp.eq.s32.totalorder %s46, 1
      %p237 = por %p235, %p236
      %p238 = scmp.ne.s32.totalorder %s229, %s230
      %p239 = scmp.eq.s32.totalorder %s46, 0
      %p240 = por %p238, %p239
      %p241 = scmp.ne.s32.totalorder %s229, %s230
      %p242 = scmp.eq.s32.totalorder %s47, 1
      %p243 = por %p241, %p242
      %p245 = scmp.ne.s32.totalorder %s230, %s244
      %p246 = scmp.eq.s32.totalorder %s47, 0
      %p247 = por %p245, %p246
      %s249 = sadd.s32 %s248, 1
      %p252 = scmp.eq.s32.totalorder %s41, 1
      %p253 = scmp.ne.s32.totalorder %s248, %s250
      %p254 = scmp.eq.s32.totalorder %s41, 0
      %p255 = por %p253, %p254
      %p256 = scmp.ne.s32.totalorder %s248, %s250
      %p257 = scmp.eq.s32.totalorder %s46, 1
      %p258 = por %p256, %p257
      %p259 = scmp.ne.s32.totalorder %s250, %s251
      %p260 = scmp.eq.s32.totalorder %s46, 0
      %p261 = por %p259, %p260
      %p262 = scmp.ne.s32.totalorder %s250, %s251
      %p263 = scmp.eq.s32.totalorder %s47, 1
      %p264 = por %p262, %p263
      %p266 = scmp.ne.s32.totalorder %s251, %s265
      %p267 = scmp.eq.s32.totalorder %s47, 0
      %p268 = por %p266, %p267
      %s270 = sadd.s32 %s269, 1
      %p273 = scmp.eq.s32.totalorder %s41, 1
      %p274 = scmp.ne.s32.totalorder %s269, %s271
      %p275 = scmp.eq.s32.totalorder %s41, 0
      %p276 = por %p274, %p275
      %p277 = scmp.ne.s32.totalorder %s269, %s271
      %p278 = scmp.eq.s32.totalorder %s46, 1
      %p279 = por %p277, %p278
      %p280 = scmp.ne.s32.totalorder %s271, %s272
      %p281 = scmp.eq.s32.totalorder %s46, 0
      %p282 = por %p280, %p281
      %p283 = scmp.ne.s32.totalorder %s271, %s272
      %p284 = scmp.eq.s32.totalorder %s47, 1
      %p285 = por %p283, %p284
      %p287 = scmp.ne.s32.totalorder %s272, %s286
      %p288 = scmp.eq.s32.totalorder %s47, 0
      %p289 = por %p287, %p288
      %s291 = sadd.s32 %s290, 1
      %p294 = scmp.eq.s32.totalorder %s41, 1
      %p295 = scmp.ne.s32.totalorder %s290, %s292
      %p296 = scmp.eq.s32.totalorder %s41, 0
      %p297 = por %p295, %p296
      %p298 = scmp.ne.s32.totalorder %s290, %s292
      %p299 = scmp.eq.s32.totalorder %s46, 1
      %p300 = por %p298, %p299
      %p301 = scmp.ne.s32.totalorder %s292, %s293
      %p302 = scmp.eq.s32.totalorder %s46, 0
      %p303 = por %p301, %p302
      %p304 = scmp.ne.s32.totalorder %s292, %s293
      %p305 = scmp.eq.s32.totalorder %s47, 1
      %p306 = por %p304, %p305
      %p308 = scmp.ne.s32.totalorder %s293, %s307
      %p309 = scmp.eq.s32.totalorder %s47, 0
      %p310 = por %p308, %p309
      %s312 = sadd.s32 %s311, 1
      %p315 = scmp.eq.s32.totalorder %s41, 1
      %p316 = scmp.ne.s32.totalorder %s311, %s313
      %p317 = scmp.eq.s32.totalorder %s41, 0
      %p318 = por %p316, %p317
      %p319 = scmp.ne.s32.totalorder %s311, %s313
      %p320 = scmp.eq.s32.totalorder %s46, 1
      %p321 = por %p319, %p320
      %p322 = scmp.ne.s32.totalorder %s313, %s314
      %p323 = scmp.eq.s32.totalorder %s46, 0
      %p324 = por %p322, %p323
      %p325 = scmp.ne.s32.totalorder %s313, %s314
      %p326 = scmp.eq.s32.totalorder %s47, 1
      %p327 = por %p325, %p326
      %p329 = scmp.ne.s32.totalorder %s314, %s328
      %p330 = scmp.eq.s32.totalorder %s47, 0
      %p331 = por %p329, %p330
      %s332 = ssub.s32 %s41, %s48
      %p333 = scmp.eq.s32.totalorder %s332, 0
      %s335 = sadd.s32 %s334, 1
      %s336 = scalar_select %p333, %s334, %s335
      %p339 = pneg %p333
      %p340 = scmp.eq.s32.totalorder %s41, 1
      %p341 = por %p339, %p340
      %p342 = scmp.ne.s32.totalorder %s334, %s337
      %p343 = scmp.eq.s32.totalorder %s41, 0
      %p344 = por %p342, %p343
      %p345 = scmp.ne.s32.totalorder %s334, %s337
      %p346 = scmp.eq.s32.totalorder %s46, 1
      %p347 = por %p345, %p346
      %p348 = scmp.ne.s32.totalorder %s337, %s338
      %p349 = scmp.eq.s32.totalorder %s46, 0
      %p350 = por %p348, %p349
      %p351 = scmp.ne.s32.totalorder %s337, %s338
      %p352 = scmp.eq.s32.totalorder %s47, 1
      %p353 = por %p351, %p352
      %p355 = scmp.ne.s32.totalorder %s338, %s354
      %p356 = scmp.eq.s32.totalorder %s47, 0
      %p357 = por %p355, %p356
      %s359 = sadd.s32 %s358, 1
      %p362 = scmp.eq.s32.totalorder %s41, 1
      %p363 = scmp.ne.s32.totalorder %s358, %s360
      %p364 = scmp.eq.s32.totalorder %s41, 0
      %p365 = por %p363, %p364
      %p366 = scmp.ne.s32.totalorder %s358, %s360
      %p367 = scmp.eq.s32.totalorder %s46, 1
      %p368 = por %p366, %p367
      %p369 = scmp.ne.s32.totalorder %s360, %s361
      %p370 = scmp.eq.s32.totalorder %s46, 0
      %p371 = por %p369, %p370
      %p372 = scmp.ne.s32.totalorder %s360, %s361
      %p373 = scmp.eq.s32.totalorder %s47, 1
      %p374 = por %p372, %p373
      %p376 = scmp.ne.s32.totalorder %s361, %s375
      %p377 = scmp.eq.s32.totalorder %s47, 0
      %p378 = por %p376, %p377
      %s380 = sadd.s32 %s379, 1
      %p383 = scmp.eq.s32.totalorder %s41, 1
      %p384 = scmp.ne.s32.totalorder %s379, %s381
      %p385 = scmp.eq.s32.totalorder %s41, 0
      %p386 = por %p384, %p385
      %p387 = scmp.ne.s32.totalorder %s379, %s381
      %p388 = scmp.eq.s32.totalorder %s46, 1
      %p389 = por %p387, %p388
      %p390 = scmp.ne.s32.totalorder %s381, %s382
      %p391 = scmp.eq.s32.totalorder %s46, 0
      %p392 = por %p390, %p391
      %p393 = scmp.ne.s32.totalorder %s381, %s382
      %p394 = scmp.eq.s32.totalorder %s47, 1
      %p395 = por %p393, %p394
      %p397 = scmp.ne.s32.totalorder %s382, %s396
      %p398 = scmp.eq.s32.totalorder %s47, 0
      %p399 = por %p397, %p398
      %s401 = sadd.s32 %s400, 1
      %p404 = scmp.eq.s32.totalorder %s41, 1
      %p405 = scmp.ne.s32.totalorder %s400, %s402
      %p406 = scmp.eq.s32.totalorder %s41, 0
      %p407 = por %p405, %p406
      %p408 = scmp.ne.s32.totalorder %s400, %s402
      %p409 = scmp.eq.s32.totalorder %s46, 1
      %p410 = por %p408, %p409
      %p411 = scmp.ne.s32.totalorder %s402, %s403
      %p412 = scmp.eq.s32.totalorder %s46, 0
      %p413 = por %p411, %p412
      %p414 = scmp.ne.s32.totalorder %s402, %s403
      %p415 = scmp.eq.s32.totalorder %s47, 1
      %p416 = por %p414, %p415
      %p418 = scmp.ne.s32.totalorder %s403, %s417
      %p419 = scmp.eq.s32.totalorder %s47, 0
      %p420 = por %p418, %p419
      %s422 = sadd.s32 %s421, 1
      %p425 = scmp.eq.s32.totalorder %s41, 1
      %p426 = scmp.ne.s32.totalorder %s421, %s423
      %p427 = scmp.eq.s32.totalorder %s41, 0
      %p428 = por %p426, %p427
      %p429 = scmp.ne.s32.totalorder %s421, %s423
      %p430 = scmp.eq.s32.totalorder %s46, 1
      %p431 = por %p429, %p430
      %p432 = scmp.ne.s32.totalorder %s423, %s424
      %p433 = scmp.eq.s32.totalorder %s46, 0
      %p434 = por %p432, %p433
      %p435 = scmp.ne.s32.totalorder %s423, %s424
      %p436 = scmp.eq.s32.totalorder %s47, 1
      %p437 = por %p435, %p436
      %p439 = scmp.ne.s32.totalorder %s424, %s438
      %p440 = scmp.eq.s32.totalorder %s47, 0
      %p441 = por %p439, %p440
      %s443 = sadd.s32 %s442, 1
      %p446 = scmp.eq.s32.totalorder %s41, 1
      %p447 = scmp.ne.s32.totalorder %s442, %s444
      %p448 = scmp.eq.s32.totalorder %s41, 0
      %p449 = por %p447, %p448
      %p450 = scmp.ne.s32.totalorder %s442, %s444
      %p451 = scmp.eq.s32.totalorder %s46, 1
      %p452 = por %p450, %p451
      %p453 = scmp.ne.s32.totalorder %s444, %s445
      %p454 = scmp.eq.s32.totalorder %s46, 0
      %p455 = por %p453, %p454
      %p456 = scmp.ne.s32.totalorder %s444, %s445
      %p457 = scmp.eq.s32.totalorder %s47, 1
      %p458 = por %p456, %p457
      %p460 = scmp.ne.s32.totalorder %s445, %s459
      %p461 = scmp.eq.s32.totalorder %s47, 0
      %p462 = por %p460, %p461
      %s464 = sadd.s32 %s463, 1
      %p467 = scmp.eq.s32.totalorder %s41, 1
      %p468 = scmp.ne.s32.totalorder %s463, %s465
      %p469 = scmp.eq.s32.totalorder %s41, 0
      %p470 = por %p468, %p469
      %p471 = scmp.ne.s32.totalorder %s463, %s465
      %p472 = scmp.eq.s32.totalorder %s46, 1
      %p473 = por %p471, %p472
      %p474 = scmp.ne.s32.totalorder %s465, %s466
      %p475 = scmp.eq.s32.totalorder %s46, 0
      %p476 = por %p474, %p475
      %p477 = scmp.ne.s32.totalorder %s465, %s466
      %p478 = scmp.eq.s32.totalorder %s47, 1
      %p479 = por %p477, %p478
      %p481 = scmp.ne.s32.totalorder %s466, %s480
      %p482 = scmp.eq.s32.totalorder %s47, 0
      %p483 = por %p481, %p482
      %s485 = sadd.s32 %s484, 1
      %p488 = scmp.eq.s32.totalorder %s41, 1
      %p489 = scmp.ne.s32.totalorder %s484, %s486
      %p490 = scmp.eq.s32.totalorder %s41, 0
      %p491 = por %p489, %p490
      %p492 = scmp.ne.s32.totalorder %s484, %s486
      %p493 = scmp.eq.s32.totalorder %s46, 1
      %p494 = por %p492, %p493
      %p495 = scmp.ne.s32.totalorder %s486, %s487
      %p496 = scmp.eq.s32.totalorder %s46, 0
      %p497 = por %p495, %p496
      %p498 = scmp.ne.s32.totalorder %s486, %s487
      %p499 = scmp.eq.s32.totalorder %s47, 1
      %p500 = por %p498, %p499
      %p502 = scmp.ne.s32.totalorder %s487, %s501
      %p503 = scmp.eq.s32.totalorder %s47, 0
      %p504 = por %p502, %p503
      %s506 = sadd.s32 %s505, 1
      %p509 = scmp.eq.s32.totalorder %s41, 1
      %p510 = scmp.ne.s32.totalorder %s505, %s507
      %p511 = scmp.eq.s32.totalorder %s41, 0
      %p512 = por %p510, %p511
      %p513 = scmp.ne.s32.totalorder %s505, %s507
      %p514 = scmp.eq.s32.totalorder %s46, 1
      %p515 = por %p513, %p514
      %p516 = scmp.ne.s32.totalorder %s507, %s508
      %p517 = scmp.eq.s32.totalorder %s46, 0
      %p518 = por %p516, %p517
      %p519 = scmp.ne.s32.totalorder %s507, %s508
      %p520 = scmp.eq.s32.totalorder %s47, 1
      %p521 = por %p519, %p520
      %p523 = scmp.ne.s32.totalorder %s508, %s522
      %p524 = scmp.eq.s32.totalorder %s47, 0
      %p525 = por %p523, %p524
      %s526 = ssub.s32 %s41, %s48
      %p527 = scmp.eq.s32.totalorder %s526, 0
      %s529 = sadd.s32 %s528, 1
      %s530 = scalar_select %p527, %s528, %s529
      %p533 = pneg %p527
      %p534 = scmp.eq.s32.totalorder %s41, 1
      %p535 = por %p533, %p534
      %p536 = scmp.ne.s32.totalorder %s528, %s531
      %p537 = scmp.eq.s32.totalorder %s41, 0
      %p538 = por %p536, %p537
      %p539 = scmp.ne.s32.totalorder %s528, %s531
      %p540 = scmp.eq.s32.totalorder %s46, 1
      %p541 = por %p539, %p540
      %p542 = scmp.ne.s32.totalorder %s531, %s532
      %p543 = scmp.eq.s32.totalorder %s46, 0
      %p544 = por %p542, %p543
      %p545 = scmp.ne.s32.totalorder %s531, %s532
      %p546 = scmp.eq.s32.totalorder %s47, 1
      %p547 = por %p545, %p546
      %p549 = scmp.ne.s32.totalorder %s532, %s548
      %p550 = scmp.eq.s32.totalorder %s47, 0
      %p551 = por %p549, %p550
      %p552 = scmp.le.s32.totalorder 1, %s41
      %p553 = scmp.lt.s32.totalorder %s41, 3
      %p554 = pnand %p552, %p553
      %p555 = pneg %p554
      // Predicated region
      $region9: #{tpu_custom_call.1} parent=5 // pred_check
        _
      $region10: #{tpu_custom_call.1} parent=5 // pred_check_branch
        %557 = sbr.rel (%p554) target = $region12
      $region11: #{tpu_custom_call.1} parent=5 // pred_region
        %s558 = ssub.s32 %s41, 1
        // Predicated region
        $region13: #{tpu_custom_call.1} parent=11 // pred_check
          %p559 = pneg %p88
        $region14: #{tpu_custom_call.1} parent=11 // pred_check_branch
          %561 = sbr.rel (%p559) target = $region16
        $region15: #{tpu_custom_call.1} parent=11 // pred_region
          %s563 = ssub.s32 256, 256
          %564 = vsyncadd [#allocation6], %s563
          %s565 = sshll.u32 [#allocation5], 4
          %s566 = int_to_ptr.vmem [resolvable:$true] %s565
          %571 = dma.hbm_to_vmem [thread:$0]  %s1, 256, %s566, [#allocation6], 64, 64, 4
        $region16: #{tpu_custom_call.1} parent=11 // pred_fallthru
          _
        // Predicated region
        $region17: #{tpu_custom_call.1} parent=11 // pred_check
          %p572 = pneg %p109
        $region18: #{tpu_custom_call.1} parent=11 // pred_check_branch
          %574 = sbr.rel (%p572) target = $region20
        $region19: #{tpu_custom_call.1} parent=11 // pred_region
          %s576 = ssub.s32 512, 512
          %577 = vsyncadd [#allocation6], %s576
          %s578 = sshll.u32 [#allocation7], 4
          %s579 = int_to_ptr.vmem [resolvable:$true] %s578
          %584 = dma.hbm_to_vmem [thread:$0]  %s2, 512, %s579, [#allocation6], 128, 128, 8
        $region20: #{tpu_custom_call.1} parent=11 // pred_fallthru
          _
        // Predicated region
        $region21: #{tpu_custom_call.1} parent=11 // pred_check
          %p585 = pneg %p130
        $region22: #{tpu_custom_call.1} parent=11 // pred_check_branch
          %587 = sbr.rel (%p585) target = $region24
        $region23: #{tpu_custom_call.1} parent=11 // pred_region
          %s589 = ssub.s32 2304, 2304
          %590 = vsyncadd [#allocation9], %s589
          %s591 = sshll.u32 [#allocation8], 4
          %s592 = int_to_ptr.vmem [resolvable:$true] %s591
          %597 = dma.hbm_to_vmem [thread:$0]  %s3, 2304, %s592, [#allocation9], 64, 64, 4
        $region24: #{tpu_custom_call.1} parent=11 // pred_fallthru
          _
        // Predicated region
        $region25: #{tpu_custom_call.1} parent=11 // pred_check
          %p598 = pneg %p151
        $region26: #{tpu_custom_call.1} parent=11 // pred_check_branch
          %600 = sbr.rel (%p598) target = $region28
        $region27: #{tpu_custom_call.1} parent=11 // pred_region
          %s602 = ssub.s32 512, 512
          %603 = vsyncadd [#allocation9], %s602
          %s604 = sshll.u32 [#allocation10], 4
          %s605 = int_to_ptr.vmem [resolvable:$true] %s604
          %610 = dma.hbm_to_vmem [thread:$0]  %s4, 512, %s605, [#allocation9], 128, 128, 8
        $region28: #{tpu_custom_call.1} parent=11 // pred_fallthru
          _
        // Predicated region
        $region29: #{tpu_custom_call.1} parent=11 // pred_check
          %p611 = pneg %p172
        $region30: #{tpu_custom_call.1} parent=11 // pred_check_branch
          %613 = sbr.rel (%p611) target = $region32
        $region31: #{tpu_custom_call.1} parent=11 // pred_region
          %s615 = ssub.s32 144, 144
          %616 = vsyncadd [#allocation12], %s615
          %s617 = sshll.u32 [#allocation11], 4
          %s618 = int_to_ptr.vmem [resolvable:$true] %s617
          %623 = dma.hbm_to_vmem [thread:$0]  %s5, 144, %s618, [#allocation12], 16, 16, 1
        $region32: #{tpu_custom_call.1} parent=11 // pred_fallthru
          _
        // Predicated region
        $region33: #{tpu_custom_call.1} parent=11 // pred_check
          %p624 = pneg %p219
        $region34: #{tpu_custom_call.1} parent=11 // pred_check_branch
          %626 = sbr.rel (%p624) target = $region36
        $region35: #{tpu_custom_call.1} parent=11 // pred_region
          %s628 = ssub.s32 256, 256
          %629 = vsyncadd [#allocation6], %s628
          %s630 = sshll.u32 [#allocation14], 4
          %s631 = int_to_ptr.vmem [resolvable:$true] %s630
          %636 = dma.hbm_to_vmem [thread:$0]  %s7, 256, %s631, [#allocation6], 64, 64, 4
        $region36: #{tpu_custom_call.1} parent=11 // pred_fallthru
          _
        // Predicated region
        $region37: #{tpu_custom_call.1} parent=11 // pred_check
          %p637 = pneg %p240
        $region38: #{tpu_custom_call.1} parent=11 // pred_check_branch
          %639 = sbr.rel (%p637) target = $region40
        $region39: #{tpu_custom_call.1} parent=11 // pred_region
          %s641 = ssub.s32 512, 512
          %642 = vsyncadd [#allocation9], %s641
          %s643 = sshll.u32 [#allocation15], 4
          %s644 = int_to_ptr.vmem [resolvable:$true] %s643
          %649 = dma.hbm_to_vmem [thread:$0]  %s8, 512, %s644, [#allocation9], 128, 128, 8
        $region40: #{tpu_custom_call.1} parent=11 // pred_fallthru
          _
        // Predicated region
        $region41: #{tpu_custom_call.1} parent=11 // pred_check
          %p650 = pneg %p261
        $region42: #{tpu_custom_call.1} parent=11 // pred_check_branch
          %652 = sbr.rel (%p650) target = $region44
        $region43: #{tpu_custom_call.1} parent=11 // pred_region
          %s654 = ssub.s32 2304, 2304
          %655 = vsyncadd [#allocation12], %s654
          %s656 = sshll.u32 [#allocation16], 4
          %s657 = int_to_ptr.vmem [resolvable:$true] %s656
          %662 = dma.hbm_to_vmem [thread:$0]  %s9, 2304, %s657, [#allocation12], 64, 64, 4
        $region44: #{tpu_custom_call.1} parent=11 // pred_fallthru
          _
        // Predicated region
        $region45: #{tpu_custom_call.1} parent=11 // pred_check
          %p663 = pneg %p282
        $region46: #{tpu_custom_call.1} parent=11 // pred_check_branch
          %665 = sbr.rel (%p663) target = $region48
        $region47: #{tpu_custom_call.1} parent=11 // pred_region
          %s667 = ssub.s32 512, 512
          %668 = vsyncadd [#allocation18], %s667
          %s669 = sshll.u32 [#allocation17], 4
          %s670 = int_to_ptr.vmem [resolvable:$true] %s669
          %675 = dma.hbm_to_vmem [thread:$0]  %s10, 512, %s670, [#allocation18], 128, 128, 8
        $region48: #{tpu_custom_call.1} parent=11 // pred_fallthru
          _
        // Predicated region
        $region49: #{tpu_custom_call.1} parent=11 // pred_check
          %p676 = pneg %p303
        $region50: #{tpu_custom_call.1} parent=11 // pred_check_branch
          %678 = sbr.rel (%p676) target = $region52
        $region51: #{tpu_custom_call.1} parent=11 // pred_region
          %s680 = ssub.s32 144, 144
          %681 = vsyncadd [#allocation18], %s680
          %s682 = sshll.u32 [#allocation19], 4
          %s683 = int_to_ptr.vmem [resolvable:$true] %s682
          %688 = dma.hbm_to_vmem [thread:$0]  %s11, 144, %s683, [#allocation18], 16, 16, 1
        $region52: #{tpu_custom_call.1} parent=11 // pred_fallthru
          _
        // Predicated region
        $region53: #{tpu_custom_call.1} parent=11 // pred_check
          %p689 = pneg %p324
        $region54: #{tpu_custom_call.1} parent=11 // pred_check_branch
          %691 = sbr.rel (%p689) target = $region56
        $region55: #{tpu_custom_call.1} parent=11 // pred_region
          %s693 = ssub.s32 32, 32
          %694 = vsyncadd [#allocation21], %s693
          %s696 = sshll.u32 [#allocation20], 4
          %s697 = int_to_ptr.vmem [resolvable:$true] %s696
          %699 = dma.hbm_to_vmem [thread:$0]  %s12, 32, %s697, [#allocation21]
        $region56: #{tpu_custom_call.1} parent=11 // pred_fallthru
          _
        // Predicated region
        $region57: #{tpu_custom_call.1} parent=11 // pred_check
          %p700 = pneg %p371
        $region58: #{tpu_custom_call.1} parent=11 // pred_check_branch
          %702 = sbr.rel (%p700) target = $region60
        $region59: #{tpu_custom_call.1} parent=11 // pred_region
          %s704 = ssub.s32 256, 256
          %705 = vsyncadd [#allocation6], %s704
          %s706 = sshll.u32 [#allocation23], 4
          %s707 = int_to_ptr.vmem [resolvable:$true] %s706
          %712 = dma.hbm_to_vmem [thread:$0]  %s14, 256, %s707, [#allocation6], 64, 64, 4
        $region60: #{tpu_custom_call.1} parent=11 // pred_fallthru
          _
        // Predicated region
        $region61: #{tpu_custom_call.1} parent=11 // pred_check
          %p713 = pneg %p392
        $region62: #{tpu_custom_call.1} parent=11 // pred_check_branch
          %715 = sbr.rel (%p713) target = $region64
        $region63: #{tpu_custom_call.1} parent=11 // pred_region
          %s717 = ssub.s32 512, 512
          %718 = vsyncadd [#allocation9], %s717
          %s719 = sshll.u32 [#allocation24], 4
          %s720 = int_to_ptr.vmem [resolvable:$true] %s719
          %725 = dma.hbm_to_vmem [thread:$0]  %s15, 512, %s720, [#allocation9], 128, 128, 8
        $region64: #{tpu_custom_call.1} parent=11 // pred_fallthru
          _
        // Predicated region
        $region65: #{tpu_custom_call.1} parent=11 // pred_check
          %p726 = pneg %p413
        $region66: #{tpu_custom_call.1} parent=11 // pred_check_branch
          %728 = sbr.rel (%p726) target = $region68
        $region67: #{tpu_custom_call.1} parent=11 // pred_region
          %s730 = ssub.s32 2304, 2304
          %731 = vsyncadd [#allocation12], %s730
          %s732 = sshll.u32 [#allocation25], 4
          %s733 = int_to_ptr.vmem [resolvable:$true] %s732
          %738 = dma.hbm_to_vmem [thread:$0]  %s16, 2304, %s733, [#allocation12], 64, 64, 4
        $region68: #{tpu_custom_call.1} parent=11 // pred_fallthru
          _
        // Predicated region
        $region69: #{tpu_custom_call.1} parent=11 // pred_check
          %p739 = pneg %p434
        $region70: #{tpu_custom_call.1} parent=11 // pred_check_branch
          %741 = sbr.rel (%p739) target = $region72
        $region71: #{tpu_custom_call.1} parent=11 // pred_region
          %s743 = ssub.s32 512, 512
          %744 = vsyncadd [#allocation18], %s743
          %s745 = sshll.u32 [#allocation26], 4
          %s746 = int_to_ptr.vmem [resolvable:$true] %s745
          %751 = dma.hbm_to_vmem [thread:$0]  %s17, 512, %s746, [#allocation18], 128, 128, 8
        $region72: #{tpu_custom_call.1} parent=11 // pred_fallthru
          _
        // Predicated region
        $region73: #{tpu_custom_call.1} parent=11 // pred_check
          %p752 = pneg %p455
        $region74: #{tpu_custom_call.1} parent=11 // pred_check_branch
          %754 = sbr.rel (%p752) target = $region76
        $region75: #{tpu_custom_call.1} parent=11 // pred_region
          %s756 = ssub.s32 144, 144
          %757 = vsyncadd [#allocation21], %s756
          %s758 = sshll.u32 [#allocation27], 4
          %s759 = int_to_ptr.vmem [resolvable:$true] %s758
          %764 = dma.hbm_to_vmem [thread:$0]  %s18, 144, %s759, [#allocation21], 16, 16, 1
        $region76: #{tpu_custom_call.1} parent=11 // pred_fallthru
          _
        // Predicated region
        $region77: #{tpu_custom_call.1} parent=11 // pred_check
          %p765 = pneg %p476
        $region78: #{tpu_custom_call.1} parent=11 // pred_check_branch
          %767 = sbr.rel (%p765) target = $region80
        $region79: #{tpu_custom_call.1} parent=11 // pred_region
          %s769 = ssub.s32 128, 128
          %770 = vsyncadd [#allocation29], %s769
          %s771 = sshll.u32 [#allocation28], 4
          %s772 = int_to_ptr.vmem [resolvable:$true] %s771
          %777 = dma.hbm_to_vmem [thread:$0]  %s19, 128, %s772, [#allocation29], 64, 64, 4
        $region80: #{tpu_custom_call.1} parent=11 // pred_fallthru
          _
        // Predicated region
        $region81: #{tpu_custom_call.1} parent=11 // pred_check
          %p778 = pneg %p497
        $region82: #{tpu_custom_call.1} parent=11 // pred_check_branch
          %780 = sbr.rel (%p778) target = $region84
        $region83: #{tpu_custom_call.1} parent=11 // pred_region
          %s782 = ssub.s32 1152, 1152
          %783 = vsyncadd [#allocation29], %s782
          %s784 = sshll.u32 [#allocation30], 4
          %s785 = int_to_ptr.vmem [resolvable:$true] %s784
          %790 = dma.hbm_to_vmem [thread:$0]  %s20, 1152, %s785, [#allocation29], 64, 64, 4
        $region84: #{tpu_custom_call.1} parent=11 // pred_fallthru
          _
        // Predicated region
        $region85: #{tpu_custom_call.1} parent=11 // pred_check
          %p791 = pneg %p518
        $region86: #{tpu_custom_call.1} parent=11 // pred_check_branch
          %793 = sbr.rel (%p791) target = $region88
        $region87: #{tpu_custom_call.1} parent=11 // pred_region
          %s795 = ssub.s32 256, 256
          %796 = vsyncadd [#allocation32], %s795
          %s797 = sshll.u32 [#allocation31], 4
          %s798 = int_to_ptr.vmem [resolvable:$true] %s797
          %803 = dma.hbm_to_vmem [thread:$0]  %s21, 256, %s798, [#allocation32], 128, 128, 8
        $region88: #{tpu_custom_call.1} parent=11 // pred_fallthru
          _
      $region12: #{tpu_custom_call.1} parent=5 // pred_fallthru
        _
      %p804 = scmp.lt.s32.totalorder %s41, 2
      // Predicated region
      $region89: #{tpu_custom_call.1} parent=5 // pred_check
        %p805 = pneg %p804
      $region90: #{tpu_custom_call.1} parent=5 // pred_check_branch
        %807 = sbr.rel (%p805) target = $region92
      $region91: #{tpu_custom_call.1} parent=5 // pred_region
        // Predicated region
        $region93: #{tpu_custom_call.1} parent=91 // pred_check
          %p808 = pneg %p61
        $region94: #{tpu_custom_call.1} parent=91 // pred_check_branch
          %810 = sbr.rel (%p808) target = $region96
        $region95: #{tpu_custom_call.1} parent=91 // pred_region
          %s811 = sand.u32 %s41, 1
          %s812 = scalar_lea.sflag [#allocation3], %s811
          %s813 = sand.u32 %s51, 1
          %s814 = smul.addr %s813, 16
          %s815 = scalar_lea.vmem [#allocation2], %s814
          %s817 = ssub.s32 256, 256
          %818 = vsyncadd %s812, %s817
          %s819 = smul.addr %s41, 4
          %s820 = smul.addr %s819, 64
          %s821 = scalar_lea.hbm %s0, %s820
          %s822 = sshll.u32 %s815, 4
          %s823 = int_to_ptr.vmem [resolvable:$true] %s822
          %828 = dma.hbm_to_vmem [thread:$0]  %s821, 256, %s823, %s812, 64, 64, 4
        $region96: #{tpu_custom_call.1} parent=91 // pred_fallthru
          _
        // Predicated region
        $region97: #{tpu_custom_call.1} parent=91 // pred_check
          %p829 = pneg %p192
        $region98: #{tpu_custom_call.1} parent=91 // pred_check_branch
          %831 = sbr.rel (%p829) target = $region100
        $region99: #{tpu_custom_call.1} parent=91 // pred_region
          %s832 = sand.u32 %s41, 1
          %s833 = scalar_lea.sflag [#allocation3], %s832
          %s834 = sand.u32 %s182, 1
          %s835 = smul.addr %s834, 16
          %s836 = scalar_lea.vmem [#allocation13], %s835
          %s838 = ssub.s32 256, 256
          %839 = vsyncadd %s833, %s838
          %s840 = smul.addr %s41, 4
          %s841 = smul.addr %s840, 64
          %s842 = scalar_lea.hbm %s6, %s841
          %s843 = sshll.u32 %s836, 4
          %s844 = int_to_ptr.vmem [resolvable:$true] %s843
          %849 = dma.hbm_to_vmem [thread:$0]  %s842, 256, %s844, %s833, 64, 64, 4
        $region100: #{tpu_custom_call.1} parent=91 // pred_fallthru
          _
        // Predicated region
        $region101: #{tpu_custom_call.1} parent=91 // pred_check
          %p850 = pneg %p344
        $region102: #{tpu_custom_call.1} parent=91 // pred_check_branch
          %852 = sbr.rel (%p850) target = $region104
        $region103: #{tpu_custom_call.1} parent=91 // pred_region
          %s853 = sand.u32 %s41, 1
          %s854 = scalar_lea.sflag [#allocation3], %s853
          %s855 = sand.u32 %s334, 1
          %s856 = smul.addr %s855, 8
          %s857 = scalar_lea.vmem [#allocation22], %s856
          %s859 = ssub.s32 128, 128
          %860 = vsyncadd %s854, %s859
          %s861 = smul.addr %s41, 2
          %s862 = smul.addr %s861, 64
          %s863 = scalar_lea.hbm %s13, %s862
          %s864 = sshll.u32 %s857, 4
          %s865 = int_to_ptr.vmem [resolvable:$true] %s864
          %870 = dma.hbm_to_vmem [thread:$0]  %s863, 128, %s865, %s854, 64, 64, 4
        $region104: #{tpu_custom_call.1} parent=91 // pred_fallthru
          _
      $region92: #{tpu_custom_call.1} parent=5 // pred_fallthru
        _
      %p871 = scmp.le.s32.totalorder 1, %s41
      %p872 = scmp.lt.s32.totalorder %s41, 3
      %p873 = pnand %p871, %p872
      %p874 = pneg %p873
      // Predicated region
      $region105: #{tpu_custom_call.1} parent=5 // pred_check
        _
      $region106: #{tpu_custom_call.1} parent=5 // pred_check_branch
        %876 = sbr.rel (%p873) target = $region108
      $region107: #{tpu_custom_call.1} parent=5 // pred_region
        %s877 = ssub.s32 %s41, 1
        %s878 = sand.u32 %s46, 1
        %s879 = scalar_lea.sflag [#allocation3], %s878
        %s880 = sand.u32 %s54, 1
        %s881 = smul.addr %s880, 16
        %s882 = scalar_lea.vmem [#allocation2], %s881
        // Predicated region
        $region109: #{tpu_custom_call.1} parent=107 // pred_check
          %p883 = pneg %p67
        $region110: #{tpu_custom_call.1} parent=107 // pred_check_branch
          %885 = sbr.rel (%p883) target = $region112
        $region111: #{tpu_custom_call.1} parent=107 // pred_region
          %886 = dma.done %s879, 256
        $region112: #{tpu_custom_call.1} parent=107 // pred_fallthru
          _
        // Predicated region
        $region113: #{tpu_custom_call.1} parent=107 // pred_check
          %p887 = pneg %p88
        $region114: #{tpu_custom_call.1} parent=107 // pred_check_branch
          %889 = sbr.rel (%p887) target = $region116
        $region115: #{tpu_custom_call.1} parent=107 // pred_region
          %890 = dma.done [#allocation6], 256
        $region116: #{tpu_custom_call.1} parent=107 // pred_fallthru
          _
        // Predicated region
        $region117: #{tpu_custom_call.1} parent=107 // pred_check
          %p891 = pneg %p109
        $region118: #{tpu_custom_call.1} parent=107 // pred_check_branch
          %893 = sbr.rel (%p891) target = $region120
        $region119: #{tpu_custom_call.1} parent=107 // pred_region
          %894 = dma.done [#allocation6], 512
        $region120: #{tpu_custom_call.1} parent=107 // pred_fallthru
          _
        // Predicated region
        $region121: #{tpu_custom_call.1} parent=107 // pred_check
          %p895 = pneg %p130
        $region122: #{tpu_custom_call.1} parent=107 // pred_check_branch
          %897 = sbr.rel (%p895) target = $region124
        $region123: #{tpu_custom_call.1} parent=107 // pred_region
          %898 = dma.done [#allocation9], 2304
        $region124: #{tpu_custom_call.1} parent=107 // pred_fallthru
          _
        // Predicated region
        $region125: #{tpu_custom_call.1} parent=107 // pred_check
          %p899 = pneg %p151
        $region126: #{tpu_custom_call.1} parent=107 // pred_check_branch
          %901 = sbr.rel (%p899) target = $region128
        $region127: #{tpu_custom_call.1} parent=107 // pred_region
          %902 = dma.done [#allocation9], 512
        $region128: #{tpu_custom_call.1} parent=107 // pred_fallthru
          _
        // Predicated region
        $region129: #{tpu_custom_call.1} parent=107 // pred_check
          %p903 = pneg %p172
        $region130: #{tpu_custom_call.1} parent=107 // pred_check_branch
          %905 = sbr.rel (%p903) target = $region132
        $region131: #{tpu_custom_call.1} parent=107 // pred_region
          %906 = dma.done [#allocation12], 144
        $region132: #{tpu_custom_call.1} parent=107 // pred_fallthru
          _
        %s907 = sand.u32 %s46, 1
        %s908 = scalar_lea.sflag [#allocation3], %s907
        %s909 = sand.u32 %s185, 1
        %s910 = smul.addr %s909, 16
        %s911 = scalar_lea.vmem [#allocation13], %s910
        // Predicated region
        $region133: #{tpu_custom_call.1} parent=107 // pred_check
          %p912 = pneg %p198
        $region134: #{tpu_custom_call.1} parent=107 // pred_check_branch
          %914 = sbr.rel (%p912) target = $region136
        $region135: #{tpu_custom_call.1} parent=107 // pred_region
          %915 = dma.done %s908, 256
        $region136: #{tpu_custom_call.1} parent=107 // pred_fallthru
          _
        // Predicated region
        $region137: #{tpu_custom_call.1} parent=107 // pred_check
          %p916 = pneg %p219
        $region138: #{tpu_custom_call.1} parent=107 // pred_check_branch
          %918 = sbr.rel (%p916) target = $region140
        $region139: #{tpu_custom_call.1} parent=107 // pred_region
          %919 = dma.done [#allocation6], 256
        $region140: #{tpu_custom_call.1} parent=107 // pred_fallthru
          _
        // Predicated region
        $region141: #{tpu_custom_call.1} parent=107 // pred_check
          %p920 = pneg %p240
        $region142: #{tpu_custom_call.1} parent=107 // pred_check_branch
          %922 = sbr.rel (%p920) target = $region144
        $region143: #{tpu_custom_call.1} parent=107 // pred_region
          %923 = dma.done [#allocation9], 512
        $region144: #{tpu_custom_call.1} parent=107 // pred_fallthru
          _
        // Predicated region
        $region145: #{tpu_custom_call.1} parent=107 // pred_check
          %p924 = pneg %p261
        $region146: #{tpu_custom_call.1} parent=107 // pred_check_branch
          %926 = sbr.rel (%p924) target = $region148
        $region147: #{tpu_custom_call.1} parent=107 // pred_region
          %927 = dma.done [#allocation12], 2304
        $region148: #{tpu_custom_call.1} parent=107 // pred_fallthru
          _
        // Predicated region
        $region149: #{tpu_custom_call.1} parent=107 // pred_check
          %p928 = pneg %p282
        $region150: #{tpu_custom_call.1} parent=107 // pred_check_branch
          %930 = sbr.rel (%p928) target = $region152
        $region151: #{tpu_custom_call.1} parent=107 // pred_region
          %931 = dma.done [#allocation18], 512
        $region152: #{tpu_custom_call.1} parent=107 // pred_fallthru
          _
        // Predicated region
        $region153: #{tpu_custom_call.1} parent=107 // pred_check
          %p932 = pneg %p303
        $region154: #{tpu_custom_call.1} parent=107 // pred_check_branch
          %934 = sbr.rel (%p932) target = $region156
        $region155: #{tpu_custom_call.1} parent=107 // pred_region
          %935 = dma.done [#allocation18], 144
        $region156: #{tpu_custom_call.1} parent=107 // pred_fallthru
          _
        // Predicated region
        $region157: #{tpu_custom_call.1} parent=107 // pred_check
          %p936 = pneg %p324
        $region158: #{tpu_custom_call.1} parent=107 // pred_check_branch
          %938 = sbr.rel (%p936) target = $region160
        $region159: #{tpu_custom_call.1} parent=107 // pred_region
          %939 = dma.done [#allocation21], 32
        $region160: #{tpu_custom_call.1} parent=107 // pred_fallthru
          _
        %s940 = sand.u32 %s46, 1
        %s941 = scalar_lea.sflag [#allocation3], %s940
        %s942 = sand.u32 %s337, 1
        %s943 = smul.addr %s942, 8
        %s944 = scalar_lea.vmem [#allocation22], %s943
        // Predicated region
        $region161: #{tpu_custom_call.1} parent=107 // pred_check
          %p945 = pneg %p350
        $region162: #{tpu_custom_call.1} parent=107 // pred_check_branch
          %947 = sbr.rel (%p945) target = $region164
        $region163: #{tpu_custom_call.1} parent=107 // pred_region
          %948 = dma.done %s941, 128
        $region164: #{tpu_custom_call.1} parent=107 // pred_fallthru
          _
        // Predicated region
        $region165: #{tpu_custom_call.1} parent=107 // pred_check
          %p949 = pneg %p371
        $region166: #{tpu_custom_call.1} parent=107 // pred_check_branch
          %951 = sbr.rel (%p949) target = $region168
        $region167: #{tpu_custom_call.1} parent=107 // pred_region
          %952 = dma.done [#allocation6], 256
        $region168: #{tpu_custom_call.1} parent=107 // pred_fallthru
          _
        // Predicated region
        $region169: #{tpu_custom_call.1} parent=107 // pred_check
          %p953 = pneg %p392
        $region170: #{tpu_custom_call.1} parent=107 // pred_check_branch
          %955 = sbr.rel (%p953) target = $region172
        $region171: #{tpu_custom_call.1} parent=107 // pred_region
          %956 = dma.done [#allocation9], 512
        $region172: #{tpu_custom_call.1} parent=107 // pred_fallthru
          _
        // Predicated region
        $region173: #{tpu_custom_call.1} parent=107 // pred_check
          %p957 = pneg %p413
        $region174: #{tpu_custom_call.1} parent=107 // pred_check_branch
          %959 = sbr.rel (%p957) target = $region176
        $region175: #{tpu_custom_call.1} parent=107 // pred_region
          %960 = dma.done [#allocation12], 2304
        $region176: #{tpu_custom_call.1} parent=107 // pred_fallthru
          _
        // Predicated region
        $region177: #{tpu_custom_call.1} parent=107 // pred_check
          %p961 = pneg %p434
        $region178: #{tpu_custom_call.1} parent=107 // pred_check_branch
          %963 = sbr.rel (%p961) target = $region180
        $region179: #{tpu_custom_call.1} parent=107 // pred_region
          %964 = dma.done [#allocation18], 512
        $region180: #{tpu_custom_call.1} parent=107 // pred_fallthru
          _
        // Predicated region
        $region181: #{tpu_custom_call.1} parent=107 // pred_check
          %p965 = pneg %p455
        $region182: #{tpu_custom_call.1} parent=107 // pred_check_branch
          %967 = sbr.rel (%p965) target = $region184
        $region183: #{tpu_custom_call.1} parent=107 // pred_region
          %968 = dma.done [#allocation21], 144
        $region184: #{tpu_custom_call.1} parent=107 // pred_fallthru
          _
        // Predicated region
        $region185: #{tpu_custom_call.1} parent=107 // pred_check
          %p969 = pneg %p476
        $region186: #{tpu_custom_call.1} parent=107 // pred_check_branch
          %971 = sbr.rel (%p969) target = $region188
        $region187: #{tpu_custom_call.1} parent=107 // pred_region
          %972 = dma.done [#allocation29], 128
        $region188: #{tpu_custom_call.1} parent=107 // pred_fallthru
          _
        // Predicated region
        $region189: #{tpu_custom_call.1} parent=107 // pred_check
          %p973 = pneg %p497
        $region190: #{tpu_custom_call.1} parent=107 // pred_check_branch
          %975 = sbr.rel (%p973) target = $region192
        $region191: #{tpu_custom_call.1} parent=107 // pred_region
          %976 = dma.done [#allocation29], 1152
        $region192: #{tpu_custom_call.1} parent=107 // pred_fallthru
          _
        // Predicated region
        $region193: #{tpu_custom_call.1} parent=107 // pred_check
          %p977 = pneg %p518
        $region194: #{tpu_custom_call.1} parent=107 // pred_check_branch
          %979 = sbr.rel (%p977) target = $region196
        $region195: #{tpu_custom_call.1} parent=107 // pred_region
          %980 = dma.done [#allocation32], 256
        $region196: #{tpu_custom_call.1} parent=107 // pred_fallthru
          _
        %s981 = sand.u32 %s46, 1
        %s982 = scalar_lea.sflag [#allocation3], %s981
        %s983 = sand.u32 %s54, 1
        %s984 = smul.addr %s983, 16
        %s985 = scalar_lea.vmem [#allocation2], %s984
        %p986 = pneg %p67
        %p987 = pneg %p64
        %p988 = pneg %p88
        %p989 = pneg %p85
        %p990 = pneg %p109
        %p991 = pneg %p106
        %p992 = pneg %p130
        %p993 = pneg %p127
        %p994 = pneg %p151
        %p995 = pneg %p148
        %p996 = pneg %p172
        %p997 = pneg %p169
        %s998 = sand.u32 %s46, 1
        %s999 = scalar_lea.sflag [#allocation3], %s998
        %s1000 = sand.u32 %s185, 1
        %s1001 = smul.addr %s1000, 16
        %s1002 = scalar_lea.vmem [#allocation13], %s1001
        %p1003 = pneg %p198
        %p1004 = pneg %p195
        %p1005 = pneg %p219
        %p1006 = pneg %p216
        %p1007 = pneg %p240
        %p1008 = pneg %p237
        %p1009 = pneg %p261
        %p1010 = pneg %p258
        %p1011 = pneg %p282
        %p1012 = pneg %p279
        %p1013 = pneg %p303
        %p1014 = pneg %p300
        %p1015 = pneg %p324
        %p1016 = pneg %p321
        %s1017 = sand.u32 %s46, 1
        %s1018 = scalar_lea.sflag [#allocation3], %s1017
        %s1019 = sand.u32 %s337, 1
        %s1020 = smul.addr %s1019, 8
        %s1021 = scalar_lea.vmem [#allocation22], %s1020
        %p1022 = pneg %p350
        %p1023 = pneg %p347
        %p1024 = pneg %p371
        %p1025 = pneg %p368
        %p1026 = pneg %p392
        %p1027 = pneg %p389
        %p1028 = pneg %p413
        %p1029 = pneg %p410
        %p1030 = pneg %p434
        %p1031 = pneg %p431
        %p1032 = pneg %p455
        %p1033 = pneg %p452
        %p1034 = pneg %p476
        %p1035 = pneg %p473
        %p1036 = pneg %p497
        %p1037 = pneg %p494
        %p1038 = pneg %p518
        %p1039 = pneg %p515
        %p1040 = pneg %p544
        %p1041 = pneg %p541
        %s1042 = sand.u32 %s531, 1
        %s1043 = scalar_lea.sflag [#allocation4], %s1042
        %s1044 = sand.u32 %s531, 1
        %s1045 = smul.addr %s1044, 16
        %s1046 = scalar_lea.vmem [#allocation33], %s1045
        %v1048 = vld [vmem:[%s882] sm:$0xf]
        %v1049 = vld [vmem:[%s882 + $0x4] sm:$0xf]
        %v1050 = vld [vmem:[%s882 + $0x8] sm:$0xf]
        %v1051 = vld [vmem:[%s882 + $0xc] sm:$0xf]
        %v1052 = vld [vmem:[#allocation5] sm:$0xf]
        %v1053 = vld [vmem:[#allocation5 + $0x4] sm:$0xf]
        %v1054 = vld [vmem:[#allocation5 + $0x8] sm:$0xf]
        %v1055 = vld [vmem:[#allocation5 + $0xc] sm:$0xf]
        %v1056 = vld [vmem:[#allocation7] sm:$0xff]
        %v1057 = vld [vmem:[#allocation7 + $0x8] sm:$0xff]
        %v1058 = vld [vmem:[#allocation7 + $0x10] sm:$0xff]
        %v1059 = vld [vmem:[#allocation7 + $0x18] sm:$0xff]
        %1061 = vset.pattern.permute.xlu0 0
        %1062 = vperm.xlu0 %1061, %v1056
        %v1063 = vpop.permute.xlu0 %1062
        %1066 = vset.pattern.permute.xlu0 0
        %1067 = vperm.xlu0 %1066, %v1057
        %v1068 = vpop.permute.xlu0 %1067
        %1071 = vset.pattern.permute.xlu0 0
        %1072 = vperm.xlu0 %1071, %v1058
        %v1073 = vpop.permute.xlu0 %1072
        %1076 = vset.pattern.permute.xlu0 0
        %1077 = vperm.xlu0 %1076, %v1059
        %v1078 = vpop.permute.xlu0 %1077
        %v1084 = vunpack.c.l.b16 %v1052
        %v1085 = vunpack.c.l.b16 %v1053
        %v1086 = vunpack.c.l.b16 %v1054
        %v1087 = vunpack.c.l.b16 %v1055
        %v1088 = vpack.c.b16 %v1085, %v1084
        %v1089 = vpack.c.b16 %v1087, %v1086
        %v1094 = vunpack.c.l.b16 %v1048
        %v1095 = vunpack.c.l.b16 %v1049
        %v1096 = vunpack.c.l.b16 %v1050
        %v1097 = vunpack.c.l.b16 %v1051
        %v1098 = vpack.c.b16 %v1095, %v1094
        %v1099 = vpack.c.b16 %v1097, %v1096
        %vm1102 = vcmask 261120
        %v1104 = vsel %vm1102, %v1088, 0
        %v1107 = vsel %vm1102, %v1089, 0
        %1109 = vmatprep.subr.bf16.mxu0 0
        %1110 = vmatpush1.bf16.msra.mxu0 %v1098
        %1111 = vmatprep.subr.bf16.mxu0 0
        %1112 = vmatpush1.bf16.msra.mxu0 %v1099
        %1113 = vmatprep.subr.bf16.mxu0 0
        %1114 = vmatpush1.bf16.msra.mxu0 0
        %1115 = vmatprep.subr.bf16.mxu0 0
        %1116 = vmatpush1.bf16.msra.mxu0 0
        %1117 = vmatprep.subr.bf16.mxu0 0
        %1118 = vmatpush1.bf16.msra.mxu0 0
        %1119 = vmatprep.subr.bf16.mxu0 0
        %1120 = vmatpush1.bf16.msra.mxu0 0
        %1121 = vmatprep.subr.bf16.mxu0 0
        %1122 = vmatpush1.bf16.msra.mxu0 0
        %1123 = vmatprep.subr.bf16.mxu0 0
        %1124 = vmatpush1.bf16.msra.mxu0 0
        %1125 = vmatprep.subr.bf16.mxu0 0
        %1126 = vmatpush1.bf16.msra.mxu0 0
        %1127 = vmatprep.subr.bf16.mxu0 0
        %1128 = vmatpush1.bf16.msra.mxu0 0
        %1129 = vmatprep.subr.bf16.mxu0 0
        %1130 = vmatpush1.bf16.msra.mxu0 0
        %1131 = vmatprep.subr.bf16.mxu0 0
        %1132 = vmatpush1.bf16.msra.mxu0 0
        %1133 = vmatprep.subr.bf16.mxu0 0
        %1134 = vmatpush1.bf16.msra.mxu0 0
        %1135 = vmatprep.subr.bf16.mxu0 0
        %1136 = vmatpush1.bf16.msra.mxu0 0
        %1137 = vmatprep.subr.bf16.mxu0 0
        %1138 = vmatpush1.bf16.msra.mxu0 0
        %1139 = vmatprep.subr.bf16.mxu0 0
        %1140 = vmatpush1.bf16.msra.mxu0 0
        %1141 = vmatprep.mubr.bf16.mxu0 0
        %1142 = vmatmul.mubr.bf16.gmra.mrb[0].mxu0 %v1104
        %v1143 = vpop.f32.mrb[0].mxu0
        %v1144 = vadd.f32 %v1063, %v1143
        %v1145 = vpop.f32.mrb[0].mxu0
        %v1146 = vpop.f32.mrb[0].mxu0
        %v1147 = vadd.f32 %v1068, %v1146
        %v1148 = vpop.f32.mrb[0].mxu0
        %1149 = vmatprep.mubr.bf16.mxu0 0
        %1150 = vmatmul.mubr.bf16.gmra.mrb[0].mxu0 %v1107
        %v1151 = vpop.f32.mrb[0].mxu0
        %v1152 = vadd.f32 %v1073, %v1151
        %v1153 = vpop.f32.mrb[0].mxu0
        %v1154 = vpop.f32.mrb[0].mxu0
        %v1155 = vadd.f32 %v1078, %v1154
        %v1156 = vpop.f32.mrb[0].mxu0
        %1157 = vdwg.mxu0
        %v1158 = vpack.c.bf16 %v1147, %v1144
        %v1159 = vpack.c.bf16 %v1155, %v1152
        %1162 = vrot.lane.b32.xlu0 %v1158, 3
        %v1163 = vpop.permute.xlu0 %1162
        %1164 = vrot.lane.b32.xlu0 %v1159, 3
        %v1165 = vpop.permute.xlu0 %1164
        %vm1166 = vcmask 23552
        %v1169 = vsel %vm1166, 0, %v1163
        %v1172 = vsel %vm1166, 0, %v1165
        %v1174 = vld [vmem:[#allocation11] sm:$0x1]
        %v1176 = vpack.i.b16 %v1174, %v1174
        %v1178 = vlaneseq
        %v1179 = vshrl.u32 %v1178, 7
        %v1180 = vsub.s32 0, %v1179
        %v1181 = vrot.slane %v1176, %v1180
        %v1182 = vmul.bf16 %v1169, %v1181
        %v1183 = vmul.bf16 %v1172, %v1181
        %v1184 = vld [vmem:[#allocation8] sm:$0xf]
        %v1185 = vld [vmem:[#allocation8 + $0x4] sm:$0xf]
        %v1186 = vld [vmem:[#allocation8 + $0x8] sm:$0xf]
        %v1187 = vld [vmem:[#allocation8 + $0xc] sm:$0xf]
        %1188 = vrot.lane.b32.xlu0 %v1158, 2
        %v1189 = vpop.permute.xlu0 %1188
        %1190 = vrot.lane.b32.xlu0 %v1159, 2
        %v1191 = vpop.permute.xlu0 %1190
        %vm1192 = vcmask 15360
        %v1194 = vsel %vm1192, 0, %v1189
        %v1197 = vsel %vm1192, 0, %v1191
        %s1199 = scalar_lea.vmem [#allocation8], 16
        %v1200 = vld [vmem:[%s1199] sm:$0xf]
        %v1201 = vld [vmem:[%s1199 + $0x4] sm:$0xf]
        %v1202 = vld [vmem:[%s1199 + $0x8] sm:$0xf]
        %v1203 = vld [vmem:[%s1199 + $0xc] sm:$0xf]
        %v1208 = vunpack.c.l.b16 %v1200
        %v1209 = vunpack.c.l.b16 %v1201
        %v1210 = vunpack.c.l.b16 %v1202
        %v1211 = vunpack.c.l.b16 %v1203
        %v1212 = vpack.c.b16 %v1209, %v1208
        %v1213 = vpack.c.b16 %v1211, %v1210
        %v1215 = vsel %vm1102, %v1212, 0
        %v1218 = vsel %vm1102, %v1213, 0
        %1220 = vmatprep.subr.bf16.mxu0 0
        %1221 = vmatpush1.bf16.msra.mxu0 %v1194
        %1222 = vmatprep.subr.bf16.mxu0 0
        %1223 = vmatpush1.bf16.msra.mxu0 %v1197
        %1224 = vmatprep.subr.bf16.mxu0 0
        %1225 = vmatpush1.bf16.msra.mxu0 0
        %1226 = vmatprep.subr.bf16.mxu0 0
        %1227 = vmatpush1.bf16.msra.mxu0 0
        %1228 = vmatprep.subr.bf16.mxu0 0
        %1229 = vmatpush1.bf16.msra.mxu0 0
        %1230 = vmatprep.subr.bf16.mxu0 0
        %1231 = vmatpush1.bf16.msra.mxu0 0
        %1232 = vmatprep.subr.bf16.mxu0 0
        %1233 = vmatpush1.bf16.msra.mxu0 0
        %1234 = vmatprep.subr.bf16.mxu0 0
        %1235 = vmatpush1.bf16.msra.mxu0 0
        %1236 = vmatprep.subr.bf16.mxu0 0
        %1237 = vmatpush1.bf16.msra.mxu0 0
        %1238 = vmatprep.subr.bf16.mxu0 0
        %1239 = vmatpush1.bf16.msra.mxu0 0
        %1240 = vmatprep.subr.bf16.mxu0 0
        %1241 = vmatpush1.bf16.msra.mxu0 0
        %1242 = vmatprep.subr.bf16.mxu0 0
        %1243 = vmatpush1.bf16.msra.mxu0 0
        %1244 = vmatprep.subr.bf16.mxu0 0
        %1245 = vmatpush1.bf16.msra.mxu0 0
        %1246 = vmatprep.subr.bf16.mxu0 0
        %1247 = vmatpush1.bf16.msra.mxu0 0
        %1248 = vmatprep.subr.bf16.mxu0 0
        %1249 = vmatpush1.bf16.msra.mxu0 0
        %1250 = vmatprep.subr.bf16.mxu0 0
        %1251 = vmatpush1.bf16.msra.mxu0 0
        %1252 = vmatprep.mubr.bf16.mxu0 0
        %1253 = vmatmul.mubr.bf16.gmra.mrb[0].mxu0 %v1215
        %v1254 = vpop.f32.mrb[0].mxu0
        %v1255 = vadd.f32 0.0, %v1254
        %v1256 = vpop.f32.mrb[0].mxu0
        %v1257 = vpop.f32.mrb[0].mxu0
        %v1258 = vadd.f32 0.0, %v1257
        %v1259 = vpop.f32.mrb[0].mxu0
        %1260 = vmatprep.mubr.bf16.mxu0 0
        %1261 = vmatmul.mubr.bf16.gmra.mrb[0].mxu0 %v1218
        %v1262 = vpop.f32.mrb[0].mxu0
        %v1263 = vadd.f32 0.0, %v1262
        %v1264 = vpop.f32.mrb[0].mxu0
        %v1265 = vpop.f32.mrb[0].mxu0
        %v1266 = vadd.f32 0.0, %v1265
        %v1267 = vpop.f32.mrb[0].mxu0
        %1268 = vdwg.mxu0
        %v1273 = vunpack.c.l.b16 %v1184
        %v1274 = vunpack.c.l.b16 %v1185
        %v1275 = vunpack.c.l.b16 %v1186
        %v1276 = vunpack.c.l.b16 %v1187
        %v1277 = vpack.c.b16 %v1274, %v1273
        %v1278 = vpack.c.b16 %v1276, %v1275
        %v1280 = vsel %vm1102, %v1277, 0
        %v1283 = vsel %vm1102, %v1278, 0
        %1285 = vmatprep.subr.bf16.mxu0 0
        %1286 = vmatpush1.bf16.msra.mxu0 %v1182
        %1287 = vmatprep.subr.bf16.mxu0 0
        %1288 = vmatpush1.bf16.msra.mxu0 %v1183
        %1289 = vmatprep.subr.bf16.mxu0 0
        %1290 = vmatpush1.bf16.msra.mxu0 0
        %1291 = vmatprep.subr.bf16.mxu0 0
        %1292 = vmatpush1.bf16.msra.mxu0 0
        %1293 = vmatprep.subr.bf16.mxu0 0
        %1294 = vmatpush1.bf16.msra.mxu0 0
        %1295 = vmatprep.subr.bf16.mxu0 0
        %1296 = vmatpush1.bf16.msra.mxu0 0
        %1297 = vmatprep.subr.bf16.mxu0 0
        %1298 = vmatpush1.bf16.msra.mxu0 0
        %1299 = vmatprep.subr.bf16.mxu0 0
        %1300 = vmatpush1.bf16.msra.mxu0 0
        %1301 = vmatprep.subr.bf16.mxu0 0
        %1302 = vmatpush1.bf16.msra.mxu0 0
        %1303 = vmatprep.subr.bf16.mxu0 0
        %1304 = vmatpush1.bf16.msra.mxu0 0
        %1305 = vmatprep.subr.bf16.mxu0 0
        %1306 = vmatpush1.bf16.msra.mxu0 0
        %1307 = vmatprep.subr.bf16.mxu0 0
        %1308 = vmatpush1.bf16.msra.mxu0 0
        %1309 = vmatprep.subr.bf16.mxu0 0
        %1310 = vmatpush1.bf16.msra.mxu0 0
        %1311 = vmatprep.subr.bf16.mxu0 0
        %1312 = vmatpush1.bf16.msra.mxu0 0
        %1313 = vmatprep.subr.bf16.mxu0 0
        %1314 = vmatpush1.bf16.msra.mxu0 0
        %1315 = vmatprep.subr.bf16.mxu0 0
        %1316 = vmatpush1.bf16.msra.mxu0 0
        %1317 = vmatprep.mubr.bf16.mxu0 0
        %1318 = vmatmul.mubr.bf16.gmra.mrb[0].mxu0 %v1280
        %v1319 = vpop.f32.mrb[0].mxu0
        %v1320 = vadd.f32 %v1255, %v1319
        %v1321 = vpop.f32.mrb[0].mxu0
        %v1322 = vpop.f32.mrb[0].mxu0
        %v1323 = vadd.f32 %v1258, %v1322
        %v1324 = vpop.f32.mrb[0].mxu0
        %1325 = vmatprep.mubr.bf16.mxu0 0
        %1326 = vmatmul.mubr.bf16.gmra.mrb[0].mxu0 %v1283
        %v1327 = vpop.f32.mrb[0].mxu0
        %v1328 = vadd.f32 %v1263, %v1327
        %v1329 = vpop.f32.mrb[0].mxu0
        %v1330 = vpop.f32.mrb[0].mxu0
        %v1331 = vadd.f32 %v1266, %v1330
        %v1332 = vpop.f32.mrb[0].mxu0
        %1333 = vdwg.mxu0
        %1334 = vrot.lane.b32.xlu0 %v1158, 1
        %v1335 = vpop.permute.xlu0 %1334
        %1336 = vrot.lane.b32.xlu0 %v1159, 1
        %v1337 = vpop.permute.xlu0 %1336
        %vm1338 = vcmask 7168
        %v1340 = vsel %vm1338, 0, %v1335
        %v1343 = vsel %vm1338, 0, %v1337
        %s1345 = scalar_lea.vmem [#allocation11], 2
        %v1346 = vld [vmem:[%s1345] sm:$0x1]
        %v1348 = vpack.i.b16 %v1346, %v1346
        %v1350 = vlaneseq
        %v1351 = vshrl.u32 %v1350, 7
        %v1352 = vsub.s32 0, %v1351
        %v1353 = vrot.slane %v1348, %v1352
        %v1354 = vmul.bf16 %v1340, %v1353
        %v1355 = vmul.bf16 %v1343, %v1353
        %s1356 = scalar_lea.vmem [#allocation8], 32
        %v1357 = vld [vmem:[%s1356] sm:$0xf]
        %v1358 = vld [vmem:[%s1356 + $0x4] sm:$0xf]
        %v1359 = vld [vmem:[%s1356 + $0x8] sm:$0xf]
        %v1360 = vld [vmem:[%s1356 + $0xc] sm:$0xf]
        %v1365 = vunpack.c.l.b16 %v1357
        %v1366 = vunpack.c.l.b16 %v1358
        %v1367 = vunpack.c.l.b16 %v1359
        %v1368 = vunpack.c.l.b16 %v1360
        %v1369 = vpack.c.b16 %v1366, %v1365
        %v1370 = vpack.c.b16 %v1368, %v1367
        %v1372 = vsel %vm1102, %v1369, 0
        %v1375 = vsel %vm1102, %v1370, 0
        %1377 = vmatprep.subr.bf16.mxu0 0
        %1378 = vmatpush1.bf16.msra.mxu0 %v1354
        %1379 = vmatprep.subr.bf16.mxu0 0
        %1380 = vmatpush1.bf16.msra.mxu0 %v1355
        %1381 = vmatprep.subr.bf16.mxu0 0
        %1382 = vmatpush1.bf16.msra.mxu0 0
        %1383 = vmatprep.subr.bf16.mxu0 0
        %1384 = vmatpush1.bf16.msra.mxu0 0
        %1385 = vmatprep.subr.bf16.mxu0 0
        %1386 = vmatpush1.bf16.msra.mxu0 0
        %1387 = vmatprep.subr.bf16.mxu0 0
        %1388 = vmatpush1.bf16.msra.mxu0 0
        %1389 = vmatprep.subr.bf16.mxu0 0
        %1390 = vmatpush1.bf16.msra.mxu0 0
        %1391 = vmatprep.subr.bf16.mxu0 0
        %1392 = vmatpush1.bf16.msra.mxu0 0
        %1393 = vmatprep.subr.bf16.mxu0 0
        %1394 = vmatpush1.bf16.msra.mxu0 0
        %1395 = vmatprep.subr.bf16.mxu0 0
        %1396 = vmatpush1.bf16.msra.mxu0 0
        %1397 = vmatprep.subr.bf16.mxu0 0
        %1398 = vmatpush1.bf16.msra.mxu0 0
        %1399 = vmatprep.subr.bf16.mxu0 0
        %1400 = vmatpush1.bf16.msra.mxu0 0
        %1401 = vmatprep.subr.bf16.mxu0 0
        %1402 = vmatpush1.bf16.msra.mxu0 0
        %1403 = vmatprep.subr.bf16.mxu0 0
        %1404 = vmatpush1.bf16.msra.mxu0 0
        %1405 = vmatprep.subr.bf16.mxu0 0
        %1406 = vmatpush1.bf16.msra.mxu0 0
        %1407 = vmatprep.subr.bf16.mxu0 0
        %1408 = vmatpush1.bf16.msra.mxu0 0
        %1409 = vmatprep.mubr.bf16.mxu0 0
        %1410 = vmatmul.mubr.bf16.gmra.mrb[0].mxu0 %v1372
        %v1411 = vpop.f32.mrb[0].mxu0
        %v1412 = vadd.f32 0.0, %v1411
        %v1413 = vpop.f32.mrb[0].mxu0
        %v1414 = vpop.f32.mrb[0].mxu0
        %v1415 = vadd.f32 0.0, %v1414
        %v1416 = vpop.f32.mrb[0].mxu0
        %1417 = vmatprep.mubr.bf16.mxu0 0
        %1418 = vmatmul.mubr.bf16.gmra.mrb[0].mxu0 %v1375
        %v1419 = vpop.f32.mrb[0].mxu0
        %v1420 = vadd.f32 0.0, %v1419
        %v1421 = vpop.f32.mrb[0].mxu0
        %v1422 = vpop.f32.mrb[0].mxu0
        %v1423 = vadd.f32 0.0, %v1422
        %v1424 = vpop.f32.mrb[0].mxu0
        %1425 = vdwg.mxu0
        %v1426 = vadd.f32 %v1320, %v1412
        %v1427 = vadd.f32 %v1323, %v1415
        %v1428 = vadd.f32 %v1328, %v1420
        %v1429 = vadd.f32 %v1331, %v1423
        %s1430 = scalar_lea.vmem [#allocation11], 3
        %v1431 = vld [vmem:[%s1430] sm:$0x1]
        %v1433 = vpack.i.b16 %v1431, %v1431
        %v1435 = vlaneseq
        %v1436 = vshrl.u32 %v1435, 7
        %v1437 = vsub.s32 0, %v1436
        %v1438 = vrot.slane %v1433, %v1437
        %v1439 = vmul.bf16 %v1340, %v1438
        %v1440 = vmul.bf16 %v1343, %v1438
        %s1441 = scalar_lea.vmem [#allocation8], 48
        %v1442 = vld [vmem:[%s1441] sm:$0xf]
        %v1443 = vld [vmem:[%s1441 + $0x4] sm:$0xf]
        %v1444 = vld [vmem:[%s1441 + $0x8] sm:$0xf]
        %v1445 = vld [vmem:[%s1441 + $0xc] sm:$0xf]
        %v1450 = vunpack.c.l.b16 %v1442
        %v1451 = vunpack.c.l.b16 %v1443
        %v1452 = vunpack.c.l.b16 %v1444
        %v1453 = vunpack.c.l.b16 %v1445
        %v1454 = vpack.c.b16 %v1451, %v1450
        %v1455 = vpack.c.b16 %v1453, %v1452
        %v1457 = vsel %vm1102, %v1454, 0
        %v1460 = vsel %vm1102, %v1455, 0
        %1462 = vmatprep.subr.bf16.mxu0 0
        %1463 = vmatpush1.bf16.msra.mxu0 %v1439
        %1464 = vmatprep.subr.bf16.mxu0 0
        %1465 = vmatpush1.bf16.msra.mxu0 %v1440
        %1466 = vmatprep.subr.bf16.mxu0 0
        %1467 = vmatpush1.bf16.msra.mxu0 0
        %1468 = vmatprep.subr.bf16.mxu0 0
        %1469 = vmatpush1.bf16.msra.mxu0 0
        %1470 = vmatprep.subr.bf16.mxu0 0
        %1471 = vmatpush1.bf16.msra.mxu0 0
        %1472 = vmatprep.subr.bf16.mxu0 0
        %1473 = vmatpush1.bf16.msra.mxu0 0
        %1474 = vmatprep.subr.bf16.mxu0 0
        %1475 = vmatpush1.bf16.msra.mxu0 0
        %1476 = vmatprep.subr.bf16.mxu0 0
        %1477 = vmatpush1.bf16.msra.mxu0 0
        %1478 = vmatprep.subr.bf16.mxu0 0
        %1479 = vmatpush1.bf16.msra.mxu0 0
        %1480 = vmatprep.subr.bf16.mxu0 0
        %1481 = vmatpush1.bf16.msra.mxu0 0
        %1482 = vmatprep.subr.bf16.mxu0 0
        %1483 = vmatpush1.bf16.msra.mxu0 0
        %1484 = vmatprep.subr.bf16.mxu0 0
        %1485 = vmatpush1.bf16.msra.mxu0 0
        %1486 = vmatprep.subr.bf16.mxu0 0
        %1487 = vmatpush1.bf16.msra.mxu0 0
        %1488 = vmatprep.subr.bf16.mxu0 0
        %1489 = vmatpush1.bf16.msra.mxu0 0
        %1490 = vmatprep.subr.bf16.mxu0 0
        %1491 = vmatpush1.bf16.msra.mxu0 0
        %1492 = vmatprep.subr.bf16.mxu0 0
        %1493 = vmatpush1.bf16.msra.mxu0 0
        %1494 = vmatprep.mubr.bf16.mxu0 0
        %1495 = vmatmul.mubr.bf16.gmra.mrb[0].mxu0 %v1457
        %v1496 = vpop.f32.mrb[0].mxu0
        %v1497 = vadd.f32 0.0, %v1496
        %v1498 = vpop.f32.mrb[0].mxu0
        %v1499 = vpop.f32.mrb[0].mxu0
        %v1500 = vadd.f32 0.0, %v1499
        %v1501 = vpop.f32.mrb[0].mxu0
        %1502 = vmatprep.mubr.bf16.mxu0 0
        %1503 = vmatmul.mubr.bf16.gmra.mrb[0].mxu0 %v1460
        %v1504 = vpop.f32.mrb[0].mxu0
        %v1505 = vadd.f32 0.0, %v1504
        %v1506 = vpop.f32.mrb[0].mxu0
        %v1507 = vpop.f32.mrb[0].mxu0
        %v1508 = vadd.f32 0.0, %v1507
        %v1509 = vpop.f32.mrb[0].mxu0
        %1510 = vdwg.mxu0
        %v1511 = vadd.f32 %v1426, %v1497
        %v1512 = vadd.f32 %v1427, %v1500
        %v1513 = vadd.f32 %v1428, %v1505
        %v1514 = vadd.f32 %v1429, %v1508
        %s1515 = scalar_lea.vmem [#allocation8], 64
        %v1516 = vld [vmem:[%s1515] sm:$0xf]
        %v1517 = vld [vmem:[%s1515 + $0x4] sm:$0xf]
        %v1518 = vld [vmem:[%s1515 + $0x8] sm:$0xf]
        %v1519 = vld [vmem:[%s1515 + $0xc] sm:$0xf]
        %v1524 = vunpack.c.l.b16 %v1516
        %v1525 = vunpack.c.l.b16 %v1517
        %v1526 = vunpack.c.l.b16 %v1518
        %v1527 = vunpack.c.l.b16 %v1519
        %v1528 = vpack.c.b16 %v1525, %v1524
        %v1529 = vpack.c.b16 %v1527, %v1526
        %v1531 = vsel %vm1102, %v1528, 0
        %v1534 = vsel %vm1102, %v1529, 0
        %1536 = vmatprep.subr.bf16.mxu0 0
        %1537 = vmatpush1.bf16.msra.mxu0 %v1158
        %1538 = vmatprep.subr.bf16.mxu0 0
        %1539 = vmatpush1.bf16.msra.mxu0 %v1159
        %1540 = vmatprep.subr.bf16.mxu0 0
        %1541 = vmatpush1.bf16.msra.mxu0 0
        %1542 = vmatprep.subr.bf16.mxu0 0
        %1543 = vmatpush1.bf16.msra.mxu0 0
        %1544 = vmatprep.subr.bf16.mxu0 0
        %1545 = vmatpush1.bf16.msra.mxu0 0
        %1546 = vmatprep.subr.bf16.mxu0 0
        %1547 = vmatpush1.bf16.msra.mxu0 0
        %1548 = vmatprep.subr.bf16.mxu0 0
        %1549 = vmatpush1.bf16.msra.mxu0 0
        %1550 = vmatprep.subr.bf16.mxu0 0
        %1551 = vmatpush1.bf16.msra.mxu0 0
        %1552 = vmatprep.subr.bf16.mxu0 0
        %1553 = vmatpush1.bf16.msra.mxu0 0
        %1554 = vmatprep.subr.bf16.mxu0 0
        %1555 = vmatpush1.bf16.msra.mxu0 0
        %1556 = vmatprep.subr.bf16.mxu0 0
        %1557 = vmatpush1.bf16.msra.mxu0 0
        %1558 = vmatprep.subr.bf16.mxu0 0
        %1559 = vmatpush1.bf16.msra.mxu0 0
        %1560 = vmatprep.subr.bf16.mxu0 0
        %1561 = vmatpush1.bf16.msra.mxu0 0
        %1562 = vmatprep.subr.bf16.mxu0 0
        %1563 = vmatpush1.bf16.msra.mxu0 0
        %1564 = vmatprep.subr.bf16.mxu0 0
        %1565 = vmatpush1.bf16.msra.mxu0 0
        %1566 = vmatprep.subr.bf16.mxu0 0
        %1567 = vmatpush1.bf16.msra.mxu0 0
        %1568 = vmatprep.mubr.bf16.mxu0 0
        %1569 = vmatmul.mubr.bf16.gmra.mrb[0].mxu0 %v1531
        %v1570 = vpop.f32.mrb[0].mxu0
        %v1571 = vadd.f32 0.0, %v1570
        %v1572 = vpop.f32.mrb[0].mxu0
        %v1573 = vpop.f32.mrb[0].mxu0
        %v1574 = vadd.f32 0.0, %v1573
        %v1575 = vpop.f32.mrb[0].mxu0
        %1576 = vmatprep.mubr.bf16.mxu0 0
        %1577 = vmatmul.mubr.bf16.gmra.mrb[0].mxu0 %v1534
        %v1578 = vpop.f32.mrb[0].mxu0
        %v1579 = vadd.f32 0.0, %v1578
        %v1580 = vpop.f32.mrb[0].mxu0
        %v1581 = vpop.f32.mrb[0].mxu0
        %v1582 = vadd.f32 0.0, %v1581
        %v1583 = vpop.f32.mrb[0].mxu0
        %1584 = vdwg.mxu0
        %v1585 = vadd.f32 %v1511, %v1571
        %v1586 = vadd.f32 %v1512, %v1574
        %v1587 = vadd.f32 %v1513, %v1579
        %v1588 = vadd.f32 %v1514, %v1582
        %1589 = vrot.lane.b32.xlu0 %v1158, 127
        %v1590 = vpop.permute.xlu0 %1589
        %1591 = vrot.lane.b32.xlu0 %v1159, 127
        %v1592 = vpop.permute.xlu0 %1591
        %v1594 = vsel %vm1166, %v1590, 0
        %v1597 = vsel %vm1166, %v1592, 0
        %s1599 = scalar_lea.vmem [#allocation11], 5
        %v1600 = vld [vmem:[%s1599] sm:$0x1]
        %v1602 = vpack.i.b16 %v1600, %v1600
        %v1604 = vlaneseq
        %v1605 = vshrl.u32 %v1604, 7
        %v1606 = vsub.s32 0, %v1605
        %v1607 = vrot.slane %v1602, %v1606
        %v1608 = vmul.bf16 %v1594, %v1607
        %v1609 = vmul.bf16 %v1597, %v1607
        %s1610 = scalar_lea.vmem [#allocation8], 80
        %v1611 = vld [vmem:[%s1610] sm:$0xf]
        %v1612 = vld [vmem:[%s1610 + $0x4] sm:$0xf]
        %v1613 = vld [vmem:[%s1610 + $0x8] sm:$0xf]
        %v1614 = vld [vmem:[%s1610 + $0xc] sm:$0xf]
        %v1619 = vunpack.c.l.b16 %v1611
        %v1620 = vunpack.c.l.b16 %v1612
        %v1621 = vunpack.c.l.b16 %v1613
        %v1622 = vunpack.c.l.b16 %v1614
        %v1623 = vpack.c.b16 %v1620, %v1619
        %v1624 = vpack.c.b16 %v1622, %v1621
        %v1626 = vsel %vm1102, %v1623, 0
        %v1629 = vsel %vm1102, %v1624, 0
        %1631 = vmatprep.subr.bf16.mxu0 0
        %1632 = vmatpush1.bf16.msra.mxu0 %v1608
        %1633 = vmatprep.subr.bf16.mxu0 0
        %1634 = vmatpush1.bf16.msra.mxu0 %v1609
        %1635 = vmatprep.subr.bf16.mxu0 0
        %1636 = vmatpush1.bf16.msra.mxu0 0
        %1637 = vmatprep.subr.bf16.mxu0 0
        %1638 = vmatpush1.bf16.msra.mxu0 0
        %1639 = vmatprep.subr.bf16.mxu0 0
        %1640 = vmatpush1.bf16.msra.mxu0 0
        %1641 = vmatprep.subr.bf16.mxu0 0
        %1642 = vmatpush1.bf16.msra.mxu0 0
        %1643 = vmatprep.subr.bf16.mxu0 0
        %1644 = vmatpush1.bf16.msra.mxu0 0
        %1645 = vmatprep.subr.bf16.mxu0 0
        %1646 = vmatpush1.bf16.msra.mxu0 0
        %1647 = vmatprep.subr.bf16.mxu0 0
        %1648 = vmatpush1.bf16.msra.mxu0 0
        %1649 = vmatprep.subr.bf16.mxu0 0
        %1650 = vmatpush1.bf16.msra.mxu0 0
        %1651 = vmatprep.subr.bf16.mxu0 0
        %1652 = vmatpush1.bf16.msra.mxu0 0
        %1653 = vmatprep.subr.bf16.mxu0 0
        %1654 = vmatpush1.bf16.msra.mxu0 0
        %1655 = vmatprep.subr.bf16.mxu0 0
        %1656 = vmatpush1.bf16.msra.mxu0 0
        %1657 = vmatprep.subr.bf16.mxu0 0
        %1658 = vmatpush1.bf16.msra.mxu0 0
        %1659 = vmatprep.subr.bf16.mxu0 0
        %1660 = vmatpush1.bf16.msra.mxu0 0
        %1661 = vmatprep.subr.bf16.mxu0 0
        %1662 = vmatpush1.bf16.msra.mxu0 0
        %1663 = vmatprep.mubr.bf16.mxu0 0
        %1664 = vmatmul.mubr.bf16.gmra.mrb[0].mxu0 %v1626
        %v1665 = vpop.f32.mrb[0].mxu0
        %v1666 = vadd.f32 0.0, %v1665
        %v1667 = vpop.f32.mrb[0].mxu0
        %v1668 = vpop.f32.mrb[0].mxu0
        %v1669 = vadd.f32 0.0, %v1668
        %v1670 = vpop.f32.mrb[0].mxu0
        %1671 = vmatprep.mubr.bf16.mxu0 0
        %1672 = vmatmul.mubr.bf16.gmra.mrb[0].mxu0 %v1629
        %v1673 = vpop.f32.mrb[0].mxu0
        %v1674 = vadd.f32 0.0, %v1673
        %v1675 = vpop.f32.mrb[0].mxu0
        %v1676 = vpop.f32.mrb[0].mxu0
        %v1677 = vadd.f32 0.0, %v1676
        %v1678 = vpop.f32.mrb[0].mxu0
        %1679 = vdwg.mxu0
        %v1680 = vadd.f32 %v1585, %v1666
        %v1681 = vadd.f32 %v1586, %v1669
        %v1682 = vadd.f32 %v1587, %v1674
        %v1683 = vadd.f32 %v1588, %v1677
        %s1684 = scalar_lea.vmem [#allocation11], 6
        %v1685 = vld [vmem:[%s1684] sm:$0x1]
        %v1687 = vpack.i.b16 %v1685, %v1685
        %v1689 = vlaneseq
        %v1690 = vshrl.u32 %v1689, 7
        %v1691 = vsub.s32 0, %v1690
        %v1692 = vrot.slane %v1687, %v1691
        %v1693 = vmul.bf16 %v1594, %v1692
        %v1694 = vmul.bf16 %v1597, %v1692
        %s1695 = scalar_lea.vmem [#allocation8], 96
        %v1696 = vld [vmem:[%s1695] sm:$0xf]
        %v1697 = vld [vmem:[%s1695 + $0x4] sm:$0xf]
        %v1698 = vld [vmem:[%s1695 + $0x8] sm:$0xf]
        %v1699 = vld [vmem:[%s1695 + $0xc] sm:$0xf]
        %v1704 = vunpack.c.l.b16 %v1696
        %v1705 = vunpack.c.l.b16 %v1697
        %v1706 = vunpack.c.l.b16 %v1698
        %v1707 = vunpack.c.l.b16 %v1699
        %v1708 = vpack.c.b16 %v1705, %v1704
        %v1709 = vpack.c.b16 %v1707, %v1706
        %v1711 = vsel %vm1102, %v1708, 0
        %v1714 = vsel %vm1102, %v1709, 0
        %1716 = vmatprep.subr.bf16.mxu0 0
        %1717 = vmatpush1.bf16.msra.mxu0 %v1693
        %1718 = vmatprep.subr.bf16.mxu0 0
        %1719 = vmatpush1.bf16.msra.mxu0 %v1694
        %1720 = vmatprep.subr.bf16.mxu0 0
        %1721 = vmatpush1.bf16.msra.mxu0 0
        %1722 = vmatprep.subr.bf16.mxu0 0
        %1723 = vmatpush1.bf16.msra.mxu0 0
        %1724 = vmatprep.subr.bf16.mxu0 0
        %1725 = vmatpush1.bf16.msra.mxu0 0
        %1726 = vmatprep.subr.bf16.mxu0 0
        %1727 = vmatpush1.bf16.msra.mxu0 0
        %1728 = vmatprep.subr.bf16.mxu0 0
        %1729 = vmatpush1.bf16.msra.mxu0 0
        %1730 = vmatprep.subr.bf16.mxu0 0
        %1731 = vmatpush1.bf16.msra.mxu0 0
        %1732 = vmatprep.subr.bf16.mxu0 0
        %1733 = vmatpush1.bf16.msra.mxu0 0
        %1734 = vmatprep.subr.bf16.mxu0 0
        %1735 = vmatpush1.bf16.msra.mxu0 0
        %1736 = vmatprep.subr.bf16.mxu0 0
        %1737 = vmatpush1.bf16.msra.mxu0 0
        %1738 = vmatprep.subr.bf16.mxu0 0
        %1739 = vmatpush1.bf16.msra.mxu0 0
        %1740 = vmatprep.subr.bf16.mxu0 0
        %1741 = vmatpush1.bf16.msra.mxu0 0
        %1742 = vmatprep.subr.bf16.mxu0 0
        %1743 = vmatpush1.bf16.msra.mxu0 0
        %1744 = vmatprep.subr.bf16.mxu0 0
        %1745 = vmatpush1.bf16.msra.mxu0 0
        %1746 = vmatprep.subr.bf16.mxu0 0
        %1747 = vmatpush1.bf16.msra.mxu0 0
        %1748 = vmatprep.mubr.bf16.mxu0 0
        %1749 = vmatmul.mubr.bf16.gmra.mrb[0].mxu0 %v1711
        %v1750 = vpop.f32.mrb[0].mxu0
        %v1751 = vadd.f32 0.0, %v1750
        %v1752 = vpop.f32.mrb[0].mxu0
        %v1753 = vpop.f32.mrb[0].mxu0
        %v1754 = vadd.f32 0.0, %v1753
        %v1755 = vpop.f32.mrb[0].mxu0
        %1756 = vmatprep.mubr.bf16.mxu0 0
        %1757 = vmatmul.mubr.bf16.gmra.mrb[0].mxu0 %v1714
        %v1758 = vpop.f32.mrb[0].mxu0
        %v1759 = vadd.f32 0.0, %v1758
        %v1760 = vpop.f32.mrb[0].mxu0
        %v1761 = vpop.f32.mrb[0].mxu0
        %v1762 = vadd.f32 0.0, %v1761
        %v1763 = vpop.f32.mrb[0].mxu0
        %1764 = vdwg.mxu0
        %v1765 = vadd.f32 %v1680, %v1751
        %v1766 = vadd.f32 %v1681, %v1754
        %v1767 = vadd.f32 %v1682, %v1759
        %v1768 = vadd.f32 %v1683, %v1762
        %1769 = vrot.lane.b32.xlu0 %v1158, 126
        %v1770 = vpop.permute.xlu0 %1769
        %1771 = vrot.lane.b32.xlu0 %v1159, 126
        %v1772 = vpop.permute.xlu0 %1771
        %v1774 = vsel %vm1192, %v1770, 0
        %v1777 = vsel %vm1192, %v1772, 0
        %s1779 = scalar_lea.vmem [#allocation8], 112
        %v1780 = vld [vmem:[%s1779] sm:$0xf]
        %v1781 = vld [vmem:[%s1779 + $0x4] sm:$0xf]
        %v1782 = vld [vmem:[%s1779 + $0x8] sm:$0xf]
        %v1783 = vld [vmem:[%s1779 + $0xc] sm:$0xf]
        %v1788 = vunpack.c.l.b16 %v1780
        %v1789 = vunpack.c.l.b16 %v1781
        %v1790 = vunpack.c.l.b16 %v1782
        %v1791 = vunpack.c.l.b16 %v1783
        %v1792 = vpack.c.b16 %v1789, %v1788
        %v1793 = vpack.c.b16 %v1791, %v1790
        %v1795 = vsel %vm1102, %v1792, 0
        %v1798 = vsel %vm1102, %v1793, 0
        %1800 = vmatprep.subr.bf16.mxu0 0
        %1801 = vmatpush1.bf16.msra.mxu0 %v1774
        %1802 = vmatprep.subr.bf16.mxu0 0
        %1803 = vmatpush1.bf16.msra.mxu0 %v1777
        %1804 = vmatprep.subr.bf16.mxu0 0
        %1805 = vmatpush1.bf16.msra.mxu0 0
        %1806 = vmatprep.subr.bf16.mxu0 0
        %1807 = vmatpush1.bf16.msra.mxu0 0
        %1808 = vmatprep.subr.bf16.mxu0 0
        %1809 = vmatpush1.bf16.msra.mxu0 0
        %1810 = vmatprep.subr.bf16.mxu0 0
        %1811 = vmatpush1.bf16.msra.mxu0 0
        %1812 = vmatprep.subr.bf16.mxu0 0
        %1813 = vmatpush1.bf16.msra.mxu0 0
        %1814 = vmatprep.subr.bf16.mxu0 0
        %1815 = vmatpush1.bf16.msra.mxu0 0
        %1816 = vmatprep.subr.bf16.mxu0 0
        %1817 = vmatpush1.bf16.msra.mxu0 0
        %1818 = vmatprep.subr.bf16.mxu0 0
        %1819 = vmatpush1.bf16.msra.mxu0 0
        %1820 = vmatprep.subr.bf16.mxu0 0
        %1821 = vmatpush1.bf16.msra.mxu0 0
        %1822 = vmatprep.subr.bf16.mxu0 0
        %1823 = vmatpush1.bf16.msra.mxu0 0
        %1824 = vmatprep.subr.bf16.mxu0 0
        %1825 = vmatpush1.bf16.msra.mxu0 0
        %1826 = vmatprep.subr.bf16.mxu0 0
        %1827 = vmatpush1.bf16.msra.mxu0 0
        %1828 = vmatprep.subr.bf16.mxu0 0
        %1829 = vmatpush1.bf16.msra.mxu0 0
        %1830 = vmatprep.subr.bf16.mxu0 0
        %1831 = vmatpush1.bf16.msra.mxu0 0
        %1832 = vmatprep.mubr.bf16.mxu0 0
        %1833 = vmatmul.mubr.bf16.gmra.mrb[0].mxu0 %v1795
        %v1834 = vpop.f32.mrb[0].mxu0
        %v1835 = vadd.f32 0.0, %v1834
        %v1836 = vpop.f32.mrb[0].mxu0
        %v1837 = vpop.f32.mrb[0].mxu0
        %v1838 = vadd.f32 0.0, %v1837
        %v1839 = vpop.f32.mrb[0].mxu0
        %1840 = vmatprep.mubr.bf16.mxu0 0
        %1841 = vmatmul.mubr.bf16.gmra.mrb[0].mxu0 %v1798
        %v1842 = vpop.f32.mrb[0].mxu0
        %v1843 = vadd.f32 0.0, %v1842
        %v1844 = vpop.f32.mrb[0].mxu0
        %v1845 = vpop.f32.mrb[0].mxu0
        %v1846 = vadd.f32 0.0, %v1845
        %v1847 = vpop.f32.mrb[0].mxu0
        %1848 = vdwg.mxu0
        %v1849 = vadd.f32 %v1765, %v1835
        %v1850 = vadd.f32 %v1766, %v1838
        %v1851 = vadd.f32 %v1767, %v1843
        %v1852 = vadd.f32 %v1768, %v1846
        %1853 = vrot.lane.b32.xlu0 %v1158, 125
        %v1854 = vpop.permute.xlu0 %1853
        %1855 = vrot.lane.b32.xlu0 %v1159, 125
        %v1856 = vpop.permute.xlu0 %1855
        %v1858 = vsel %vm1338, %v1854, 0
        %v1861 = vsel %vm1338, %v1856, 0
        %s1863 = scalar_lea.vmem [#allocation11], 8
        %v1864 = vld [vmem:[%s1863] sm:$0x1]
        %v1866 = vpack.i.b16 %v1864, %v1864
        %v1868 = vlaneseq
        %v1869 = vshrl.u32 %v1868, 7
        %v1870 = vsub.s32 0, %v1869
        %v1871 = vrot.slane %v1866, %v1870
        %v1872 = vmul.bf16 %v1858, %v1871
        %v1873 = vmul.bf16 %v1861, %v1871
        %s1874 = scalar_lea.vmem [#allocation8], 128
        %v1875 = vld [vmem:[%s1874] sm:$0xf]
        %v1876 = vld [vmem:[%s1874 + $0x4] sm:$0xf]
        %v1877 = vld [vmem:[%s1874 + $0x8] sm:$0xf]
        %v1878 = vld [vmem:[%s1874 + $0xc] sm:$0xf]
        %v1883 = vunpack.c.l.b16 %v1875
        %v1884 = vunpack.c.l.b16 %v1876
        %v1885 = vunpack.c.l.b16 %v1877
        %v1886 = vunpack.c.l.b16 %v1878
        %v1887 = vpack.c.b16 %v1884, %v1883
        %v1888 = vpack.c.b16 %v1886, %v1885
        %v1890 = vsel %vm1102, %v1887, 0
        %v1893 = vsel %vm1102, %v1888, 0
        %1895 = vmatprep.subr.bf16.mxu0 0
        %1896 = vmatpush1.bf16.msra.mxu0 %v1872
        %1897 = vmatprep.subr.bf16.mxu0 0
        %1898 = vmatpush1.bf16.msra.mxu0 %v1873
        %1899 = vmatprep.subr.bf16.mxu0 0
        %1900 = vmatpush1.bf16.msra.mxu0 0
        %1901 = vmatprep.subr.bf16.mxu0 0
        %1902 = vmatpush1.bf16.msra.mxu0 0
        %1903 = vmatprep.subr.bf16.mxu0 0
        %1904 = vmatpush1.bf16.msra.mxu0 0
        %1905 = vmatprep.subr.bf16.mxu0 0
        %1906 = vmatpush1.bf16.msra.mxu0 0
        %1907 = vmatprep.subr.bf16.mxu0 0
        %1908 = vmatpush1.bf16.msra.mxu0 0
        %1909 = vmatprep.subr.bf16.mxu0 0
        %1910 = vmatpush1.bf16.msra.mxu0 0
        %1911 = vmatprep.subr.bf16.mxu0 0
        %1912 = vmatpush1.bf16.msra.mxu0 0
        %1913 = vmatprep.subr.bf16.mxu0 0
        %1914 = vmatpush1.bf16.msra.mxu0 0
        %1915 = vmatprep.subr.bf16.mxu0 0
        %1916 = vmatpush1.bf16.msra.mxu0 0
        %1917 = vmatprep.subr.bf16.mxu0 0
        %1918 = vmatpush1.bf16.msra.mxu0 0
        %1919 = vmatprep.subr.bf16.mxu0 0
        %1920 = vmatpush1.bf16.msra.mxu0 0
        %1921 = vmatprep.subr.bf16.mxu0 0
        %1922 = vmatpush1.bf16.msra.mxu0 0
        %1923 = vmatprep.subr.bf16.mxu0 0
        %1924 = vmatpush1.bf16.msra.mxu0 0
        %1925 = vmatprep.subr.bf16.mxu0 0
        %1926 = vmatpush1.bf16.msra.mxu0 0
        %1927 = vmatprep.mubr.bf16.mxu0 0
        %1928 = vmatmul.mubr.bf16.gmra.mrb[0].mxu0 %v1890
        %v1929 = vpop.f32.mrb[0].mxu0
        %v1930 = vadd.f32 0.0, %v1929
        %v1931 = vpop.f32.mrb[0].mxu0
        %v1932 = vpop.f32.mrb[0].mxu0
        %v1933 = vadd.f32 0.0, %v1932
        %v1934 = vpop.f32.mrb[0].mxu0
        %1935 = vmatprep.mubr.bf16.mxu0 0
        %1936 = vmatmul.mubr.bf16.gmra.mrb[0].mxu0 %v1893
        %v1937 = vpop.f32.mrb[0].mxu0
        %v1938 = vadd.f32 0.0, %v1937
        %v1939 = vpop.f32.mrb[0].mxu0
        %v1940 = vpop.f32.mrb[0].mxu0
        %v1941 = vadd.f32 0.0, %v1940
        %v1942 = vpop.f32.mrb[0].mxu0
        %1943 = vdwg.mxu0
        %v1944 = vadd.f32 %v1849, %v1930
        %v1945 = vadd.f32 %v1850, %v1933
        %v1946 = vadd.f32 %v1851, %v1938
        %v1947 = vadd.f32 %v1852, %v1941
        %v1948 = vld [vmem:[#allocation10] sm:$0xff]
        %v1949 = vld [vmem:[#allocation10 + $0x8] sm:$0xff]
        %v1950 = vld [vmem:[#allocation10 + $0x10] sm:$0xff]
        %v1951 = vld [vmem:[#allocation10 + $0x18] sm:$0xff]
        %1953 = vset.pattern.permute.xlu0 0
        %1954 = vperm.xlu0 %1953, %v1948
        %v1955 = vpop.permute.xlu0 %1954
        %1958 = vset.pattern.permute.xlu0 0
        %1959 = vperm.xlu0 %1958, %v1949
        %v1960 = vpop.permute.xlu0 %1959
        %1963 = vset.pattern.permute.xlu0 0
        %1964 = vperm.xlu0 %1963, %v1950
        %v1965 = vpop.permute.xlu0 %1964
        %1968 = vset.pattern.permute.xlu0 0
        %1969 = vperm.xlu0 %1968, %v1951
        %v1970 = vpop.permute.xlu0 %1969
        %v1972 = vadd.f32 %v1944, %v1955
        %v1973 = vadd.f32 %v1945, %v1960
        %v1974 = vadd.f32 %v1946, %v1965
        %v1975 = vadd.f32 %v1947, %v1970
        %v1976 = vld [vmem:[%s911] sm:$0xf]
        %v1977 = vld [vmem:[%s911 + $0x4] sm:$0xf]
        %v1978 = vld [vmem:[%s911 + $0x8] sm:$0xf]
        %v1979 = vld [vmem:[%s911 + $0xc] sm:$0xf]
        %v1980 = vld [vmem:[#allocation14] sm:$0xf]
        %v1981 = vld [vmem:[#allocation14 + $0x4] sm:$0xf]
        %v1982 = vld [vmem:[#allocation14 + $0x8] sm:$0xf]
        %v1983 = vld [vmem:[#allocation14 + $0xc] sm:$0xf]
        %v1984 = vld [vmem:[#allocation15] sm:$0xff]
        %v1985 = vld [vmem:[#allocation15 + $0x8] sm:$0xff]
        %v1986 = vld [vmem:[#allocation15 + $0x10] sm:$0xff]
        %v1987 = vld [vmem:[#allocation15 + $0x18] sm:$0xff]
        %1989 = vset.pattern.permute.xlu0 0
        %1990 = vperm.xlu0 %1989, %v1984
        %v1991 = vpop.permute.xlu0 %1990
        %1994 = vset.pattern.permute.xlu0 0
        %1995 = vperm.xlu0 %1994, %v1985
        %v1996 = vpop.permute.xlu0 %1995
        %1999 = vset.pattern.permute.xlu0 0
        %2000 = vperm.xlu0 %1999, %v1986
        %v2001 = vpop.permute.xlu0 %2000
        %2004 = vset.pattern.permute.xlu0 0
        %2005 = vperm.xlu0 %2004, %v1987
        %v2006 = vpop.permute.xlu0 %2005
        %v2012 = vunpack.c.l.b16 %v1980
        %v2013 = vunpack.c.l.b16 %v1981
        %v2014 = vunpack.c.l.b16 %v1982
        %v2015 = vunpack.c.l.b16 %v1983
        %v2016 = vpack.c.b16 %v2013, %v2012
        %v2017 = vpack.c.b16 %v2015, %v2014
        %v2022 = vunpack.c.l.b16 %v1976
        %v2023 = vunpack.c.l.b16 %v1977
        %v2024 = vunpack.c.l.b16 %v1978
        %v2025 = vunpack.c.l.b16 %v1979
        %v2026 = vpack.c.b16 %v2023, %v2022
        %v2027 = vpack.c.b16 %v2025, %v2024
        %v2031 = vsel %vm1102, %v2016, 0
        %v2034 = vsel %vm1102, %v2017, 0
        %2036 = vmatprep.subr.bf16.mxu0 0
        %2037 = vmatpush1.bf16.msra.mxu0 %v2026
        %2038 = vmatprep.subr.bf16.mxu0 0
        %2039 = vmatpush1.bf16.msra.mxu0 %v2027
        %2040 = vmatprep.subr.bf16.mxu0 0
        %2041 = vmatpush1.bf16.msra.mxu0 0
        %2042 = vmatprep.subr.bf16.mxu0 0
        %2043 = vmatpush1.bf16.msra.mxu0 0
        %2044 = vmatprep.subr.bf16.mxu0 0
        %2045 = vmatpush1.bf16.msra.mxu0 0
        %2046 = vmatprep.subr.bf16.mxu0 0
        %2047 = vmatpush1.bf16.msra.mxu0 0
        %2048 = vmatprep.subr.bf16.mxu0 0
        %2049 = vmatpush1.bf16.msra.mxu0 0
        %2050 = vmatprep.subr.bf16.mxu0 0
        %2051 = vmatpush1.bf16.msra.mxu0 0
        %2052 = vmatprep.subr.bf16.mxu0 0
        %2053 = vmatpush1.bf16.msra.mxu0 0
        %2054 = vmatprep.subr.bf16.mxu0 0
        %2055 = vmatpush1.bf16.msra.mxu0 0
        %2056 = vmatprep.subr.bf16.mxu0 0
        %2057 = vmatpush1.bf16.msra.mxu0 0
        %2058 = vmatprep.subr.bf16.mxu0 0
        %2059 = vmatpush1.bf16.msra.mxu0 0
        %2060 = vmatprep.subr.bf16.mxu0 0
        %2061 = vmatpush1.bf16.msra.mxu0 0
        %2062 = vmatprep.subr.bf16.mxu0 0
        %2063 = vmatpush1.bf16.msra.mxu0 0
        %2064 = vmatprep.subr.bf16.mxu0 0
        %2065 = vmatpush1.bf16.msra.mxu0 0
        %2066 = vmatprep.subr.bf16.mxu0 0
        %2067 = vmatpush1.bf16.msra.mxu0 0
        %2068 = vmatprep.mubr.bf16.mxu0 0
        %2069 = vmatmul.mubr.bf16.gmra.mrb[0].mxu0 %v2031
        %v2070 = vpop.f32.mrb[0].mxu0
        %v2071 = vadd.f32 %v1991, %v2070
        %v2072 = vpop.f32.mrb[0].mxu0
        %v2073 = vpop.f32.mrb[0].mxu0
        %v2074 = vadd.f32 %v1996, %v2073
        %v2075 = vpop.f32.mrb[0].mxu0
        %2076 = vmatprep.mubr.bf16.mxu0 0
        %2077 = vmatmul.mubr.bf16.gmra.mrb[0].mxu0 %v2034
        %v2078 = vpop.f32.mrb[0].mxu0
        %v2079 = vadd.f32 %v2001, %v2078
        %v2080 = vpop.f32.mrb[0].mxu0
        %v2081 = vpop.f32.mrb[0].mxu0
        %v2082 = vadd.f32 %v2006, %v2081
        %v2083 = vpop.f32.mrb[0].mxu0
        %2084 = vdwg.mxu0
        %v2085 = vld [vmem:[#allocation20] sm:$0x3]
        %v2086 = vpack.c.bf16 %v1973, %v1972
        %v2087 = vpack.c.bf16 %v1975, %v1974
        %vm2088 = vcmask 31744
        %v2090 = vsel %vm2088, %v2086, 0
        %v2093 = vsel %vm2088, %v2087, 0
        %vm2095 = vcmask 1041408
        %v2097 = vsel %vm2095, %v2085, 0
        %2099 = vmatprep.subr.bf16.mxu0 0
        %2100 = vmatpush1.bf16.msra.mxu0 %v2097
        %2101 = vmatprep.subr.bf16.mxu0 0
        %2102 = vmatpush1.bf16.msra.mxu0 0
        %2103 = vmatprep.subr.bf16.mxu0 0
        %2104 = vmatpush1.bf16.msra.mxu0 0
        %2105 = vmatprep.subr.bf16.mxu0 0
        %2106 = vmatpush1.bf16.msra.mxu0 0
        %2107 = vmatprep.subr.bf16.mxu0 0
        %2108 = vmatpush1.bf16.msra.mxu0 0
        %2109 = vmatprep.subr.bf16.mxu0 0
        %2110 = vmatpush1.bf16.msra.mxu0 0
        %2111 = vmatprep.subr.bf16.mxu0 0
        %2112 = vmatpush1.bf16.msra.mxu0 0
        %2113 = vmatprep.subr.bf16.mxu0 0
        %2114 = vmatpush1.bf16.msra.mxu0 0
        %2115 = vmatprep.subr.bf16.mxu0 0
        %2116 = vmatpush1.bf16.msra.mxu0 0
        %2117 = vmatprep.subr.bf16.mxu0 0
        %2118 = vmatpush1.bf16.msra.mxu0 0
        %2119 = vmatprep.subr.bf16.mxu0 0
        %2120 = vmatpush1.bf16.msra.mxu0 0
        %2121 = vmatprep.subr.bf16.mxu0 0
        %2122 = vmatpush1.bf16.msra.mxu0 0
        %2123 = vmatprep.subr.bf16.mxu0 0
        %2124 = vmatpush1.bf16.msra.mxu0 0
        %2125 = vmatprep.subr.bf16.mxu0 0
        %2126 = vmatpush1.bf16.msra.mxu0 0
        %2127 = vmatprep.subr.bf16.mxu0 0
        %2128 = vmatpush1.bf16.msra.mxu0 0
        %2129 = vmatprep.subr.bf16.mxu0 0
        %2130 = vmatpush1.bf16.msra.mxu0 0
        %2131 = vmatprep.mubr.bf16.mxu0 0
        %2132 = vmatmul.mubr.bf16.gmra.mrb[0].mxu0 %v2090
        %v2133 = vpop.f32.mrb[0].mxu0
        %v2134 = vadd.f32 %v2071, %v2133
        %v2135 = vpop.f32.mrb[0].mxu0
        %v2136 = vpop.f32.mrb[0].mxu0
        %v2137 = vadd.f32 %v2074, %v2136
        %v2138 = vpop.f32.mrb[0].mxu0
        %2139 = vmatprep.mubr.bf16.mxu0 0
        %2140 = vmatmul.mubr.bf16.gmra.mrb[0].mxu0 %v2093
        %v2141 = vpop.f32.mrb[0].mxu0
        %v2142 = vadd.f32 %v2079, %v2141
        %v2143 = vpop.f32.mrb[0].mxu0
        %v2144 = vpop.f32.mrb[0].mxu0
        %v2145 = vadd.f32 %v2082, %v2144
        %v2146 = vpop.f32.mrb[0].mxu0
        %2147 = vdwg.mxu0
        %v2148 = vpack.c.bf16 %v2137, %v2134
        %v2149 = vpack.c.bf16 %v2145, %v2142
        %2152 = vrot.lane.b32.xlu0 %v2148, 5
        %v2153 = vpop.permute.xlu0 %2152
        %2154 = vrot.lane.b32.xlu0 %v2149, 5
        %v2155 = vpop.permute.xlu0 %2154
        %vm2156 = vcmask 39936
        %v2158 = vsel %vm2156, 0, %v2153
        %v2161 = vsel %vm2156, 0, %v2155
        %v2163 = vld [vmem:[#allocation19] sm:$0x1]
        %v2165 = vpack.i.b16 %v2163, %v2163
        %v2167 = vlaneseq
        %v2168 = vshrl.u32 %v2167, 7
        %v2169 = vsub.s32 0, %v2168
        %v2170 = vrot.slane %v2165, %v2169
        %v2171 = vmul.bf16 %v2158, %v2170
        %v2172 = vmul.bf16 %v2161, %v2170
        %v2173 = vld [vmem:[#allocation16] sm:$0xf]
        %v2174 = vld [vmem:[#allocation16 + $0x4] sm:$0xf]
        %v2175 = vld [vmem:[#allocation16 + $0x8] sm:$0xf]
        %v2176 = vld [vmem:[#allocation16 + $0xc] sm:$0xf]
        %2177 = vrot.lane.b32.xlu0 %v2148, 4
        %v2178 = vpop.permute.xlu0 %2177
        %2179 = vrot.lane.b32.xlu0 %v2149, 4
        %v2180 = vpop.permute.xlu0 %2179
        %v2182 = vsel %vm2088, 0, %v2178
        %v2185 = vsel %vm2088, 0, %v2180
        %s2187 = scalar_lea.vmem [#allocation16], 16
        %v2188 = vld [vmem:[%s2187] sm:$0xf]
        %v2189 = vld [vmem:[%s2187 + $0x4] sm:$0xf]
        %v2190 = vld [vmem:[%s2187 + $0x8] sm:$0xf]
        %v2191 = vld [vmem:[%s2187 + $0xc] sm:$0xf]
        %v2196 = vunpack.c.l.b16 %v2188
        %v2197 = vunpack.c.l.b16 %v2189
        %v2198 = vunpack.c.l.b16 %v2190
        %v2199 = vunpack.c.l.b16 %v2191
        %v2200 = vpack.c.b16 %v2197, %v2196
        %v2201 = vpack.c.b16 %v2199, %v2198
        %v2203 = vsel %vm1102, %v2200, 0
        %v2206 = vsel %vm1102, %v2201, 0
        %2208 = vmatprep.subr.bf16.mxu0 0
        %2209 = vmatpush1.bf16.msra.mxu0 %v2182
        %2210 = vmatprep.subr.bf16.mxu0 0
        %2211 = vmatpush1.bf16.msra.mxu0 %v2185
        %2212 = vmatprep.subr.bf16.mxu0 0
        %2213 = vmatpush1.bf16.msra.mxu0 0
        %2214 = vmatprep.subr.bf16.mxu0 0
        %2215 = vmatpush1.bf16.msra.mxu0 0
        %2216 = vmatprep.subr.bf16.mxu0 0
        %2217 = vmatpush1.bf16.msra.mxu0 0
        %2218 = vmatprep.subr.bf16.mxu0 0
        %2219 = vmatpush1.bf16.msra.mxu0 0
        %2220 = vmatprep.subr.bf16.mxu0 0
        %2221 = vmatpush1.bf16.msra.mxu0 0
        %2222 = vmatprep.subr.bf16.mxu0 0
        %2223 = vmatpush1.bf16.msra.mxu0 0
        %2224 = vmatprep.subr.bf16.mxu0 0
        %2225 = vmatpush1.bf16.msra.mxu0 0
        %2226 = vmatprep.subr.bf16.mxu0 0
        %2227 = vmatpush1.bf16.msra.mxu0 0
        %2228 = vmatprep.subr.bf16.mxu0 0
        %2229 = vmatpush1.bf16.msra.mxu0 0
        %2230 = vmatprep.subr.bf16.mxu0 0
        %2231 = vmatpush1.bf16.msra.mxu0 0
        %2232 = vmatprep.subr.bf16.mxu0 0
        %2233 = vmatpush1.bf16.msra.mxu0 0
        %2234 = vmatprep.subr.bf16.mxu0 0
        %2235 = vmatpush1.bf16.msra.mxu0 0
        %2236 = vmatprep.subr.bf16.mxu0 0
        %2237 = vmatpush1.bf16.msra.mxu0 0
        %2238 = vmatprep.subr.bf16.mxu0 0
        %2239 = vmatpush1.bf16.msra.mxu0 0
        %2240 = vmatprep.mubr.bf16.mxu0 0
        %2241 = vmatmul.mubr.bf16.gmra.mrb[0].mxu0 %v2203
        %v2242 = vpop.f32.mrb[0].mxu0
        %v2243 = vadd.f32 0.0, %v2242
        %v2244 = vpop.f32.mrb[0].mxu0
        %v2245 = vpop.f32.mrb[0].mxu0
        %v2246 = vadd.f32 0.0, %v2245
        %v2247 = vpop.f32.mrb[0].mxu0
        %2248 = vmatprep.mubr.bf16.mxu0 0
        %2249 = vmatmul.mubr.bf16.gmra.mrb[0].mxu0 %v2206
        %v2250 = vpop.f32.mrb[0].mxu0
        %v2251 = vadd.f32 0.0, %v2250
        %v2252 = vpop.f32.mrb[0].mxu0
        %v2253 = vpop.f32.mrb[0].mxu0
        %v2254 = vadd.f32 0.0, %v2253
        %v2255 = vpop.f32.mrb[0].mxu0
        %2256 = vdwg.mxu0
        %v2261 = vunpack.c.l.b16 %v2173
        %v2262 = vunpack.c.l.b16 %v2174
        %v2263 = vunpack.c.l.b16 %v2175
        %v2264 = vunpack.c.l.b16 %v2176
        %v2265 = vpack.c.b16 %v2262, %v2261
        %v2266 = vpack.c.b16 %v2264, %v2263
        %v2268 = vsel %vm1102, %v2265, 0
        %v2271 = vsel %vm1102, %v2266, 0
        %2273 = vmatprep.subr.bf16.mxu0 0
        %2274 = vmatpush1.bf16.msra.mxu0 %v2171
        %2275 = vmatprep.subr.bf16.mxu0 0
        %2276 = vmatpush1.bf16.msra.mxu0 %v2172
        %2277 = vmatprep.subr.bf16.mxu0 0
        %2278 = vmatpush1.bf16.msra.mxu0 0
        %2279 = vmatprep.subr.bf16.mxu0 0
        %2280 = vmatpush1.bf16.msra.mxu0 0
        %2281 = vmatprep.subr.bf16.mxu0 0
        %2282 = vmatpush1.bf16.msra.mxu0 0
        %2283 = vmatprep.subr.bf16.mxu0 0
        %2284 = vmatpush1.bf16.msra.mxu0 0
        %2285 = vmatprep.subr.bf16.mxu0 0
        %2286 = vmatpush1.bf16.msra.mxu0 0
        %2287 = vmatprep.subr.bf16.mxu0 0
        %2288 = vmatpush1.bf16.msra.mxu0 0
        %2289 = vmatprep.subr.bf16.mxu0 0
        %2290 = vmatpush1.bf16.msra.mxu0 0
        %2291 = vmatprep.subr.bf16.mxu0 0
        %2292 = vmatpush1.bf16.msra.mxu0 0
        %2293 = vmatprep.subr.bf16.mxu0 0
        %2294 = vmatpush1.bf16.msra.mxu0 0
        %2295 = vmatprep.subr.bf16.mxu0 0
        %2296 = vmatpush1.bf16.msra.mxu0 0
        %2297 = vmatprep.subr.bf16.mxu0 0
        %2298 = vmatpush1.bf16.msra.mxu0 0
        %2299 = vmatprep.subr.bf16.mxu0 0
        %2300 = vmatpush1.bf16.msra.mxu0 0
        %2301 = vmatprep.subr.bf16.mxu0 0
        %2302 = vmatpush1.bf16.msra.mxu0 0
        %2303 = vmatprep.subr.bf16.mxu0 0
        %2304 = vmatpush1.bf16.msra.mxu0 0
        %2305 = vmatprep.mubr.bf16.mxu0 0
        %2306 = vmatmul.mubr.bf16.gmra.mrb[0].mxu0 %v2268
        %v2307 = vpop.f32.mrb[0].mxu0
        %v2308 = vadd.f32 %v2243, %v2307
        %v2309 = vpop.f32.mrb[0].mxu0
        %v2310 = vpop.f32.mrb[0].mxu0
        %v2311 = vadd.f32 %v2246, %v2310
        %v2312 = vpop.f32.mrb[0].mxu0
        %2313 = vmatprep.mubr.bf16.mxu0 0
        %2314 = vmatmul.mubr.bf16.gmra.mrb[0].mxu0 %v2271
        %v2315 = vpop.f32.mrb[0].mxu0
        %v2316 = vadd.f32 %v2251, %v2315
        %v2317 = vpop.f32.mrb[0].mxu0
        %v2318 = vpop.f32.mrb[0].mxu0
        %v2319 = vadd.f32 %v2254, %v2318
        %v2320 = vpop.f32.mrb[0].mxu0
        %2321 = vdwg.mxu0
        %2322 = vrot.lane.b32.xlu0 %v2148, 3
        %v2323 = vpop.permute.xlu0 %2322
        %2324 = vrot.lane.b32.xlu0 %v2149, 3
        %v2325 = vpop.permute.xlu0 %2324
        %v2327 = vsel %vm1166, 0, %v2323
        %v2330 = vsel %vm1166, 0, %v2325
        %s2332 = scalar_lea.vmem [#allocation19], 2
        %v2333 = vld [vmem:[%s2332] sm:$0x1]
        %v2335 = vpack.i.b16 %v2333, %v2333
        %v2337 = vlaneseq
        %v2338 = vshrl.u32 %v2337, 7
        %v2339 = vsub.s32 0, %v2338
        %v2340 = vrot.slane %v2335, %v2339
        %v2341 = vmul.bf16 %v2327, %v2340
        %v2342 = vmul.bf16 %v2330, %v2340
        %s2343 = scalar_lea.vmem [#allocation16], 32
        %v2344 = vld [vmem:[%s2343] sm:$0xf]
        %v2345 = vld [vmem:[%s2343 + $0x4] sm:$0xf]
        %v2346 = vld [vmem:[%s2343 + $0x8] sm:$0xf]
        %v2347 = vld [vmem:[%s2343 + $0xc] sm:$0xf]
        %v2352 = vunpack.c.l.b16 %v2344
        %v2353 = vunpack.c.l.b16 %v2345
        %v2354 = vunpack.c.l.b16 %v2346
        %v2355 = vunpack.c.l.b16 %v2347
        %v2356 = vpack.c.b16 %v2353, %v2352
        %v2357 = vpack.c.b16 %v2355, %v2354
        %v2359 = vsel %vm1102, %v2356, 0
        %v2362 = vsel %vm1102, %v2357, 0
        %2364 = vmatprep.subr.bf16.mxu0 0
        %2365 = vmatpush1.bf16.msra.mxu0 %v2341
        %2366 = vmatprep.subr.bf16.mxu0 0
        %2367 = vmatpush1.bf16.msra.mxu0 %v2342
        %2368 = vmatprep.subr.bf16.mxu0 0
        %2369 = vmatpush1.bf16.msra.mxu0 0
        %2370 = vmatprep.subr.bf16.mxu0 0
        %2371 = vmatpush1.bf16.msra.mxu0 0
        %2372 = vmatprep.subr.bf16.mxu0 0
        %2373 = vmatpush1.bf16.msra.mxu0 0
        %2374 = vmatprep.subr.bf16.mxu0 0
        %2375 = vmatpush1.bf16.msra.mxu0 0
        %2376 = vmatprep.subr.bf16.mxu0 0
        %2377 = vmatpush1.bf16.msra.mxu0 0
        %2378 = vmatprep.subr.bf16.mxu0 0
        %2379 = vmatpush1.bf16.msra.mxu0 0
        %2380 = vmatprep.subr.bf16.mxu0 0
        %2381 = vmatpush1.bf16.msra.mxu0 0
        %2382 = vmatprep.subr.bf16.mxu0 0
        %2383 = vmatpush1.bf16.msra.mxu0 0
        %2384 = vmatprep.subr.bf16.mxu0 0
        %2385 = vmatpush1.bf16.msra.mxu0 0
        %2386 = vmatprep.subr.bf16.mxu0 0
        %2387 = vmatpush1.bf16.msra.mxu0 0
        %2388 = vmatprep.subr.bf16.mxu0 0
        %2389 = vmatpush1.bf16.msra.mxu0 0
        %2390 = vmatprep.subr.bf16.mxu0 0
        %2391 = vmatpush1.bf16.msra.mxu0 0
        %2392 = vmatprep.subr.bf16.mxu0 0
        %2393 = vmatpush1.bf16.msra.mxu0 0
        %2394 = vmatprep.subr.bf16.mxu0 0
        %2395 = vmatpush1.bf16.msra.mxu0 0
        %2396 = vmatprep.mubr.bf16.mxu0 0
        %2397 = vmatmul.mubr.bf16.gmra.mrb[0].mxu0 %v2359
        %v2398 = vpop.f32.mrb[0].mxu0
        %v2399 = vadd.f32 0.0, %v2398
        %v2400 = vpop.f32.mrb[0].mxu0
        %v2401 = vpop.f32.mrb[0].mxu0
        %v2402 = vadd.f32 0.0, %v2401
        %v2403 = vpop.f32.mrb[0].mxu0
        %2404 = vmatprep.mubr.bf16.mxu0 0
        %2405 = vmatmul.mubr.bf16.gmra.mrb[0].mxu0 %v2362
        %v2406 = vpop.f32.mrb[0].mxu0
        %v2407 = vadd.f32 0.0, %v2406
        %v2408 = vpop.f32.mrb[0].mxu0
        %v2409 = vpop.f32.mrb[0].mxu0
        %v2410 = vadd.f32 0.0, %v2409
        %v2411 = vpop.f32.mrb[0].mxu0
        %2412 = vdwg.mxu0
        %v2413 = vadd.f32 %v2308, %v2399
        %v2414 = vadd.f32 %v2311, %v2402
        %v2415 = vadd.f32 %v2316, %v2407
        %v2416 = vadd.f32 %v2319, %v2410
        %2417 = vrot.lane.b32.xlu0 %v2148, 1
        %v2418 = vpop.permute.xlu0 %2417
        %2419 = vrot.lane.b32.xlu0 %v2149, 1
        %v2420 = vpop.permute.xlu0 %2419
        %v2422 = vsel %vm1338, 0, %v2418
        %v2425 = vsel %vm1338, 0, %v2420
        %s2427 = scalar_lea.vmem [#allocation19], 3
        %v2428 = vld [vmem:[%s2427] sm:$0x1]
        %v2430 = vpack.i.b16 %v2428, %v2428
        %v2432 = vlaneseq
        %v2433 = vshrl.u32 %v2432, 7
        %v2434 = vsub.s32 0, %v2433
        %v2435 = vrot.slane %v2430, %v2434
        %v2436 = vmul.bf16 %v2422, %v2435
        %v2437 = vmul.bf16 %v2425, %v2435
        %s2438 = scalar_lea.vmem [#allocation16], 48
        %v2439 = vld [vmem:[%s2438] sm:$0xf]
        %v2440 = vld [vmem:[%s2438 + $0x4] sm:$0xf]
        %v2441 = vld [vmem:[%s2438 + $0x8] sm:$0xf]
        %v2442 = vld [vmem:[%s2438 + $0xc] sm:$0xf]
        %v2447 = vunpack.c.l.b16 %v2439
        %v2448 = vunpack.c.l.b16 %v2440
        %v2449 = vunpack.c.l.b16 %v2441
        %v2450 = vunpack.c.l.b16 %v2442
        %v2451 = vpack.c.b16 %v2448, %v2447
        %v2452 = vpack.c.b16 %v2450, %v2449
        %v2454 = vsel %vm1102, %v2451, 0
        %v2457 = vsel %vm1102, %v2452, 0
        %2459 = vmatprep.subr.bf16.mxu0 0
        %2460 = vmatpush1.bf16.msra.mxu0 %v2436
        %2461 = vmatprep.subr.bf16.mxu0 0
        %2462 = vmatpush1.bf16.msra.mxu0 %v2437
        %2463 = vmatprep.subr.bf16.mxu0 0
        %2464 = vmatpush1.bf16.msra.mxu0 0
        %2465 = vmatprep.subr.bf16.mxu0 0
        %2466 = vmatpush1.bf16.msra.mxu0 0
        %2467 = vmatprep.subr.bf16.mxu0 0
        %2468 = vmatpush1.bf16.msra.mxu0 0
        %2469 = vmatprep.subr.bf16.mxu0 0
        %2470 = vmatpush1.bf16.msra.mxu0 0
        %2471 = vmatprep.subr.bf16.mxu0 0
        %2472 = vmatpush1.bf16.msra.mxu0 0
        %2473 = vmatprep.subr.bf16.mxu0 0
        %2474 = vmatpush1.bf16.msra.mxu0 0
        %2475 = vmatprep.subr.bf16.mxu0 0
        %2476 = vmatpush1.bf16.msra.mxu0 0
        %2477 = vmatprep.subr.bf16.mxu0 0
        %2478 = vmatpush1.bf16.msra.mxu0 0
        %2479 = vmatprep.subr.bf16.mxu0 0
        %2480 = vmatpush1.bf16.msra.mxu0 0
        %2481 = vmatprep.subr.bf16.mxu0 0
        %2482 = vmatpush1.bf16.msra.mxu0 0
        %2483 = vmatprep.subr.bf16.mxu0 0
        %2484 = vmatpush1.bf16.msra.mxu0 0
        %2485 = vmatprep.subr.bf16.mxu0 0
        %2486 = vmatpush1.bf16.msra.mxu0 0
        %2487 = vmatprep.subr.bf16.mxu0 0
        %2488 = vmatpush1.bf16.msra.mxu0 0
        %2489 = vmatprep.subr.bf16.mxu0 0
        %2490 = vmatpush1.bf16.msra.mxu0 0
        %2491 = vmatprep.mubr.bf16.mxu0 0
        %2492 = vmatmul.mubr.bf16.gmra.mrb[0].mxu0 %v2454
        %v2493 = vpop.f32.mrb[0].mxu0
        %v2494 = vadd.f32 0.0, %v2493
        %v2495 = vpop.f32.mrb[0].mxu0
        %v2496 = vpop.f32.mrb[0].mxu0
        %v2497 = vadd.f32 0.0, %v2496
        %v2498 = vpop.f32.mrb[0].mxu0
        %2499 = vmatprep.mubr.bf16.mxu0 0
        %2500 = vmatmul.mubr.bf16.gmra.mrb[0].mxu0 %v2457
        %v2501 = vpop.f32.mrb[0].mxu0
        %v2502 = vadd.f32 0.0, %v2501
        %v2503 = vpop.f32.mrb[0].mxu0
        %v2504 = vpop.f32.mrb[0].mxu0
        %v2505 = vadd.f32 0.0, %v2504
        %v2506 = vpop.f32.mrb[0].mxu0
        %2507 = vdwg.mxu0
        %v2508 = vadd.f32 %v2413, %v2494
        %v2509 = vadd.f32 %v2414, %v2497
        %v2510 = vadd.f32 %v2415, %v2502
        %v2511 = vadd.f32 %v2416, %v2505
        %s2512 = scalar_lea.vmem [#allocation16], 64
        %v2513 = vld [vmem:[%s2512] sm:$0xf]
        %v2514 = vld [vmem:[%s2512 + $0x4] sm:$0xf]
        %v2515 = vld [vmem:[%s2512 + $0x8] sm:$0xf]
        %v2516 = vld [vmem:[%s2512 + $0xc] sm:$0xf]
        %v2521 = vunpack.c.l.b16 %v2513
        %v2522 = vunpack.c.l.b16 %v2514
        %v2523 = vunpack.c.l.b16 %v2515
        %v2524 = vunpack.c.l.b16 %v2516
        %v2525 = vpack.c.b16 %v2522, %v2521
        %v2526 = vpack.c.b16 %v2524, %v2523
        %v2528 = vsel %vm1102, %v2525, 0
        %v2531 = vsel %vm1102, %v2526, 0
        %2533 = vmatprep.subr.bf16.mxu0 0
        %2534 = vmatpush1.bf16.msra.mxu0 %v2148
        %2535 = vmatprep.subr.bf16.mxu0 0
        %2536 = vmatpush1.bf16.msra.mxu0 %v2149
        %2537 = vmatprep.subr.bf16.mxu0 0
        %2538 = vmatpush1.bf16.msra.mxu0 0
        %2539 = vmatprep.subr.bf16.mxu0 0
        %2540 = vmatpush1.bf16.msra.mxu0 0
        %2541 = vmatprep.subr.bf16.mxu0 0
        %2542 = vmatpush1.bf16.msra.mxu0 0
        %2543 = vmatprep.subr.bf16.mxu0 0
        %2544 = vmatpush1.bf16.msra.mxu0 0
        %2545 = vmatprep.subr.bf16.mxu0 0
        %2546 = vmatpush1.bf16.msra.mxu0 0
        %2547 = vmatprep.subr.bf16.mxu0 0
        %2548 = vmatpush1.bf16.msra.mxu0 0
        %2549 = vmatprep.subr.bf16.mxu0 0
        %2550 = vmatpush1.bf16.msra.mxu0 0
        %2551 = vmatprep.subr.bf16.mxu0 0
        %2552 = vmatpush1.bf16.msra.mxu0 0
        %2553 = vmatprep.subr.bf16.mxu0 0
        %2554 = vmatpush1.bf16.msra.mxu0 0
        %2555 = vmatprep.subr.bf16.mxu0 0
        %2556 = vmatpush1.bf16.msra.mxu0 0
        %2557 = vmatprep.subr.bf16.mxu0 0
        %2558 = vmatpush1.bf16.msra.mxu0 0
        %2559 = vmatprep.subr.bf16.mxu0 0
        %2560 = vmatpush1.bf16.msra.mxu0 0
        %2561 = vmatprep.subr.bf16.mxu0 0
        %2562 = vmatpush1.bf16.msra.mxu0 0
        %2563 = vmatprep.subr.bf16.mxu0 0
        %2564 = vmatpush1.bf16.msra.mxu0 0
        %2565 = vmatprep.mubr.bf16.mxu0 0
        %2566 = vmatmul.mubr.bf16.gmra.mrb[0].mxu0 %v2528
        %v2567 = vpop.f32.mrb[0].mxu0
        %v2568 = vadd.f32 0.0, %v2567
        %v2569 = vpop.f32.mrb[0].mxu0
        %v2570 = vpop.f32.mrb[0].mxu0
        %v2571 = vadd.f32 0.0, %v2570
        %v2572 = vpop.f32.mrb[0].mxu0
        %2573 = vmatprep.mubr.bf16.mxu0 0
        %2574 = vmatmul.mubr.bf16.gmra.mrb[0].mxu0 %v2531
        %v2575 = vpop.f32.mrb[0].mxu0
        %v2576 = vadd.f32 0.0, %v2575
        %v2577 = vpop.f32.mrb[0].mxu0
        %v2578 = vpop.f32.mrb[0].mxu0
        %v2579 = vadd.f32 0.0, %v2578
        %v2580 = vpop.f32.mrb[0].mxu0
        %2581 = vdwg.mxu0
        %v2582 = vadd.f32 %v2508, %v2568
        %v2583 = vadd.f32 %v2509, %v2571
        %v2584 = vadd.f32 %v2510, %v2576
        %v2585 = vadd.f32 %v2511, %v2579
        %2586 = vrot.lane.b32.xlu0 %v2148, 127
        %v2587 = vpop.permute.xlu0 %2586
        %2588 = vrot.lane.b32.xlu0 %v2149, 127
        %v2589 = vpop.permute.xlu0 %2588
        %vm2590 = vcmask 121856
        %v2592 = vsel %vm2590, %v2587, 0
        %v2595 = vsel %vm2590, %v2589, 0
        %s2597 = scalar_lea.vmem [#allocation19], 5
        %v2598 = vld [vmem:[%s2597] sm:$0x1]
        %v2600 = vpack.i.b16 %v2598, %v2598
        %v2602 = vlaneseq
        %v2603 = vshrl.u32 %v2602, 7
        %v2604 = vsub.s32 0, %v2603
        %v2605 = vrot.slane %v2600, %v2604
        %v2606 = vmul.bf16 %v2592, %v2605
        %v2607 = vmul.bf16 %v2595, %v2605
        %s2608 = scalar_lea.vmem [#allocation16], 80
        %v2609 = vld [vmem:[%s2608] sm:$0xf]
        %v2610 = vld [vmem:[%s2608 + $0x4] sm:$0xf]
        %v2611 = vld [vmem:[%s2608 + $0x8] sm:$0xf]
        %v2612 = vld [vmem:[%s2608 + $0xc] sm:$0xf]
        %v2617 = vunpack.c.l.b16 %v2609
        %v2618 = vunpack.c.l.b16 %v2610
        %v2619 = vunpack.c.l.b16 %v2611
        %v2620 = vunpack.c.l.b16 %v2612
        %v2621 = vpack.c.b16 %v2618, %v2617
        %v2622 = vpack.c.b16 %v2620, %v2619
        %v2624 = vsel %vm1102, %v2621, 0
        %v2627 = vsel %vm1102, %v2622, 0
        %2629 = vmatprep.subr.bf16.mxu0 0
        %2630 = vmatpush1.bf16.msra.mxu0 %v2606
        %2631 = vmatprep.subr.bf16.mxu0 0
        %2632 = vmatpush1.bf16.msra.mxu0 %v2607
        %2633 = vmatprep.subr.bf16.mxu0 0
        %2634 = vmatpush1.bf16.msra.mxu0 0
        %2635 = vmatprep.subr.bf16.mxu0 0
        %2636 = vmatpush1.bf16.msra.mxu0 0
        %2637 = vmatprep.subr.bf16.mxu0 0
        %2638 = vmatpush1.bf16.msra.mxu0 0
        %2639 = vmatprep.subr.bf16.mxu0 0
        %2640 = vmatpush1.bf16.msra.mxu0 0
        %2641 = vmatprep.subr.bf16.mxu0 0
        %2642 = vmatpush1.bf16.msra.mxu0 0
        %2643 = vmatprep.subr.bf16.mxu0 0
        %2644 = vmatpush1.bf16.msra.mxu0 0
        %2645 = vmatprep.subr.bf16.mxu0 0
        %2646 = vmatpush1.bf16.msra.mxu0 0
        %2647 = vmatprep.subr.bf16.mxu0 0
        %2648 = vmatpush1.bf16.msra.mxu0 0
        %2649 = vmatprep.subr.bf16.mxu0 0
        %2650 = vmatpush1.bf16.msra.mxu0 0
        %2651 = vmatprep.subr.bf16.mxu0 0
        %2652 = vmatpush1.bf16.msra.mxu0 0
        %2653 = vmatprep.subr.bf16.mxu0 0
        %2654 = vmatpush1.bf16.msra.mxu0 0
        %2655 = vmatprep.subr.bf16.mxu0 0
        %2656 = vmatpush1.bf16.msra.mxu0 0
        %2657 = vmatprep.subr.bf16.mxu0 0
        %2658 = vmatpush1.bf16.msra.mxu0 0
        %2659 = vmatprep.subr.bf16.mxu0 0
        %2660 = vmatpush1.bf16.msra.mxu0 0
        %2661 = vmatprep.mubr.bf16.mxu0 0
        %2662 = vmatmul.mubr.bf16.gmra.mrb[0].mxu0 %v2624
        %v2663 = vpop.f32.mrb[0].mxu0
        %v2664 = vadd.f32 0.0, %v2663
        %v2665 = vpop.f32.mrb[0].mxu0
        %v2666 = vpop.f32.mrb[0].mxu0
        %v2667 = vadd.f32 0.0, %v2666
        %v2668 = vpop.f32.mrb[0].mxu0
        %2669 = vmatprep.mubr.bf16.mxu0 0
        %2670 = vmatmul.mubr.bf16.gmra.mrb[0].mxu0 %v2627
        %v2671 = vpop.f32.mrb[0].mxu0
        %v2672 = vadd.f32 0.0, %v2671
        %v2673 = vpop.f32.mrb[0].mxu0
        %v2674 = vpop.f32.mrb[0].mxu0
        %v2675 = vadd.f32 0.0, %v2674
        %v2676 = vpop.f32.mrb[0].mxu0
        %2677 = vdwg.mxu0
        %v2678 = vadd.f32 %v2582, %v2664
        %v2679 = vadd.f32 %v2583, %v2667
        %v2680 = vadd.f32 %v2584, %v2672
        %v2681 = vadd.f32 %v2585, %v2675
        %2682 = vrot.lane.b32.xlu0 %v2148, 125
        %v2683 = vpop.permute.xlu0 %2682
        %2684 = vrot.lane.b32.xlu0 %v2149, 125
        %v2685 = vpop.permute.xlu0 %2684
        %vm2686 = vcmask 105472
        %v2688 = vsel %vm2686, %v2683, 0
        %v2691 = vsel %vm2686, %v2685, 0
        %s2693 = scalar_lea.vmem [#allocation19], 6
        %v2694 = vld [vmem:[%s2693] sm:$0x1]
        %v2696 = vpack.i.b16 %v2694, %v2694
        %v2698 = vlaneseq
        %v2699 = vshrl.u32 %v2698, 7
        %v2700 = vsub.s32 0, %v2699
        %v2701 = vrot.slane %v2696, %v2700
        %v2702 = vmul.bf16 %v2688, %v2701
        %v2703 = vmul.bf16 %v2691, %v2701
        %s2704 = scalar_lea.vmem [#allocation16], 96
        %v2705 = vld [vmem:[%s2704] sm:$0xf]
        %v2706 = vld [vmem:[%s2704 + $0x4] sm:$0xf]
        %v2707 = vld [vmem:[%s2704 + $0x8] sm:$0xf]
        %v2708 = vld [vmem:[%s2704 + $0xc] sm:$0xf]
        %v2713 = vunpack.c.l.b16 %v2705
        %v2714 = vunpack.c.l.b16 %v2706
        %v2715 = vunpack.c.l.b16 %v2707
        %v2716 = vunpack.c.l.b16 %v2708
        %v2717 = vpack.c.b16 %v2714, %v2713
        %v2718 = vpack.c.b16 %v2716, %v2715
        %v2720 = vsel %vm1102, %v2717, 0
        %v2723 = vsel %vm1102, %v2718, 0
        %2725 = vmatprep.subr.bf16.mxu0 0
        %2726 = vmatpush1.bf16.msra.mxu0 %v2702
        %2727 = vmatprep.subr.bf16.mxu0 0
        %2728 = vmatpush1.bf16.msra.mxu0 %v2703
        %2729 = vmatprep.subr.bf16.mxu0 0
        %2730 = vmatpush1.bf16.msra.mxu0 0
        %2731 = vmatprep.subr.bf16.mxu0 0
        %2732 = vmatpush1.bf16.msra.mxu0 0
        %2733 = vmatprep.subr.bf16.mxu0 0
        %2734 = vmatpush1.bf16.msra.mxu0 0
        %2735 = vmatprep.subr.bf16.mxu0 0
        %2736 = vmatpush1.bf16.msra.mxu0 0
        %2737 = vmatprep.subr.bf16.mxu0 0
        %2738 = vmatpush1.bf16.msra.mxu0 0
        %2739 = vmatprep.subr.bf16.mxu0 0
        %2740 = vmatpush1.bf16.msra.mxu0 0
        %2741 = vmatprep.subr.bf16.mxu0 0
        %2742 = vmatpush1.bf16.msra.mxu0 0
        %2743 = vmatprep.subr.bf16.mxu0 0
        %2744 = vmatpush1.bf16.msra.mxu0 0
        %2745 = vmatprep.subr.bf16.mxu0 0
        %2746 = vmatpush1.bf16.msra.mxu0 0
        %2747 = vmatprep.subr.bf16.mxu0 0
        %2748 = vmatpush1.bf16.msra.mxu0 0
        %2749 = vmatprep.subr.bf16.mxu0 0
        %2750 = vmatpush1.bf16.msra.mxu0 0
        %2751 = vmatprep.subr.bf16.mxu0 0
        %2752 = vmatpush1.bf16.msra.mxu0 0
        %2753 = vmatprep.subr.bf16.mxu0 0
        %2754 = vmatpush1.bf16.msra.mxu0 0
        %2755 = vmatprep.subr.bf16.mxu0 0
        %2756 = vmatpush1.bf16.msra.mxu0 0
        %2757 = vmatprep.mubr.bf16.mxu0 0
        %2758 = vmatmul.mubr.bf16.gmra.mrb[0].mxu0 %v2720
        %v2759 = vpop.f32.mrb[0].mxu0
        %v2760 = vadd.f32 0.0, %v2759
        %v2761 = vpop.f32.mrb[0].mxu0
        %v2762 = vpop.f32.mrb[0].mxu0
        %v2763 = vadd.f32 0.0, %v2762
        %v2764 = vpop.f32.mrb[0].mxu0
        %2765 = vmatprep.mubr.bf16.mxu0 0
        %2766 = vmatmul.mubr.bf16.gmra.mrb[0].mxu0 %v2723
        %v2767 = vpop.f32.mrb[0].mxu0
        %v2768 = vadd.f32 0.0, %v2767
        %v2769 = vpop.f32.mrb[0].mxu0
        %v2770 = vpop.f32.mrb[0].mxu0
        %v2771 = vadd.f32 0.0, %v2770
        %v2772 = vpop.f32.mrb[0].mxu0
        %2773 = vdwg.mxu0
        %v2774 = vadd.f32 %v2678, %v2760
        %v2775 = vadd.f32 %v2679, %v2763
        %v2776 = vadd.f32 %v2680, %v2768
        %v2777 = vadd.f32 %v2681, %v2771
        %2778 = vrot.lane.b32.xlu0 %v2148, 124
        %v2779 = vpop.permute.xlu0 %2778
        %2780 = vrot.lane.b32.xlu0 %v2149, 124
        %v2781 = vpop.permute.xlu0 %2780
        %vm2782 = vcmask 97280
        %v2784 = vsel %vm2782, %v2779, 0
        %v2787 = vsel %vm2782, %v2781, 0
        %s2789 = scalar_lea.vmem [#allocation16], 112
        %v2790 = vld [vmem:[%s2789] sm:$0xf]
        %v2791 = vld [vmem:[%s2789 + $0x4] sm:$0xf]
        %v2792 = vld [vmem:[%s2789 + $0x8] sm:$0xf]
        %v2793 = vld [vmem:[%s2789 + $0xc] sm:$0xf]
        %v2798 = vunpack.c.l.b16 %v2790
        %v2799 = vunpack.c.l.b16 %v2791
        %v2800 = vunpack.c.l.b16 %v2792
        %v2801 = vunpack.c.l.b16 %v2793
        %v2802 = vpack.c.b16 %v2799, %v2798
        %v2803 = vpack.c.b16 %v2801, %v2800
        %v2805 = vsel %vm1102, %v2802, 0
        %v2808 = vsel %vm1102, %v2803, 0
        %2810 = vmatprep.subr.bf16.mxu0 0
        %2811 = vmatpush1.bf16.msra.mxu0 %v2784
        %2812 = vmatprep.subr.bf16.mxu0 0
        %2813 = vmatpush1.bf16.msra.mxu0 %v2787
        %2814 = vmatprep.subr.bf16.mxu0 0
        %2815 = vmatpush1.bf16.msra.mxu0 0
        %2816 = vmatprep.subr.bf16.mxu0 0
        %2817 = vmatpush1.bf16.msra.mxu0 0
        %2818 = vmatprep.subr.bf16.mxu0 0
        %2819 = vmatpush1.bf16.msra.mxu0 0
        %2820 = vmatprep.subr.bf16.mxu0 0
        %2821 = vmatpush1.bf16.msra.mxu0 0
        %2822 = vmatprep.subr.bf16.mxu0 0
        %2823 = vmatpush1.bf16.msra.mxu0 0
        %2824 = vmatprep.subr.bf16.mxu0 0
        %2825 = vmatpush1.bf16.msra.mxu0 0
        %2826 = vmatprep.subr.bf16.mxu0 0
        %2827 = vmatpush1.bf16.msra.mxu0 0
        %2828 = vmatprep.subr.bf16.mxu0 0
        %2829 = vmatpush1.bf16.msra.mxu0 0
        %2830 = vmatprep.subr.bf16.mxu0 0
        %2831 = vmatpush1.bf16.msra.mxu0 0
        %2832 = vmatprep.subr.bf16.mxu0 0
        %2833 = vmatpush1.bf16.msra.mxu0 0
        %2834 = vmatprep.subr.bf16.mxu0 0
        %2835 = vmatpush1.bf16.msra.mxu0 0
        %2836 = vmatprep.subr.bf16.mxu0 0
        %2837 = vmatpush1.bf16.msra.mxu0 0
        %2838 = vmatprep.subr.bf16.mxu0 0
        %2839 = vmatpush1.bf16.msra.mxu0 0
        %2840 = vmatprep.subr.bf16.mxu0 0
        %2841 = vmatpush1.bf16.msra.mxu0 0
        %2842 = vmatprep.mubr.bf16.mxu0 0
        %2843 = vmatmul.mubr.bf16.gmra.mrb[0].mxu0 %v2805
        %v2844 = vpop.f32.mrb[0].mxu0
        %v2845 = vadd.f32 0.0, %v2844
        %v2846 = vpop.f32.mrb[0].mxu0
        %v2847 = vpop.f32.mrb[0].mxu0
        %v2848 = vadd.f32 0.0, %v2847
        %v2849 = vpop.f32.mrb[0].mxu0
        %2850 = vmatprep.mubr.bf16.mxu0 0
        %2851 = vmatmul.mubr.bf16.gmra.mrb[0].mxu0 %v2808
        %v2852 = vpop.f32.mrb[0].mxu0
        %v2853 = vadd.f32 0.0, %v2852
        %v2854 = vpop.f32.mrb[0].mxu0
        %v2855 = vpop.f32.mrb[0].mxu0
        %v2856 = vadd.f32 0.0, %v2855
        %v2857 = vpop.f32.mrb[0].mxu0
        %2858 = vdwg.mxu0
        %v2859 = vadd.f32 %v2774, %v2845
        %v2860 = vadd.f32 %v2775, %v2848
        %v2861 = vadd.f32 %v2776, %v2853
        %v2862 = vadd.f32 %v2777, %v2856
        %2863 = vrot.lane.b32.xlu0 %v2148, 123
        %v2864 = vpop.permute.xlu0 %2863
        %2865 = vrot.lane.b32.xlu0 %v2149, 123
        %v2866 = vpop.permute.xlu0 %2865
        %vm2867 = vcmask 89088
        %v2869 = vsel %vm2867, %v2864, 0
        %v2872 = vsel %vm2867, %v2866, 0
        %s2874 = scalar_lea.vmem [#allocation19], 8
        %v2875 = vld [vmem:[%s2874] sm:$0x1]
        %v2877 = vpack.i.b16 %v2875, %v2875
        %v2879 = vlaneseq
        %v2880 = vshrl.u32 %v2879, 7
        %v2881 = vsub.s32 0, %v2880
        %v2882 = vrot.slane %v2877, %v2881
        %v2883 = vmul.bf16 %v2869, %v2882
        %v2884 = vmul.bf16 %v2872, %v2882
        %s2885 = scalar_lea.vmem [#allocation16], 128
        %v2886 = vld [vmem:[%s2885] sm:$0xf]
        %v2887 = vld [vmem:[%s2885 + $0x4] sm:$0xf]
        %v2888 = vld [vmem:[%s2885 + $0x8] sm:$0xf]
        %v2889 = vld [vmem:[%s2885 + $0xc] sm:$0xf]
        %v2894 = vunpack.c.l.b16 %v2886
        %v2895 = vunpack.c.l.b16 %v2887
        %v2896 = vunpack.c.l.b16 %v2888
        %v2897 = vunpack.c.l.b16 %v2889
        %v2898 = vpack.c.b16 %v2895, %v2894
        %v2899 = vpack.c.b16 %v2897, %v2896
        %v2901 = vsel %vm1102, %v2898, 0
        %v2904 = vsel %vm1102, %v2899, 0
        %2906 = vmatprep.subr.bf16.mxu0 0
        %2907 = vmatpush1.bf16.msra.mxu0 %v2883
        %2908 = vmatprep.subr.bf16.mxu0 0
        %2909 = vmatpush1.bf16.msra.mxu0 %v2884
        %2910 = vmatprep.subr.bf16.mxu0 0
        %2911 = vmatpush1.bf16.msra.mxu0 0
        %2912 = vmatprep.subr.bf16.mxu0 0
        %2913 = vmatpush1.bf16.msra.mxu0 0
        %2914 = vmatprep.subr.bf16.mxu0 0
        %2915 = vmatpush1.bf16.msra.mxu0 0
        %2916 = vmatprep.subr.bf16.mxu0 0
        %2917 = vmatpush1.bf16.msra.mxu0 0
        %2918 = vmatprep.subr.bf16.mxu0 0
        %2919 = vmatpush1.bf16.msra.mxu0 0
        %2920 = vmatprep.subr.bf16.mxu0 0
        %2921 = vmatpush1.bf16.msra.mxu0 0
        %2922 = vmatprep.subr.bf16.mxu0 0
        %2923 = vmatpush1.bf16.msra.mxu0 0
        %2924 = vmatprep.subr.bf16.mxu0 0
        %2925 = vmatpush1.bf16.msra.mxu0 0
        %2926 = vmatprep.subr.bf16.mxu0 0
        %2927 = vmatpush1.bf16.msra.mxu0 0
        %2928 = vmatprep.subr.bf16.mxu0 0
        %2929 = vmatpush1.bf16.msra.mxu0 0
        %2930 = vmatprep.subr.bf16.mxu0 0
        %2931 = vmatpush1.bf16.msra.mxu0 0
        %2932 = vmatprep.subr.bf16.mxu0 0
        %2933 = vmatpush1.bf16.msra.mxu0 0
        %2934 = vmatprep.subr.bf16.mxu0 0
        %2935 = vmatpush1.bf16.msra.mxu0 0
        %2936 = vmatprep.subr.bf16.mxu0 0
        %2937 = vmatpush1.bf16.msra.mxu0 0
        %2938 = vmatprep.mubr.bf16.mxu0 0
        %2939 = vmatmul.mubr.bf16.gmra.mrb[0].mxu0 %v2901
        %v2940 = vpop.f32.mrb[0].mxu0
        %v2941 = vadd.f32 0.0, %v2940
        %v2942 = vpop.f32.mrb[0].mxu0
        %v2943 = vpop.f32.mrb[0].mxu0
        %v2944 = vadd.f32 0.0, %v2943
        %v2945 = vpop.f32.mrb[0].mxu0
        %2946 = vmatprep.mubr.bf16.mxu0 0
        %2947 = vmatmul.mubr.bf16.gmra.mrb[0].mxu0 %v2904
        %v2948 = vpop.f32.mrb[0].mxu0
        %v2949 = vadd.f32 0.0, %v2948
        %v2950 = vpop.f32.mrb[0].mxu0
        %v2951 = vpop.f32.mrb[0].mxu0
        %v2952 = vadd.f32 0.0, %v2951
        %v2953 = vpop.f32.mrb[0].mxu0
        %2954 = vdwg.mxu0
        %v2955 = vadd.f32 %v2859, %v2941
        %v2956 = vadd.f32 %v2860, %v2944
        %v2957 = vadd.f32 %v2861, %v2949
        %v2958 = vadd.f32 %v2862, %v2952
        %v2959 = vld [vmem:[#allocation17] sm:$0xff]
        %v2960 = vld [vmem:[#allocation17 + $0x8] sm:$0xff]
        %v2961 = vld [vmem:[#allocation17 + $0x10] sm:$0xff]
        %v2962 = vld [vmem:[#allocation17 + $0x18] sm:$0xff]
        %2964 = vset.pattern.permute.xlu0 0
        %2965 = vperm.xlu0 %2964, %v2959
        %v2966 = vpop.permute.xlu0 %2965
        %2969 = vset.pattern.permute.xlu0 0
        %2970 = vperm.xlu0 %2969, %v2960
        %v2971 = vpop.permute.xlu0 %2970
        %2974 = vset.pattern.permute.xlu0 0
        %2975 = vperm.xlu0 %2974, %v2961
        %v2976 = vpop.permute.xlu0 %2975
        %2979 = vset.pattern.permute.xlu0 0
        %2980 = vperm.xlu0 %2979, %v2962
        %v2981 = vpop.permute.xlu0 %2980
        %v2983 = vadd.f32 %v2955, %v2966
        %v2984 = vadd.f32 %v2956, %v2971
        %v2985 = vadd.f32 %v2957, %v2976
        %v2986 = vadd.f32 %v2958, %v2981
        %v2987 = vld [vmem:[%s944] sm:$0xf]
        %v2988 = vld [vmem:[%s944 + $0x4] sm:$0xf]
        %v2989 = vld [vmem:[#allocation23] sm:$0xf]
        %v2990 = vld [vmem:[#allocation23 + $0x4] sm:$0xf]
        %v2991 = vld [vmem:[#allocation23 + $0x8] sm:$0xf]
        %v2992 = vld [vmem:[#allocation23 + $0xc] sm:$0xf]
        %v2993 = vld [vmem:[#allocation24] sm:$0xff]
        %v2994 = vld [vmem:[#allocation24 + $0x8] sm:$0xff]
        %v2995 = vld [vmem:[#allocation24 + $0x10] sm:$0xff]
        %v2996 = vld [vmem:[#allocation24 + $0x18] sm:$0xff]
        %2998 = vset.pattern.permute.xlu0 0
        %2999 = vperm.xlu0 %2998, %v2993
        %v3000 = vpop.permute.xlu0 %2999
        %3003 = vset.pattern.permute.xlu0 0
        %3004 = vperm.xlu0 %3003, %v2994
        %v3005 = vpop.permute.xlu0 %3004
        %3008 = vset.pattern.permute.xlu0 0
        %3009 = vperm.xlu0 %3008, %v2995
        %v3010 = vpop.permute.xlu0 %3009
        %3013 = vset.pattern.permute.xlu0 0
        %3014 = vperm.xlu0 %3013, %v2996
        %v3015 = vpop.permute.xlu0 %3014
        %v3021 = vunpack.c.l.b16 %v2989
        %v3022 = vunpack.c.l.b16 %v2990
        %v3023 = vunpack.c.l.b16 %v2991
        %v3024 = vunpack.c.l.b16 %v2992
        %v3025 = vpack.c.b16 %v3022, %v3021
        %v3026 = vpack.c.b16 %v3024, %v3023
        %v3029 = vunpack.c.l.b16 %v2987
        %v3030 = vunpack.c.l.b16 %v2988
        %v3031 = vpack.c.b16 %v3030, %v3029
        %vm3033 = vcmask 130048
        %v3035 = vsel %vm3033, %v3025, 0
        %v3038 = vsel %vm3033, %v3026, 0
        %3040 = vmatprep.subr.bf16.mxu0 0
        %3041 = vmatpush1.bf16.msra.mxu0 %v3031
        %3042 = vmatprep.subr.bf16.mxu0 0
        %3043 = vmatpush1.bf16.msra.mxu0 0
        %3044 = vmatprep.subr.bf16.mxu0 0
        %3045 = vmatpush1.bf16.msra.mxu0 0
        %3046 = vmatprep.subr.bf16.mxu0 0
        %3047 = vmatpush1.bf16.msra.mxu0 0
        %3048 = vmatprep.subr.bf16.mxu0 0
        %3049 = vmatpush1.bf16.msra.mxu0 0
        %3050 = vmatprep.subr.bf16.mxu0 0
        %3051 = vmatpush1.bf16.msra.mxu0 0
        %3052 = vmatprep.subr.bf16.mxu0 0
        %3053 = vmatpush1.bf16.msra.mxu0 0
        %3054 = vmatprep.subr.bf16.mxu0 0
        %3055 = vmatpush1.bf16.msra.mxu0 0
        %3056 = vmatprep.subr.bf16.mxu0 0
        %3057 = vmatpush1.bf16.msra.mxu0 0
        %3058 = vmatprep.subr.bf16.mxu0 0
        %3059 = vmatpush1.bf16.msra.mxu0 0
        %3060 = vmatprep.subr.bf16.mxu0 0
        %3061 = vmatpush1.bf16.msra.mxu0 0
        %3062 = vmatprep.subr.bf16.mxu0 0
        %3063 = vmatpush1.bf16.msra.mxu0 0
        %3064 = vmatprep.subr.bf16.mxu0 0
        %3065 = vmatpush1.bf16.msra.mxu0 0
        %3066 = vmatprep.subr.bf16.mxu0 0
        %3067 = vmatpush1.bf16.msra.mxu0 0
        %3068 = vmatprep.subr.bf16.mxu0 0
        %3069 = vmatpush1.bf16.msra.mxu0 0
        %3070 = vmatprep.subr.bf16.mxu0 0
        %3071 = vmatpush1.bf16.msra.mxu0 0
        %3072 = vmatprep.mubr.bf16.mxu0 0
        %3073 = vmatmul.mubr.bf16.gmra.mrb[0].mxu0 %v3035
        %v3074 = vpop.f32.mrb[0].mxu0
        %v3075 = vadd.f32 %v3000, %v3074
        %v3076 = vpop.f32.mrb[0].mxu0
        %v3077 = vpop.f32.mrb[0].mxu0
        %v3078 = vadd.f32 %v3005, %v3077
        %v3079 = vpop.f32.mrb[0].mxu0
        %3080 = vmatprep.mubr.bf16.mxu0 0
        %3081 = vmatmul.mubr.bf16.gmra.mrb[0].mxu0 %v3038
        %v3082 = vpop.f32.mrb[0].mxu0
        %v3083 = vadd.f32 %v3010, %v3082
        %v3084 = vpop.f32.mrb[0].mxu0
        %v3085 = vpop.f32.mrb[0].mxu0
        %v3086 = vadd.f32 %v3015, %v3085
        %v3087 = vpop.f32.mrb[0].mxu0
        %3088 = vdwg.mxu0
        %v3089 = vld [vmem:[#allocation28] sm:$0xf]
        %v3090 = vld [vmem:[#allocation28 + $0x4] sm:$0xf]
        %v3091 = vpack.c.bf16 %v2984, %v2983
        %v3092 = vpack.c.bf16 %v2986, %v2985
        %v3095 = vunpack.c.l.b16 %v3089
        %v3096 = vunpack.c.l.b16 %v3090
        %v3097 = vpack.c.b16 %v3096, %v3095
        %v3100 = vsel %vm3033, %v3091, 0
        %v3103 = vsel %vm3033, %v3092, 0
        %3105 = vmatprep.subr.bf16.mxu0 0
        %3106 = vmatpush1.bf16.msra.mxu0 %v3097
        %3107 = vmatprep.subr.bf16.mxu0 0
        %3108 = vmatpush1.bf16.msra.mxu0 0
        %3109 = vmatprep.subr.bf16.mxu0 0
        %3110 = vmatpush1.bf16.msra.mxu0 0
        %3111 = vmatprep.subr.bf16.mxu0 0
        %3112 = vmatpush1.bf16.msra.mxu0 0
        %3113 = vmatprep.subr.bf16.mxu0 0
        %3114 = vmatpush1.bf16.msra.mxu0 0
        %3115 = vmatprep.subr.bf16.mxu0 0
        %3116 = vmatpush1.bf16.msra.mxu0 0
        %3117 = vmatprep.subr.bf16.mxu0 0
        %3118 = vmatpush1.bf16.msra.mxu0 0
        %3119 = vmatprep.subr.bf16.mxu0 0
        %3120 = vmatpush1.bf16.msra.mxu0 0
        %3121 = vmatprep.subr.bf16.mxu0 0
        %3122 = vmatpush1.bf16.msra.mxu0 0
        %3123 = vmatprep.subr.bf16.mxu0 0
        %3124 = vmatpush1.bf16.msra.mxu0 0
        %3125 = vmatprep.subr.bf16.mxu0 0
        %3126 = vmatpush1.bf16.msra.mxu0 0
        %3127 = vmatprep.subr.bf16.mxu0 0
        %3128 = vmatpush1.bf16.msra.mxu0 0
        %3129 = vmatprep.subr.bf16.mxu0 0
        %3130 = vmatpush1.bf16.msra.mxu0 0
        %3131 = vmatprep.subr.bf16.mxu0 0
        %3132 = vmatpush1.bf16.msra.mxu0 0
        %3133 = vmatprep.subr.bf16.mxu0 0
        %3134 = vmatpush1.bf16.msra.mxu0 0
        %3135 = vmatprep.subr.bf16.mxu0 0
        %3136 = vmatpush1.bf16.msra.mxu0 0
        %3137 = vmatprep.mubr.bf16.mxu0 0
        %3138 = vmatmul.mubr.bf16.gmra.mrb[0].mxu0 %v3100
        %v3139 = vpop.f32.mrb[0].mxu0
        %v3140 = vadd.f32 %v3075, %v3139
        %v3141 = vpop.f32.mrb[0].mxu0
        %v3142 = vpop.f32.mrb[0].mxu0
        %v3143 = vadd.f32 %v3078, %v3142
        %v3144 = vpop.f32.mrb[0].mxu0
        %3145 = vmatprep.mubr.bf16.mxu0 0
        %3146 = vmatmul.mubr.bf16.gmra.mrb[0].mxu0 %v3103
        %v3147 = vpop.f32.mrb[0].mxu0
        %v3148 = vadd.f32 %v3083, %v3147
        %v3149 = vpop.f32.mrb[0].mxu0
        %v3150 = vpop.f32.mrb[0].mxu0
        %v3151 = vadd.f32 %v3086, %v3150
        %v3152 = vpop.f32.mrb[0].mxu0
        %3153 = vdwg.mxu0
        %v3154 = vpack.c.bf16 %v3143, %v3140
        %v3155 = vpack.c.bf16 %v3151, %v3148
        %3158 = vrot.lane.b32.xlu0 %v3154, 9
        %v3159 = vpop.permute.xlu0 %3158
        %3160 = vrot.lane.b32.xlu0 %v3155, 9
        %v3161 = vpop.permute.xlu0 %3160
        %vm3162 = vcmask 72704
        %v3164 = vsel %vm3162, 0, %v3159
        %v3167 = vsel %vm3162, 0, %v3161
        %v3169 = vld [vmem:[#allocation27] sm:$0x1]
        %v3171 = vpack.i.b16 %v3169, %v3169
        %v3173 = vlaneseq
        %v3174 = vshrl.u32 %v3173, 7
        %v3175 = vsub.s32 0, %v3174
        %v3176 = vrot.slane %v3171, %v3175
        %v3177 = vmul.bf16 %v3164, %v3176
        %v3178 = vmul.bf16 %v3167, %v3176
        %v3179 = vld [vmem:[#allocation25] sm:$0xf]
        %v3180 = vld [vmem:[#allocation25 + $0x4] sm:$0xf]
        %v3181 = vld [vmem:[#allocation25 + $0x8] sm:$0xf]
        %v3182 = vld [vmem:[#allocation25 + $0xc] sm:$0xf]
        %3183 = vrot.lane.b32.xlu0 %v3154, 8
        %v3184 = vpop.permute.xlu0 %3183
        %3185 = vrot.lane.b32.xlu0 %v3155, 8
        %v3186 = vpop.permute.xlu0 %3185
        %vm3187 = vcmask 64512
        %v3189 = vsel %vm3187, 0, %v3184
        %v3192 = vsel %vm3187, 0, %v3186
        %s3194 = scalar_lea.vmem [#allocation25], 16
        %v3195 = vld [vmem:[%s3194] sm:$0xf]
        %v3196 = vld [vmem:[%s3194 + $0x4] sm:$0xf]
        %v3197 = vld [vmem:[%s3194 + $0x8] sm:$0xf]
        %v3198 = vld [vmem:[%s3194 + $0xc] sm:$0xf]
        %v3203 = vunpack.c.l.b16 %v3195
        %v3204 = vunpack.c.l.b16 %v3196
        %v3205 = vunpack.c.l.b16 %v3197
        %v3206 = vunpack.c.l.b16 %v3198
        %v3207 = vpack.c.b16 %v3204, %v3203
        %v3208 = vpack.c.b16 %v3206, %v3205
        %v3210 = vsel %vm1102, %v3207, 0
        %v3213 = vsel %vm1102, %v3208, 0
        %3215 = vmatprep.subr.bf16.mxu0 0
        %3216 = vmatpush1.bf16.msra.mxu0 %v3189
        %3217 = vmatprep.subr.bf16.mxu0 0
        %3218 = vmatpush1.bf16.msra.mxu0 %v3192
        %3219 = vmatprep.subr.bf16.mxu0 0
        %3220 = vmatpush1.bf16.msra.mxu0 0
        %3221 = vmatprep.subr.bf16.mxu0 0
        %3222 = vmatpush1.bf16.msra.mxu0 0
        %3223 = vmatprep.subr.bf16.mxu0 0
        %3224 = vmatpush1.bf16.msra.mxu0 0
        %3225 = vmatprep.subr.bf16.mxu0 0
        %3226 = vmatpush1.bf16.msra.mxu0 0
        %3227 = vmatprep.subr.bf16.mxu0 0
        %3228 = vmatpush1.bf16.msra.mxu0 0
        %3229 = vmatprep.subr.bf16.mxu0 0
        %3230 = vmatpush1.bf16.msra.mxu0 0
        %3231 = vmatprep.subr.bf16.mxu0 0
        %3232 = vmatpush1.bf16.msra.mxu0 0
        %3233 = vmatprep.subr.bf16.mxu0 0
        %3234 = vmatpush1.bf16.msra.mxu0 0
        %3235 = vmatprep.subr.bf16.mxu0 0
        %3236 = vmatpush1.bf16.msra.mxu0 0
        %3237 = vmatprep.subr.bf16.mxu0 0
        %3238 = vmatpush1.bf16.msra.mxu0 0
        %3239 = vmatprep.subr.bf16.mxu0 0
        %3240 = vmatpush1.bf16.msra.mxu0 0
        %3241 = vmatprep.subr.bf16.mxu0 0
        %3242 = vmatpush1.bf16.msra.mxu0 0
        %3243 = vmatprep.subr.bf16.mxu0 0
        %3244 = vmatpush1.bf16.msra.mxu0 0
        %3245 = vmatprep.subr.bf16.mxu0 0
        %3246 = vmatpush1.bf16.msra.mxu0 0
        %3247 = vmatprep.mubr.bf16.mxu0 0
        %3248 = vmatmul.mubr.bf16.gmra.mrb[0].mxu0 %v3210
        %v3249 = vpop.f32.mrb[0].mxu0
        %v3250 = vadd.f32 0.0, %v3249
        %v3251 = vpop.f32.mrb[0].mxu0
        %v3252 = vpop.f32.mrb[0].mxu0
        %v3253 = vadd.f32 0.0, %v3252
        %v3254 = vpop.f32.mrb[0].mxu0
        %3255 = vmatprep.mubr.bf16.mxu0 0
        %3256 = vmatmul.mubr.bf16.gmra.mrb[0].mxu0 %v3213
        %v3257 = vpop.f32.mrb[0].mxu0
        %v3258 = vadd.f32 0.0, %v3257
        %v3259 = vpop.f32.mrb[0].mxu0
        %v3260 = vpop.f32.mrb[0].mxu0
        %v3261 = vadd.f32 0.0, %v3260
        %v3262 = vpop.f32.mrb[0].mxu0
        %3263 = vdwg.mxu0
        %v3268 = vunpack.c.l.b16 %v3179
        %v3269 = vunpack.c.l.b16 %v3180
        %v3270 = vunpack.c.l.b16 %v3181
        %v3271 = vunpack.c.l.b16 %v3182
        %v3272 = vpack.c.b16 %v3269, %v3268
        %v3273 = vpack.c.b16 %v3271, %v3270
        %v3275 = vsel %vm1102, %v3272, 0
        %v3278 = vsel %vm1102, %v3273, 0
        %3280 = vmatprep.subr.bf16.mxu0 0
        %3281 = vmatpush1.bf16.msra.mxu0 %v3177
        %3282 = vmatprep.subr.bf16.mxu0 0
        %3283 = vmatpush1.bf16.msra.mxu0 %v3178
        %3284 = vmatprep.subr.bf16.mxu0 0
        %3285 = vmatpush1.bf16.msra.mxu0 0
        %3286 = vmatprep.subr.bf16.mxu0 0
        %3287 = vmatpush1.bf16.msra.mxu0 0
        %3288 = vmatprep.subr.bf16.mxu0 0
        %3289 = vmatpush1.bf16.msra.mxu0 0
        %3290 = vmatprep.subr.bf16.mxu0 0
        %3291 = vmatpush1.bf16.msra.mxu0 0
        %3292 = vmatprep.subr.bf16.mxu0 0
        %3293 = vmatpush1.bf16.msra.mxu0 0
        %3294 = vmatprep.subr.bf16.mxu0 0
        %3295 = vmatpush1.bf16.msra.mxu0 0
        %3296 = vmatprep.subr.bf16.mxu0 0
        %3297 = vmatpush1.bf16.msra.mxu0 0
        %3298 = vmatprep.subr.bf16.mxu0 0
        %3299 = vmatpush1.bf16.msra.mxu0 0
        %3300 = vmatprep.subr.bf16.mxu0 0
        %3301 = vmatpush1.bf16.msra.mxu0 0
        %3302 = vmatprep.subr.bf16.mxu0 0
        %3303 = vmatpush1.bf16.msra.mxu0 0
        %3304 = vmatprep.subr.bf16.mxu0 0
        %3305 = vmatpush1.bf16.msra.mxu0 0
        %3306 = vmatprep.subr.bf16.mxu0 0
        %3307 = vmatpush1.bf16.msra.mxu0 0
        %3308 = vmatprep.subr.bf16.mxu0 0
        %3309 = vmatpush1.bf16.msra.mxu0 0
        %3310 = vmatprep.subr.bf16.mxu0 0
        %3311 = vmatpush1.bf16.msra.mxu0 0
        %3312 = vmatprep.mubr.bf16.mxu0 0
        %3313 = vmatmul.mubr.bf16.gmra.mrb[0].mxu0 %v3275
        %v3314 = vpop.f32.mrb[0].mxu0
        %v3315 = vadd.f32 %v3250, %v3314
        %v3316 = vpop.f32.mrb[0].mxu0
        %v3317 = vpop.f32.mrb[0].mxu0
        %v3318 = vadd.f32 %v3253, %v3317
        %v3319 = vpop.f32.mrb[0].mxu0
        %3320 = vmatprep.mubr.bf16.mxu0 0
        %3321 = vmatmul.mubr.bf16.gmra.mrb[0].mxu0 %v3278
        %v3322 = vpop.f32.mrb[0].mxu0
        %v3323 = vadd.f32 %v3258, %v3322
        %v3324 = vpop.f32.mrb[0].mxu0
        %v3325 = vpop.f32.mrb[0].mxu0
        %v3326 = vadd.f32 %v3261, %v3325
        %v3327 = vpop.f32.mrb[0].mxu0
        %3328 = vdwg.mxu0
        %3329 = vrot.lane.b32.xlu0 %v3154, 7
        %v3330 = vpop.permute.xlu0 %3329
        %3331 = vrot.lane.b32.xlu0 %v3155, 7
        %v3332 = vpop.permute.xlu0 %3331
        %vm3333 = vcmask 56320
        %v3335 = vsel %vm3333, 0, %v3330
        %v3338 = vsel %vm3333, 0, %v3332
        %s3340 = scalar_lea.vmem [#allocation27], 2
        %v3341 = vld [vmem:[%s3340] sm:$0x1]
        %v3343 = vpack.i.b16 %v3341, %v3341
        %v3345 = vlaneseq
        %v3346 = vshrl.u32 %v3345, 7
        %v3347 = vsub.s32 0, %v3346
        %v3348 = vrot.slane %v3343, %v3347
        %v3349 = vmul.bf16 %v3335, %v3348
        %v3350 = vmul.bf16 %v3338, %v3348
        %s3351 = scalar_lea.vmem [#allocation25], 32
        %v3352 = vld [vmem:[%s3351] sm:$0xf]
        %v3353 = vld [vmem:[%s3351 + $0x4] sm:$0xf]
        %v3354 = vld [vmem:[%s3351 + $0x8] sm:$0xf]
        %v3355 = vld [vmem:[%s3351 + $0xc] sm:$0xf]
        %v3360 = vunpack.c.l.b16 %v3352
        %v3361 = vunpack.c.l.b16 %v3353
        %v3362 = vunpack.c.l.b16 %v3354
        %v3363 = vunpack.c.l.b16 %v3355
        %v3364 = vpack.c.b16 %v3361, %v3360
        %v3365 = vpack.c.b16 %v3363, %v3362
        %v3367 = vsel %vm1102, %v3364, 0
        %v3370 = vsel %vm1102, %v3365, 0
        %3372 = vmatprep.subr.bf16.mxu0 0
        %3373 = vmatpush1.bf16.msra.mxu0 %v3349
        %3374 = vmatprep.subr.bf16.mxu0 0
        %3375 = vmatpush1.bf16.msra.mxu0 %v3350
        %3376 = vmatprep.subr.bf16.mxu0 0
        %3377 = vmatpush1.bf16.msra.mxu0 0
        %3378 = vmatprep.subr.bf16.mxu0 0
        %3379 = vmatpush1.bf16.msra.mxu0 0
        %3380 = vmatprep.subr.bf16.mxu0 0
        %3381 = vmatpush1.bf16.msra.mxu0 0
        %3382 = vmatprep.subr.bf16.mxu0 0
        %3383 = vmatpush1.bf16.msra.mxu0 0
        %3384 = vmatprep.subr.bf16.mxu0 0
        %3385 = vmatpush1.bf16.msra.mxu0 0
        %3386 = vmatprep.subr.bf16.mxu0 0
        %3387 = vmatpush1.bf16.msra.mxu0 0
        %3388 = vmatprep.subr.bf16.mxu0 0
        %3389 = vmatpush1.bf16.msra.mxu0 0
        %3390 = vmatprep.subr.bf16.mxu0 0
        %3391 = vmatpush1.bf16.msra.mxu0 0
        %3392 = vmatprep.subr.bf16.mxu0 0
        %3393 = vmatpush1.bf16.msra.mxu0 0
        %3394 = vmatprep.subr.bf16.mxu0 0
        %3395 = vmatpush1.bf16.msra.mxu0 0
        %3396 = vmatprep.subr.bf16.mxu0 0
        %3397 = vmatpush1.bf16.msra.mxu0 0
        %3398 = vmatprep.subr.bf16.mxu0 0
        %3399 = vmatpush1.bf16.msra.mxu0 0
        %3400 = vmatprep.subr.bf16.mxu0 0
        %3401 = vmatpush1.bf16.msra.mxu0 0
        %3402 = vmatprep.subr.bf16.mxu0 0
        %3403 = vmatpush1.bf16.msra.mxu0 0
        %3404 = vmatprep.mubr.bf16.mxu0 0
        %3405 = vmatmul.mubr.bf16.gmra.mrb[0].mxu0 %v3367
        %v3406 = vpop.f32.mrb[0].mxu0
        %v3407 = vadd.f32 0.0, %v3406
        %v3408 = vpop.f32.mrb[0].mxu0
        %v3409 = vpop.f32.mrb[0].mxu0
        %v3410 = vadd.f32 0.0, %v3409
        %v3411 = vpop.f32.mrb[0].mxu0
        %3412 = vmatprep.mubr.bf16.mxu0 0
        %3413 = vmatmul.mubr.bf16.gmra.mrb[0].mxu0 %v3370
        %v3414 = vpop.f32.mrb[0].mxu0
        %v3415 = vadd.f32 0.0, %v3414
        %v3416 = vpop.f32.mrb[0].mxu0
        %v3417 = vpop.f32.mrb[0].mxu0
        %v3418 = vadd.f32 0.0, %v3417
        %v3419 = vpop.f32.mrb[0].mxu0
        %3420 = vdwg.mxu0
        %v3421 = vadd.f32 %v3315, %v3407
        %v3422 = vadd.f32 %v3318, %v3410
        %v3423 = vadd.f32 %v3323, %v3415
        %v3424 = vadd.f32 %v3326, %v3418
        %3425 = vrot.lane.b32.xlu0 %v3154, 1
        %v3426 = vpop.permute.xlu0 %3425
        %3427 = vrot.lane.b32.xlu0 %v3155, 1
        %v3428 = vpop.permute.xlu0 %3427
        %v3430 = vsel %vm1338, 0, %v3426
        %v3433 = vsel %vm1338, 0, %v3428
        %s3435 = scalar_lea.vmem [#allocation27], 3
        %v3436 = vld [vmem:[%s3435] sm:$0x1]
        %v3438 = vpack.i.b16 %v3436, %v3436
        %v3440 = vlaneseq
        %v3441 = vshrl.u32 %v3440, 7
        %v3442 = vsub.s32 0, %v3441
        %v3443 = vrot.slane %v3438, %v3442
        %v3444 = vmul.bf16 %v3430, %v3443
        %v3445 = vmul.bf16 %v3433, %v3443
        %s3446 = scalar_lea.vmem [#allocation25], 48
        %v3447 = vld [vmem:[%s3446] sm:$0xf]
        %v3448 = vld [vmem:[%s3446 + $0x4] sm:$0xf]
        %v3449 = vld [vmem:[%s3446 + $0x8] sm:$0xf]
        %v3450 = vld [vmem:[%s3446 + $0xc] sm:$0xf]
        %v3455 = vunpack.c.l.b16 %v3447
        %v3456 = vunpack.c.l.b16 %v3448
        %v3457 = vunpack.c.l.b16 %v3449
        %v3458 = vunpack.c.l.b16 %v3450
        %v3459 = vpack.c.b16 %v3456, %v3455
        %v3460 = vpack.c.b16 %v3458, %v3457
        %v3462 = vsel %vm1102, %v3459, 0
        %v3465 = vsel %vm1102, %v3460, 0
        %3467 = vmatprep.subr.bf16.mxu0 0
        %3468 = vmatpush1.bf16.msra.mxu0 %v3444
        %3469 = vmatprep.subr.bf16.mxu0 0
        %3470 = vmatpush1.bf16.msra.mxu0 %v3445
        %3471 = vmatprep.subr.bf16.mxu0 0
        %3472 = vmatpush1.bf16.msra.mxu0 0
        %3473 = vmatprep.subr.bf16.mxu0 0
        %3474 = vmatpush1.bf16.msra.mxu0 0
        %3475 = vmatprep.subr.bf16.mxu0 0
        %3476 = vmatpush1.bf16.msra.mxu0 0
        %3477 = vmatprep.subr.bf16.mxu0 0
        %3478 = vmatpush1.bf16.msra.mxu0 0
        %3479 = vmatprep.subr.bf16.mxu0 0
        %3480 = vmatpush1.bf16.msra.mxu0 0
        %3481 = vmatprep.subr.bf16.mxu0 0
        %3482 = vmatpush1.bf16.msra.mxu0 0
        %3483 = vmatprep.subr.bf16.mxu0 0
        %3484 = vmatpush1.bf16.msra.mxu0 0
        %3485 = vmatprep.subr.bf16.mxu0 0
        %3486 = vmatpush1.bf16.msra.mxu0 0
        %3487 = vmatprep.subr.bf16.mxu0 0
        %3488 = vmatpush1.bf16.msra.mxu0 0
        %3489 = vmatprep.subr.bf16.mxu0 0
        %3490 = vmatpush1.bf16.msra.mxu0 0
        %3491 = vmatprep.subr.bf16.mxu0 0
        %3492 = vmatpush1.bf16.msra.mxu0 0
        %3493 = vmatprep.subr.bf16.mxu0 0
        %3494 = vmatpush1.bf16.msra.mxu0 0
        %3495 = vmatprep.subr.bf16.mxu0 0
        %3496 = vmatpush1.bf16.msra.mxu0 0
        %3497 = vmatprep.subr.bf16.mxu0 0
        %3498 = vmatpush1.bf16.msra.mxu0 0
        %3499 = vmatprep.mubr.bf16.mxu0 0
        %3500 = vmatmul.mubr.bf16.gmra.mrb[0].mxu0 %v3462
        %v3501 = vpop.f32.mrb[0].mxu0
        %v3502 = vadd.f32 0.0, %v3501
        %v3503 = vpop.f32.mrb[0].mxu0
        %v3504 = vpop.f32.mrb[0].mxu0
        %v3505 = vadd.f32 0.0, %v3504
        %v3506 = vpop.f32.mrb[0].mxu0
        %3507 = vmatprep.mubr.bf16.mxu0 0
        %3508 = vmatmul.mubr.bf16.gmra.mrb[0].mxu0 %v3465
        %v3509 = vpop.f32.mrb[0].mxu0
        %v3510 = vadd.f32 0.0, %v3509
        %v3511 = vpop.f32.mrb[0].mxu0
        %v3512 = vpop.f32.mrb[0].mxu0
        %v3513 = vadd.f32 0.0, %v3512
        %v3514 = vpop.f32.mrb[0].mxu0
        %3515 = vdwg.mxu0
        %v3516 = vadd.f32 %v3421, %v3502
        %v3517 = vadd.f32 %v3422, %v3505
        %v3518 = vadd.f32 %v3423, %v3510
        %v3519 = vadd.f32 %v3424, %v3513
        %s3520 = scalar_lea.vmem [#allocation25], 64
        %v3521 = vld [vmem:[%s3520] sm:$0xf]
        %v3522 = vld [vmem:[%s3520 + $0x4] sm:$0xf]
        %v3523 = vld [vmem:[%s3520 + $0x8] sm:$0xf]
        %v3524 = vld [vmem:[%s3520 + $0xc] sm:$0xf]
        %v3529 = vunpack.c.l.b16 %v3521
        %v3530 = vunpack.c.l.b16 %v3522
        %v3531 = vunpack.c.l.b16 %v3523
        %v3532 = vunpack.c.l.b16 %v3524
        %v3533 = vpack.c.b16 %v3530, %v3529
        %v3534 = vpack.c.b16 %v3532, %v3531
        %v3536 = vsel %vm1102, %v3533, 0
        %v3539 = vsel %vm1102, %v3534, 0
        %3541 = vmatprep.subr.bf16.mxu0 0
        %3542 = vmatpush1.bf16.msra.mxu0 %v3154
        %3543 = vmatprep.subr.bf16.mxu0 0
        %3544 = vmatpush1.bf16.msra.mxu0 %v3155
        %3545 = vmatprep.subr.bf16.mxu0 0
        %3546 = vmatpush1.bf16.msra.mxu0 0
        %3547 = vmatprep.subr.bf16.mxu0 0
        %3548 = vmatpush1.bf16.msra.mxu0 0
        %3549 = vmatprep.subr.bf16.mxu0 0
        %3550 = vmatpush1.bf16.msra.mxu0 0
        %3551 = vmatprep.subr.bf16.mxu0 0
        %3552 = vmatpush1.bf16.msra.mxu0 0
        %3553 = vmatprep.subr.bf16.mxu0 0
        %3554 = vmatpush1.bf16.msra.mxu0 0
        %3555 = vmatprep.subr.bf16.mxu0 0
        %3556 = vmatpush1.bf16.msra.mxu0 0
        %3557 = vmatprep.subr.bf16.mxu0 0
        %3558 = vmatpush1.bf16.msra.mxu0 0
        %3559 = vmatprep.subr.bf16.mxu0 0
        %3560 = vmatpush1.bf16.msra.mxu0 0
        %3561 = vmatprep.subr.bf16.mxu0 0
        %3562 = vmatpush1.bf16.msra.mxu0 0
        %3563 = vmatprep.subr.bf16.mxu0 0
        %3564 = vmatpush1.bf16.msra.mxu0 0
        %3565 = vmatprep.subr.bf16.mxu0 0
        %3566 = vmatpush1.bf16.msra.mxu0 0
        %3567 = vmatprep.subr.bf16.mxu0 0
        %3568 = vmatpush1.bf16.msra.mxu0 0
        %3569 = vmatprep.subr.bf16.mxu0 0
        %3570 = vmatpush1.bf16.msra.mxu0 0
        %3571 = vmatprep.subr.bf16.mxu0 0
        %3572 = vmatpush1.bf16.msra.mxu0 0
        %3573 = vmatprep.mubr.bf16.mxu0 0
        %3574 = vmatmul.mubr.bf16.gmra.mrb[0].mxu0 %v3536
        %v3575 = vpop.f32.mrb[0].mxu0
        %v3576 = vadd.f32 0.0, %v3575
        %v3577 = vpop.f32.mrb[0].mxu0
        %v3578 = vpop.f32.mrb[0].mxu0
        %v3579 = vadd.f32 0.0, %v3578
        %v3580 = vpop.f32.mrb[0].mxu0
        %3581 = vmatprep.mubr.bf16.mxu0 0
        %3582 = vmatmul.mubr.bf16.gmra.mrb[0].mxu0 %v3539
        %v3583 = vpop.f32.mrb[0].mxu0
        %v3584 = vadd.f32 0.0, %v3583
        %v3585 = vpop.f32.mrb[0].mxu0
        %v3586 = vpop.f32.mrb[0].mxu0
        %v3587 = vadd.f32 0.0, %v3586
        %v3588 = vpop.f32.mrb[0].mxu0
        %3589 = vdwg.mxu0
        %v3590 = vadd.f32 %v3516, %v3576
        %v3591 = vadd.f32 %v3517, %v3579
        %v3592 = vadd.f32 %v3518, %v3584
        %v3593 = vadd.f32 %v3519, %v3587
        %3594 = vrot.lane.b32.xlu0 %v3154, 127
        %v3595 = vpop.permute.xlu0 %3594
        %3596 = vrot.lane.b32.xlu0 %v3155, 127
        %v3597 = vpop.permute.xlu0 %3596
        %vm3598 = vcmask 515072
        %v3600 = vsel %vm3598, %v3595, 0
        %v3603 = vsel %vm3598, %v3597, 0
        %s3605 = scalar_lea.vmem [#allocation27], 5
        %v3606 = vld [vmem:[%s3605] sm:$0x1]
        %v3608 = vpack.i.b16 %v3606, %v3606
        %v3610 = vlaneseq
        %v3611 = vshrl.u32 %v3610, 7
        %v3612 = vsub.s32 0, %v3611
        %v3613 = vrot.slane %v3608, %v3612
        %v3614 = vmul.bf16 %v3600, %v3613
        %v3615 = vmul.bf16 %v3603, %v3613
        %s3616 = scalar_lea.vmem [#allocation25], 80
        %v3617 = vld [vmem:[%s3616] sm:$0xf]
        %v3618 = vld [vmem:[%s3616 + $0x4] sm:$0xf]
        %v3619 = vld [vmem:[%s3616 + $0x8] sm:$0xf]
        %v3620 = vld [vmem:[%s3616 + $0xc] sm:$0xf]
        %v3625 = vunpack.c.l.b16 %v3617
        %v3626 = vunpack.c.l.b16 %v3618
        %v3627 = vunpack.c.l.b16 %v3619
        %v3628 = vunpack.c.l.b16 %v3620
        %v3629 = vpack.c.b16 %v3626, %v3625
        %v3630 = vpack.c.b16 %v3628, %v3627
        %v3632 = vsel %vm1102, %v3629, 0
        %v3635 = vsel %vm1102, %v3630, 0
        %3637 = vmatprep.subr.bf16.mxu0 0
        %3638 = vmatpush1.bf16.msra.mxu0 %v3614
        %3639 = vmatprep.subr.bf16.mxu0 0
        %3640 = vmatpush1.bf16.msra.mxu0 %v3615
        %3641 = vmatprep.subr.bf16.mxu0 0
        %3642 = vmatpush1.bf16.msra.mxu0 0
        %3643 = vmatprep.subr.bf16.mxu0 0
        %3644 = vmatpush1.bf16.msra.mxu0 0
        %3645 = vmatprep.subr.bf16.mxu0 0
        %3646 = vmatpush1.bf16.msra.mxu0 0
        %3647 = vmatprep.subr.bf16.mxu0 0
        %3648 = vmatpush1.bf16.msra.mxu0 0
        %3649 = vmatprep.subr.bf16.mxu0 0
        %3650 = vmatpush1.bf16.msra.mxu0 0
        %3651 = vmatprep.subr.bf16.mxu0 0
        %3652 = vmatpush1.bf16.msra.mxu0 0
        %3653 = vmatprep.subr.bf16.mxu0 0
        %3654 = vmatpush1.bf16.msra.mxu0 0
        %3655 = vmatprep.subr.bf16.mxu0 0
        %3656 = vmatpush1.bf16.msra.mxu0 0
        %3657 = vmatprep.subr.bf16.mxu0 0
        %3658 = vmatpush1.bf16.msra.mxu0 0
        %3659 = vmatprep.subr.bf16.mxu0 0
        %3660 = vmatpush1.bf16.msra.mxu0 0
        %3661 = vmatprep.subr.bf16.mxu0 0
        %3662 = vmatpush1.bf16.msra.mxu0 0
        %3663 = vmatprep.subr.bf16.mxu0 0
        %3664 = vmatpush1.bf16.msra.mxu0 0
        %3665 = vmatprep.subr.bf16.mxu0 0
        %3666 = vmatpush1.bf16.msra.mxu0 0
        %3667 = vmatprep.subr.bf16.mxu0 0
        %3668 = vmatpush1.bf16.msra.mxu0 0
        %3669 = vmatprep.mubr.bf16.mxu0 0
        %3670 = vmatmul.mubr.bf16.gmra.mrb[0].mxu0 %v3632
        %v3671 = vpop.f32.mrb[0].mxu0
        %v3672 = vadd.f32 0.0, %v3671
        %v3673 = vpop.f32.mrb[0].mxu0
        %v3674 = vpop.f32.mrb[0].mxu0
        %v3675 = vadd.f32 0.0, %v3674
        %v3676 = vpop.f32.mrb[0].mxu0
        %3677 = vmatprep.mubr.bf16.mxu0 0
        %3678 = vmatmul.mubr.bf16.gmra.mrb[0].mxu0 %v3635
        %v3679 = vpop.f32.mrb[0].mxu0
        %v3680 = vadd.f32 0.0, %v3679
        %v3681 = vpop.f32.mrb[0].mxu0
        %v3682 = vpop.f32.mrb[0].mxu0
        %v3683 = vadd.f32 0.0, %v3682
        %v3684 = vpop.f32.mrb[0].mxu0
        %3685 = vdwg.mxu0
        %v3686 = vadd.f32 %v3590, %v3672
        %v3687 = vadd.f32 %v3591, %v3675
        %v3688 = vadd.f32 %v3592, %v3680
        %v3689 = vadd.f32 %v3593, %v3683
        %3690 = vrot.lane.b32.xlu0 %v3154, 121
        %v3691 = vpop.permute.xlu0 %3690
        %3692 = vrot.lane.b32.xlu0 %v3155, 121
        %v3693 = vpop.permute.xlu0 %3692
        %vm3694 = vcmask 465920
        %v3696 = vsel %vm3694, %v3691, 0
        %v3699 = vsel %vm3694, %v3693, 0
        %s3701 = scalar_lea.vmem [#allocation27], 6
        %v3702 = vld [vmem:[%s3701] sm:$0x1]
        %v3704 = vpack.i.b16 %v3702, %v3702
        %v3706 = vlaneseq
        %v3707 = vshrl.u32 %v3706, 7
        %v3708 = vsub.s32 0, %v3707
        %v3709 = vrot.slane %v3704, %v3708
        %v3710 = vmul.bf16 %v3696, %v3709
        %v3711 = vmul.bf16 %v3699, %v3709
        %s3712 = scalar_lea.vmem [#allocation25], 96
        %v3713 = vld [vmem:[%s3712] sm:$0xf]
        %v3714 = vld [vmem:[%s3712 + $0x4] sm:$0xf]
        %v3715 = vld [vmem:[%s3712 + $0x8] sm:$0xf]
        %v3716 = vld [vmem:[%s3712 + $0xc] sm:$0xf]
        %v3721 = vunpack.c.l.b16 %v3713
        %v3722 = vunpack.c.l.b16 %v3714
        %v3723 = vunpack.c.l.b16 %v3715
        %v3724 = vunpack.c.l.b16 %v3716
        %v3725 = vpack.c.b16 %v3722, %v3721
        %v3726 = vpack.c.b16 %v3724, %v3723
        %v3728 = vsel %vm1102, %v3725, 0
        %v3731 = vsel %vm1102, %v3726, 0
        %3733 = vmatprep.subr.bf16.mxu0 0
        %3734 = vmatpush1.bf16.msra.mxu0 %v3710
        %3735 = vmatprep.subr.bf16.mxu0 0
        %3736 = vmatpush1.bf16.msra.mxu0 %v3711
        %3737 = vmatprep.subr.bf16.mxu0 0
        %3738 = vmatpush1.bf16.msra.mxu0 0
        %3739 = vmatprep.subr.bf16.mxu0 0
        %3740 = vmatpush1.bf16.msra.mxu0 0
        %3741 = vmatprep.subr.bf16.mxu0 0
        %3742 = vmatpush1.bf16.msra.mxu0 0
        %3743 = vmatprep.subr.bf16.mxu0 0
        %3744 = vmatpush1.bf16.msra.mxu0 0
        %3745 = vmatprep.subr.bf16.mxu0 0
        %3746 = vmatpush1.bf16.msra.mxu0 0
        %3747 = vmatprep.subr.bf16.mxu0 0
        %3748 = vmatpush1.bf16.msra.mxu0 0
        %3749 = vmatprep.subr.bf16.mxu0 0
        %3750 = vmatpush1.bf16.msra.mxu0 0
        %3751 = vmatprep.subr.bf16.mxu0 0
        %3752 = vmatpush1.bf16.msra.mxu0 0
        %3753 = vmatprep.subr.bf16.mxu0 0
        %3754 = vmatpush1.bf16.msra.mxu0 0
        %3755 = vmatprep.subr.bf16.mxu0 0
        %3756 = vmatpush1.bf16.msra.mxu0 0
        %3757 = vmatprep.subr.bf16.mxu0 0
        %3758 = vmatpush1.bf16.msra.mxu0 0
        %3759 = vmatprep.subr.bf16.mxu0 0
        %3760 = vmatpush1.bf16.msra.mxu0 0
        %3761 = vmatprep.subr.bf16.mxu0 0
        %3762 = vmatpush1.bf16.msra.mxu0 0
        %3763 = vmatprep.subr.bf16.mxu0 0
        %3764 = vmatpush1.bf16.msra.mxu0 0
        %3765 = vmatprep.mubr.bf16.mxu0 0
        %3766 = vmatmul.mubr.bf16.gmra.mrb[0].mxu0 %v3728
        %v3767 = vpop.f32.mrb[0].mxu0
        %v3768 = vadd.f32 0.0, %v3767
        %v3769 = vpop.f32.mrb[0].mxu0
        %v3770 = vpop.f32.mrb[0].mxu0
        %v3771 = vadd.f32 0.0, %v3770
        %v3772 = vpop.f32.mrb[0].mxu0
        %3773 = vmatprep.mubr.bf16.mxu0 0
        %3774 = vmatmul.mubr.bf16.gmra.mrb[0].mxu0 %v3731
        %v3775 = vpop.f32.mrb[0].mxu0
        %v3776 = vadd.f32 0.0, %v3775
        %v3777 = vpop.f32.mrb[0].mxu0
        %v3778 = vpop.f32.mrb[0].mxu0
        %v3779 = vadd.f32 0.0, %v3778
        %v3780 = vpop.f32.mrb[0].mxu0
        %3781 = vdwg.mxu0
        %v3782 = vadd.f32 %v3686, %v3768
        %v3783 = vadd.f32 %v3687, %v3771
        %v3784 = vadd.f32 %v3688, %v3776
        %v3785 = vadd.f32 %v3689, %v3779
        %3786 = vrot.lane.b32.xlu0 %v3154, 120
        %v3787 = vpop.permute.xlu0 %3786
        %3788 = vrot.lane.b32.xlu0 %v3155, 120
        %v3789 = vpop.permute.xlu0 %3788
        %vm3790 = vcmask 457728
        %v3792 = vsel %vm3790, %v3787, 0
        %v3795 = vsel %vm3790, %v3789, 0
        %s3797 = scalar_lea.vmem [#allocation25], 112
        %v3798 = vld [vmem:[%s3797] sm:$0xf]
        %v3799 = vld [vmem:[%s3797 + $0x4] sm:$0xf]
        %v3800 = vld [vmem:[%s3797 + $0x8] sm:$0xf]
        %v3801 = vld [vmem:[%s3797 + $0xc] sm:$0xf]
        %v3806 = vunpack.c.l.b16 %v3798
        %v3807 = vunpack.c.l.b16 %v3799
        %v3808 = vunpack.c.l.b16 %v3800
        %v3809 = vunpack.c.l.b16 %v3801
        %v3810 = vpack.c.b16 %v3807, %v3806
        %v3811 = vpack.c.b16 %v3809, %v3808
        %v3813 = vsel %vm1102, %v3810, 0
        %v3816 = vsel %vm1102, %v3811, 0
        %3818 = vmatprep.subr.bf16.mxu0 0
        %3819 = vmatpush1.bf16.msra.mxu0 %v3792
        %3820 = vmatprep.subr.bf16.mxu0 0
        %3821 = vmatpush1.bf16.msra.mxu0 %v3795
        %3822 = vmatprep.subr.bf16.mxu0 0
        %3823 = vmatpush1.bf16.msra.mxu0 0
        %3824 = vmatprep.subr.bf16.mxu0 0
        %3825 = vmatpush1.bf16.msra.mxu0 0
        %3826 = vmatprep.subr.bf16.mxu0 0
        %3827 = vmatpush1.bf16.msra.mxu0 0
        %3828 = vmatprep.subr.bf16.mxu0 0
        %3829 = vmatpush1.bf16.msra.mxu0 0
        %3830 = vmatprep.subr.bf16.mxu0 0
        %3831 = vmatpush1.bf16.msra.mxu0 0
        %3832 = vmatprep.subr.bf16.mxu0 0
        %3833 = vmatpush1.bf16.msra.mxu0 0
        %3834 = vmatprep.subr.bf16.mxu0 0
        %3835 = vmatpush1.bf16.msra.mxu0 0
        %3836 = vmatprep.subr.bf16.mxu0 0
        %3837 = vmatpush1.bf16.msra.mxu0 0
        %3838 = vmatprep.subr.bf16.mxu0 0
        %3839 = vmatpush1.bf16.msra.mxu0 0
        %3840 = vmatprep.subr.bf16.mxu0 0
        %3841 = vmatpush1.bf16.msra.mxu0 0
        %3842 = vmatprep.subr.bf16.mxu0 0
        %3843 = vmatpush1.bf16.msra.mxu0 0
        %3844 = vmatprep.subr.bf16.mxu0 0
        %3845 = vmatpush1.bf16.msra.mxu0 0
        %3846 = vmatprep.subr.bf16.mxu0 0
        %3847 = vmatpush1.bf16.msra.mxu0 0
        %3848 = vmatprep.subr.bf16.mxu0 0
        %3849 = vmatpush1.bf16.msra.mxu0 0
        %3850 = vmatprep.mubr.bf16.mxu0 0
        %3851 = vmatmul.mubr.bf16.gmra.mrb[0].mxu0 %v3813
        %v3852 = vpop.f32.mrb[0].mxu0
        %v3853 = vadd.f32 0.0, %v3852
        %v3854 = vpop.f32.mrb[0].mxu0
        %v3855 = vpop.f32.mrb[0].mxu0
        %v3856 = vadd.f32 0.0, %v3855
        %v3857 = vpop.f32.mrb[0].mxu0
        %3858 = vmatprep.mubr.bf16.mxu0 0
        %3859 = vmatmul.mubr.bf16.gmra.mrb[0].mxu0 %v3816
        %v3860 = vpop.f32.mrb[0].mxu0
        %v3861 = vadd.f32 0.0, %v3860
        %v3862 = vpop.f32.mrb[0].mxu0
        %v3863 = vpop.f32.mrb[0].mxu0
        %v3864 = vadd.f32 0.0, %v3863
        %v3865 = vpop.f32.mrb[0].mxu0
        %3866 = vdwg.mxu0
        %v3867 = vadd.f32 %v3782, %v3853
        %v3868 = vadd.f32 %v3783, %v3856
        %v3869 = vadd.f32 %v3784, %v3861
        %v3870 = vadd.f32 %v3785, %v3864
        %3871 = vrot.lane.b32.xlu0 %v3154, 119
        %v3872 = vpop.permute.xlu0 %3871
        %3873 = vrot.lane.b32.xlu0 %v3155, 119
        %v3874 = vpop.permute.xlu0 %3873
        %vm3875 = vcmask 449536
        %v3877 = vsel %vm3875, %v3872, 0
        %v3880 = vsel %vm3875, %v3874, 0
        %s3882 = scalar_lea.vmem [#allocation27], 8
        %v3883 = vld [vmem:[%s3882] sm:$0x1]
        %v3885 = vpack.i.b16 %v3883, %v3883
        %v3887 = vlaneseq
        %v3888 = vshrl.u32 %v3887, 7
        %v3889 = vsub.s32 0, %v3888
        %v3890 = vrot.slane %v3885, %v3889
        %v3891 = vmul.bf16 %v3877, %v3890
        %v3892 = vmul.bf16 %v3880, %v3890
        %s3893 = scalar_lea.vmem [#allocation25], 128
        %v3894 = vld [vmem:[%s3893] sm:$0xf]
        %v3895 = vld [vmem:[%s3893 + $0x4] sm:$0xf]
        %v3896 = vld [vmem:[%s3893 + $0x8] sm:$0xf]
        %v3897 = vld [vmem:[%s3893 + $0xc] sm:$0xf]
        %v3902 = vunpack.c.l.b16 %v3894
        %v3903 = vunpack.c.l.b16 %v3895
        %v3904 = vunpack.c.l.b16 %v3896
        %v3905 = vunpack.c.l.b16 %v3897
        %v3906 = vpack.c.b16 %v3903, %v3902
        %v3907 = vpack.c.b16 %v3905, %v3904
        %v3909 = vsel %vm1102, %v3906, 0
        %v3912 = vsel %vm1102, %v3907, 0
        %3914 = vmatprep.subr.bf16.mxu0 0
        %3915 = vmatpush1.bf16.msra.mxu0 %v3891
        %3916 = vmatprep.subr.bf16.mxu0 0
        %3917 = vmatpush1.bf16.msra.mxu0 %v3892
        %3918 = vmatprep.subr.bf16.mxu0 0
        %3919 = vmatpush1.bf16.msra.mxu0 0
        %3920 = vmatprep.subr.bf16.mxu0 0
        %3921 = vmatpush1.bf16.msra.mxu0 0
        %3922 = vmatprep.subr.bf16.mxu0 0
        %3923 = vmatpush1.bf16.msra.mxu0 0
        %3924 = vmatprep.subr.bf16.mxu0 0
        %3925 = vmatpush1.bf16.msra.mxu0 0
        %3926 = vmatprep.subr.bf16.mxu0 0
        %3927 = vmatpush1.bf16.msra.mxu0 0
        %3928 = vmatprep.subr.bf16.mxu0 0
        %3929 = vmatpush1.bf16.msra.mxu0 0
        %3930 = vmatprep.subr.bf16.mxu0 0
        %3931 = vmatpush1.bf16.msra.mxu0 0
        %3932 = vmatprep.subr.bf16.mxu0 0
        %3933 = vmatpush1.bf16.msra.mxu0 0
        %3934 = vmatprep.subr.bf16.mxu0 0
        %3935 = vmatpush1.bf16.msra.mxu0 0
        %3936 = vmatprep.subr.bf16.mxu0 0
        %3937 = vmatpush1.bf16.msra.mxu0 0
        %3938 = vmatprep.subr.bf16.mxu0 0
        %3939 = vmatpush1.bf16.msra.mxu0 0
        %3940 = vmatprep.subr.bf16.mxu0 0
        %3941 = vmatpush1.bf16.msra.mxu0 0
        %3942 = vmatprep.subr.bf16.mxu0 0
        %3943 = vmatpush1.bf16.msra.mxu0 0
        %3944 = vmatprep.subr.bf16.mxu0 0
        %3945 = vmatpush1.bf16.msra.mxu0 0
        %3946 = vmatprep.mubr.bf16.mxu0 0
        %3947 = vmatmul.mubr.bf16.gmra.mrb[0].mxu0 %v3909
        %v3948 = vpop.f32.mrb[0].mxu0
        %v3949 = vadd.f32 0.0, %v3948
        %v3950 = vpop.f32.mrb[0].mxu0
        %v3951 = vpop.f32.mrb[0].mxu0
        %v3952 = vadd.f32 0.0, %v3951
        %v3953 = vpop.f32.mrb[0].mxu0
        %3954 = vmatprep.mubr.bf16.mxu0 0
        %3955 = vmatmul.mubr.bf16.gmra.mrb[0].mxu0 %v3912
        %v3956 = vpop.f32.mrb[0].mxu0
        %v3957 = vadd.f32 0.0, %v3956
        %v3958 = vpop.f32.mrb[0].mxu0
        %v3959 = vpop.f32.mrb[0].mxu0
        %v3960 = vadd.f32 0.0, %v3959
        %v3961 = vpop.f32.mrb[0].mxu0
        %3962 = vdwg.mxu0
        %v3963 = vadd.f32 %v3867, %v3949
        %v3964 = vadd.f32 %v3868, %v3952
        %v3965 = vadd.f32 %v3869, %v3957
        %v3966 = vadd.f32 %v3870, %v3960
        %v3967 = vld [vmem:[#allocation26] sm:$0xff]
        %v3968 = vld [vmem:[#allocation26 + $0x8] sm:$0xff]
        %v3969 = vld [vmem:[#allocation26 + $0x10] sm:$0xff]
        %v3970 = vld [vmem:[#allocation26 + $0x18] sm:$0xff]
        %3972 = vset.pattern.permute.xlu0 0
        %3973 = vperm.xlu0 %3972, %v3967
        %v3974 = vpop.permute.xlu0 %3973
        %3977 = vset.pattern.permute.xlu0 0
        %3978 = vperm.xlu0 %3977, %v3968
        %v3979 = vpop.permute.xlu0 %3978
        %3982 = vset.pattern.permute.xlu0 0
        %3983 = vperm.xlu0 %3982, %v3969
        %v3984 = vpop.permute.xlu0 %3983
        %3987 = vset.pattern.permute.xlu0 0
        %3988 = vperm.xlu0 %3987, %v3970
        %v3989 = vpop.permute.xlu0 %3988
        %v3991 = vadd.f32 %v3963, %v3974
        %v3992 = vadd.f32 %v3964, %v3979
        %v3993 = vadd.f32 %v3965, %v3984
        %v3994 = vadd.f32 %v3966, %v3989
        %v3995 = vpack.c.bf16 %v3992, %v3991
        %v3996 = vpack.c.bf16 %v3994, %v3993
        %3999 = vrot.lane.b32.xlu0 %v3995, 9
        %v4000 = vpop.permute.xlu0 %3999
        %4001 = vrot.lane.b32.xlu0 %v3996, 9
        %v4002 = vpop.permute.xlu0 %4001
        %v4004 = vsel %vm3162, 0, %v4000
        %v4007 = vsel %vm3162, 0, %v4002
        %v4009 = vmul.bf16 %v4004, %v3176
        %v4010 = vmul.bf16 %v4007, %v3176
        %v4011 = vld [vmem:[#allocation30] sm:$0xf]
        %v4012 = vld [vmem:[#allocation30 + $0x4] sm:$0xf]
        %4013 = vrot.lane.b32.xlu0 %v3995, 8
        %v4014 = vpop.permute.xlu0 %4013
        %4015 = vrot.lane.b32.xlu0 %v3996, 8
        %v4016 = vpop.permute.xlu0 %4015
        %v4018 = vsel %vm3187, 0, %v4014
        %v4021 = vsel %vm3187, 0, %v4016
        %s4023 = scalar_lea.vmem [#allocation30], 8
        %v4024 = vld [vmem:[%s4023] sm:$0xf]
        %v4025 = vld [vmem:[%s4023 + $0x4] sm:$0xf]
        %v4028 = vunpack.c.l.b16 %v4024
        %v4029 = vunpack.c.l.b16 %v4025
        %v4030 = vpack.c.b16 %v4029, %v4028
        %v4032 = vsel %vm1102, %v4030, 0
        %4034 = vmatprep.subr.bf16.mxu0 0
        %4035 = vmatpush1.bf16.msra.mxu0 %v4018
        %4036 = vmatprep.subr.bf16.mxu0 0
        %4037 = vmatpush1.bf16.msra.mxu0 %v4021
        %4038 = vmatprep.subr.bf16.mxu0 0
        %4039 = vmatpush1.bf16.msra.mxu0 0
        %4040 = vmatprep.subr.bf16.mxu0 0
        %4041 = vmatpush1.bf16.msra.mxu0 0
        %4042 = vmatprep.subr.bf16.mxu0 0
        %4043 = vmatpush1.bf16.msra.mxu0 0
        %4044 = vmatprep.subr.bf16.mxu0 0
        %4045 = vmatpush1.bf16.msra.mxu0 0
        %4046 = vmatprep.subr.bf16.mxu0 0
        %4047 = vmatpush1.bf16.msra.mxu0 0
        %4048 = vmatprep.subr.bf16.mxu0 0
        %4049 = vmatpush1.bf16.msra.mxu0 0
        %4050 = vmatprep.subr.bf16.mxu0 0
        %4051 = vmatpush1.bf16.msra.mxu0 0
        %4052 = vmatprep.subr.bf16.mxu0 0
        %4053 = vmatpush1.bf16.msra.mxu0 0
        %4054 = vmatprep.subr.bf16.mxu0 0
        %4055 = vmatpush1.bf16.msra.mxu0 0
        %4056 = vmatprep.subr.bf16.mxu0 0
        %4057 = vmatpush1.bf16.msra.mxu0 0
        %4058 = vmatprep.subr.bf16.mxu0 0
        %4059 = vmatpush1.bf16.msra.mxu0 0
        %4060 = vmatprep.subr.bf16.mxu0 0
        %4061 = vmatpush1.bf16.msra.mxu0 0
        %4062 = vmatprep.subr.bf16.mxu0 0
        %4063 = vmatpush1.bf16.msra.mxu0 0
        %4064 = vmatprep.subr.bf16.mxu0 0
        %4065 = vmatpush1.bf16.msra.mxu0 0
        %4066 = vmatprep.mubr.bf16.mxu0 0
        %4067 = vmatmul.mubr.bf16.gmra.mrb[0].mxu0 %v4032
        %v4068 = vpop.f32.mrb[0].mxu0
        %v4069 = vadd.f32 0.0, %v4068
        %v4070 = vpop.f32.mrb[0].mxu0
        %v4071 = vpop.f32.mrb[0].mxu0
        %v4072 = vadd.f32 0.0, %v4071
        %v4073 = vpop.f32.mrb[0].mxu0
        %4074 = vdwg.mxu0
        %v4077 = vunpack.c.l.b16 %v4011
        %v4078 = vunpack.c.l.b16 %v4012
        %v4079 = vpack.c.b16 %v4078, %v4077
        %v4081 = vsel %vm1102, %v4079, 0
        %4083 = vmatprep.subr.bf16.mxu0 0
        %4084 = vmatpush1.bf16.msra.mxu0 %v4009
        %4085 = vmatprep.subr.bf16.mxu0 0
        %4086 = vmatpush1.bf16.msra.mxu0 %v4010
        %4087 = vmatprep.subr.bf16.mxu0 0
        %4088 = vmatpush1.bf16.msra.mxu0 0
        %4089 = vmatprep.subr.bf16.mxu0 0
        %4090 = vmatpush1.bf16.msra.mxu0 0
        %4091 = vmatprep.subr.bf16.mxu0 0
        %4092 = vmatpush1.bf16.msra.mxu0 0
        %4093 = vmatprep.subr.bf16.mxu0 0
        %4094 = vmatpush1.bf16.msra.mxu0 0
        %4095 = vmatprep.subr.bf16.mxu0 0
        %4096 = vmatpush1.bf16.msra.mxu0 0
        %4097 = vmatprep.subr.bf16.mxu0 0
        %4098 = vmatpush1.bf16.msra.mxu0 0
        %4099 = vmatprep.subr.bf16.mxu0 0
        %4100 = vmatpush1.bf16.msra.mxu0 0
        %4101 = vmatprep.subr.bf16.mxu0 0
        %4102 = vmatpush1.bf16.msra.mxu0 0
        %4103 = vmatprep.subr.bf16.mxu0 0
        %4104 = vmatpush1.bf16.msra.mxu0 0
        %4105 = vmatprep.subr.bf16.mxu0 0
        %4106 = vmatpush1.bf16.msra.mxu0 0
        %4107 = vmatprep.subr.bf16.mxu0 0
        %4108 = vmatpush1.bf16.msra.mxu0 0
        %4109 = vmatprep.subr.bf16.mxu0 0
        %4110 = vmatpush1.bf16.msra.mxu0 0
        %4111 = vmatprep.subr.bf16.mxu0 0
        %4112 = vmatpush1.bf16.msra.mxu0 0
        %4113 = vmatprep.subr.bf16.mxu0 0
        %4114 = vmatpush1.bf16.msra.mxu0 0
        %4115 = vmatprep.mubr.bf16.mxu0 0
        %4116 = vmatmul.mubr.bf16.gmra.mrb[0].mxu0 %v4081
        %v4117 = vpop.f32.mrb[0].mxu0
        %v4118 = vadd.f32 %v4069, %v4117
        %v4119 = vpop.f32.mrb[0].mxu0
        %v4120 = vpop.f32.mrb[0].mxu0
        %v4121 = vadd.f32 %v4072, %v4120
        %v4122 = vpop.f32.mrb[0].mxu0
        %4123 = vdwg.mxu0
        %4124 = vrot.lane.b32.xlu0 %v3995, 7
        %v4125 = vpop.permute.xlu0 %4124
        %4126 = vrot.lane.b32.xlu0 %v3996, 7
        %v4127 = vpop.permute.xlu0 %4126
        %v4129 = vsel %vm3333, 0, %v4125
        %v4132 = vsel %vm3333, 0, %v4127
        %v4134 = vmul.bf16 %v4129, %v3348
        %v4135 = vmul.bf16 %v4132, %v3348
        %s4136 = scalar_lea.vmem [#allocation30], 16
        %v4137 = vld [vmem:[%s4136] sm:$0xf]
        %v4138 = vld [vmem:[%s4136 + $0x4] sm:$0xf]
        %v4141 = vunpack.c.l.b16 %v4137
        %v4142 = vunpack.c.l.b16 %v4138
        %v4143 = vpack.c.b16 %v4142, %v4141
        %v4145 = vsel %vm1102, %v4143, 0
        %4147 = vmatprep.subr.bf16.mxu0 0
        %4148 = vmatpush1.bf16.msra.mxu0 %v4134
        %4149 = vmatprep.subr.bf16.mxu0 0
        %4150 = vmatpush1.bf16.msra.mxu0 %v4135
        %4151 = vmatprep.subr.bf16.mxu0 0
        %4152 = vmatpush1.bf16.msra.mxu0 0
        %4153 = vmatprep.subr.bf16.mxu0 0
        %4154 = vmatpush1.bf16.msra.mxu0 0
        %4155 = vmatprep.subr.bf16.mxu0 0
        %4156 = vmatpush1.bf16.msra.mxu0 0
        %4157 = vmatprep.subr.bf16.mxu0 0
        %4158 = vmatpush1.bf16.msra.mxu0 0
        %4159 = vmatprep.subr.bf16.mxu0 0
        %4160 = vmatpush1.bf16.msra.mxu0 0
        %4161 = vmatprep.subr.bf16.mxu0 0
        %4162 = vmatpush1.bf16.msra.mxu0 0
        %4163 = vmatprep.subr.bf16.mxu0 0
        %4164 = vmatpush1.bf16.msra.mxu0 0
        %4165 = vmatprep.subr.bf16.mxu0 0
        %4166 = vmatpush1.bf16.msra.mxu0 0
        %4167 = vmatprep.subr.bf16.mxu0 0
        %4168 = vmatpush1.bf16.msra.mxu0 0
        %4169 = vmatprep.subr.bf16.mxu0 0
        %4170 = vmatpush1.bf16.msra.mxu0 0
        %4171 = vmatprep.subr.bf16.mxu0 0
        %4172 = vmatpush1.bf16.msra.mxu0 0
        %4173 = vmatprep.subr.bf16.mxu0 0
        %4174 = vmatpush1.bf16.msra.mxu0 0
        %4175 = vmatprep.subr.bf16.mxu0 0
        %4176 = vmatpush1.bf16.msra.mxu0 0
        %4177 = vmatprep.subr.bf16.mxu0 0
        %4178 = vmatpush1.bf16.msra.mxu0 0
        %4179 = vmatprep.mubr.bf16.mxu0 0
        %4180 = vmatmul.mubr.bf16.gmra.mrb[0].mxu0 %v4145
        %v4181 = vpop.f32.mrb[0].mxu0
        %v4182 = vadd.f32 0.0, %v4181
        %v4183 = vpop.f32.mrb[0].mxu0
        %v4184 = vpop.f32.mrb[0].mxu0
        %v4185 = vadd.f32 0.0, %v4184
        %v4186 = vpop.f32.mrb[0].mxu0
        %4187 = vdwg.mxu0
        %v4188 = vadd.f32 %v4118, %v4182
        %v4189 = vadd.f32 %v4121, %v4185
        %4190 = vrot.lane.b32.xlu0 %v3995, 1
        %v4191 = vpop.permute.xlu0 %4190
        %4192 = vrot.lane.b32.xlu0 %v3996, 1
        %v4193 = vpop.permute.xlu0 %4192
        %v4195 = vsel %vm1338, 0, %v4191
        %v4198 = vsel %vm1338, 0, %v4193
        %v4200 = vmul.bf16 %v4195, %v3443
        %v4201 = vmul.bf16 %v4198, %v3443
        %s4202 = scalar_lea.vmem [#allocation30], 24
        %v4203 = vld [vmem:[%s4202] sm:$0xf]
        %v4204 = vld [vmem:[%s4202 + $0x4] sm:$0xf]
        %v4207 = vunpack.c.l.b16 %v4203
        %v4208 = vunpack.c.l.b16 %v4204
        %v4209 = vpack.c.b16 %v4208, %v4207
        %v4211 = vsel %vm1102, %v4209, 0
        %4213 = vmatprep.subr.bf16.mxu0 0
        %4214 = vmatpush1.bf16.msra.mxu0 %v4200
        %4215 = vmatprep.subr.bf16.mxu0 0
        %4216 = vmatpush1.bf16.msra.mxu0 %v4201
        %4217 = vmatprep.subr.bf16.mxu0 0
        %4218 = vmatpush1.bf16.msra.mxu0 0
        %4219 = vmatprep.subr.bf16.mxu0 0
        %4220 = vmatpush1.bf16.msra.mxu0 0
        %4221 = vmatprep.subr.bf16.mxu0 0
        %4222 = vmatpush1.bf16.msra.mxu0 0
        %4223 = vmatprep.subr.bf16.mxu0 0
        %4224 = vmatpush1.bf16.msra.mxu0 0
        %4225 = vmatprep.subr.bf16.mxu0 0
        %4226 = vmatpush1.bf16.msra.mxu0 0
        %4227 = vmatprep.subr.bf16.mxu0 0
        %4228 = vmatpush1.bf16.msra.mxu0 0
        %4229 = vmatprep.subr.bf16.mxu0 0
        %4230 = vmatpush1.bf16.msra.mxu0 0
        %4231 = vmatprep.subr.bf16.mxu0 0
        %4232 = vmatpush1.bf16.msra.mxu0 0
        %4233 = vmatprep.subr.bf16.mxu0 0
        %4234 = vmatpush1.bf16.msra.mxu0 0
        %4235 = vmatprep.subr.bf16.mxu0 0
        %4236 = vmatpush1.bf16.msra.mxu0 0
        %4237 = vmatprep.subr.bf16.mxu0 0
        %4238 = vmatpush1.bf16.msra.mxu0 0
        %4239 = vmatprep.subr.bf16.mxu0 0
        %4240 = vmatpush1.bf16.msra.mxu0 0
        %4241 = vmatprep.subr.bf16.mxu0 0
        %4242 = vmatpush1.bf16.msra.mxu0 0
        %4243 = vmatprep.subr.bf16.mxu0 0
        %4244 = vmatpush1.bf16.msra.mxu0 0
        %4245 = vmatprep.mubr.bf16.mxu0 0
        %4246 = vmatmul.mubr.bf16.gmra.mrb[0].mxu0 %v4211
        %v4247 = vpop.f32.mrb[0].mxu0
        %v4248 = vadd.f32 0.0, %v4247
        %v4249 = vpop.f32.mrb[0].mxu0
        %v4250 = vpop.f32.mrb[0].mxu0
        %v4251 = vadd.f32 0.0, %v4250
        %v4252 = vpop.f32.mrb[0].mxu0
        %4253 = vdwg.mxu0
        %v4254 = vadd.f32 %v4188, %v4248
        %v4255 = vadd.f32 %v4189, %v4251
        %s4256 = scalar_lea.vmem [#allocation30], 32
        %v4257 = vld [vmem:[%s4256] sm:$0xf]
        %v4258 = vld [vmem:[%s4256 + $0x4] sm:$0xf]
        %v4261 = vunpack.c.l.b16 %v4257
        %v4262 = vunpack.c.l.b16 %v4258
        %v4263 = vpack.c.b16 %v4262, %v4261
        %v4265 = vsel %vm1102, %v4263, 0
        %4267 = vmatprep.subr.bf16.mxu0 0
        %4268 = vmatpush1.bf16.msra.mxu0 %v3995
        %4269 = vmatprep.subr.bf16.mxu0 0
        %4270 = vmatpush1.bf16.msra.mxu0 %v3996
        %4271 = vmatprep.subr.bf16.mxu0 0
        %4272 = vmatpush1.bf16.msra.mxu0 0
        %4273 = vmatprep.subr.bf16.mxu0 0
        %4274 = vmatpush1.bf16.msra.mxu0 0
        %4275 = vmatprep.subr.bf16.mxu0 0
        %4276 = vmatpush1.bf16.msra.mxu0 0
        %4277 = vmatprep.subr.bf16.mxu0 0
        %4278 = vmatpush1.bf16.msra.mxu0 0
        %4279 = vmatprep.subr.bf16.mxu0 0
        %4280 = vmatpush1.bf16.msra.mxu0 0
        %4281 = vmatprep.subr.bf16.mxu0 0
        %4282 = vmatpush1.bf16.msra.mxu0 0
        %4283 = vmatprep.subr.bf16.mxu0 0
        %4284 = vmatpush1.bf16.msra.mxu0 0
        %4285 = vmatprep.subr.bf16.mxu0 0
        %4286 = vmatpush1.bf16.msra.mxu0 0
        %4287 = vmatprep.subr.bf16.mxu0 0
        %4288 = vmatpush1.bf16.msra.mxu0 0
        %4289 = vmatprep.subr.bf16.mxu0 0
        %4290 = vmatpush1.bf16.msra.mxu0 0
        %4291 = vmatprep.subr.bf16.mxu0 0
        %4292 = vmatpush1.bf16.msra.mxu0 0
        %4293 = vmatprep.subr.bf16.mxu0 0
        %4294 = vmatpush1.bf16.msra.mxu0 0
        %4295 = vmatprep.subr.bf16.mxu0 0
        %4296 = vmatpush1.bf16.msra.mxu0 0
        %4297 = vmatprep.subr.bf16.mxu0 0
        %4298 = vmatpush1.bf16.msra.mxu0 0
        %4299 = vmatprep.mubr.bf16.mxu0 0
        %4300 = vmatmul.mubr.bf16.gmra.mrb[0].mxu0 %v4265
        %v4301 = vpop.f32.mrb[0].mxu0
        %v4302 = vadd.f32 0.0, %v4301
        %v4303 = vpop.f32.mrb[0].mxu0
        %v4304 = vpop.f32.mrb[0].mxu0
        %v4305 = vadd.f32 0.0, %v4304
        %v4306 = vpop.f32.mrb[0].mxu0
        %4307 = vdwg.mxu0
        %v4308 = vadd.f32 %v4254, %v4302
        %v4309 = vadd.f32 %v4255, %v4305
        %4310 = vrot.lane.b32.xlu0 %v3995, 127
        %v4311 = vpop.permute.xlu0 %4310
        %4312 = vrot.lane.b32.xlu0 %v3996, 127
        %v4313 = vpop.permute.xlu0 %4312
        %v4315 = vsel %vm3598, %v4311, 0
        %v4318 = vsel %vm3598, %v4313, 0
        %v4320 = vmul.bf16 %v4315, %v3613
        %v4321 = vmul.bf16 %v4318, %v3613
        %s4322 = scalar_lea.vmem [#allocation30], 40
        %v4323 = vld [vmem:[%s4322] sm:$0xf]
        %v4324 = vld [vmem:[%s4322 + $0x4] sm:$0xf]
        %v4327 = vunpack.c.l.b16 %v4323
        %v4328 = vunpack.c.l.b16 %v4324
        %v4329 = vpack.c.b16 %v4328, %v4327
        %v4331 = vsel %vm1102, %v4329, 0
        %4333 = vmatprep.subr.bf16.mxu0 0
        %4334 = vmatpush1.bf16.msra.mxu0 %v4320
        %4335 = vmatprep.subr.bf16.mxu0 0
        %4336 = vmatpush1.bf16.msra.mxu0 %v4321
        %4337 = vmatprep.subr.bf16.mxu0 0
        %4338 = vmatpush1.bf16.msra.mxu0 0
        %4339 = vmatprep.subr.bf16.mxu0 0
        %4340 = vmatpush1.bf16.msra.mxu0 0
        %4341 = vmatprep.subr.bf16.mxu0 0
        %4342 = vmatpush1.bf16.msra.mxu0 0
        %4343 = vmatprep.subr.bf16.mxu0 0
        %4344 = vmatpush1.bf16.msra.mxu0 0
        %4345 = vmatprep.subr.bf16.mxu0 0
        %4346 = vmatpush1.bf16.msra.mxu0 0
        %4347 = vmatprep.subr.bf16.mxu0 0
        %4348 = vmatpush1.bf16.msra.mxu0 0
        %4349 = vmatprep.subr.bf16.mxu0 0
        %4350 = vmatpush1.bf16.msra.mxu0 0
        %4351 = vmatprep.subr.bf16.mxu0 0
        %4352 = vmatpush1.bf16.msra.mxu0 0
        %4353 = vmatprep.subr.bf16.mxu0 0
        %4354 = vmatpush1.bf16.msra.mxu0 0
        %4355 = vmatprep.subr.bf16.mxu0 0
        %4356 = vmatpush1.bf16.msra.mxu0 0
        %4357 = vmatprep.subr.bf16.mxu0 0
        %4358 = vmatpush1.bf16.msra.mxu0 0
        %4359 = vmatprep.subr.bf16.mxu0 0
        %4360 = vmatpush1.bf16.msra.mxu0 0
        %4361 = vmatprep.subr.bf16.mxu0 0
        %4362 = vmatpush1.bf16.msra.mxu0 0
        %4363 = vmatprep.subr.bf16.mxu0 0
        %4364 = vmatpush1.bf16.msra.mxu0 0
        %4365 = vmatprep.mubr.bf16.mxu0 0
        %4366 = vmatmul.mubr.bf16.gmra.mrb[0].mxu0 %v4331
        %v4367 = vpop.f32.mrb[0].mxu0
        %v4368 = vadd.f32 0.0, %v4367
        %v4369 = vpop.f32.mrb[0].mxu0
        %v4370 = vpop.f32.mrb[0].mxu0
        %v4371 = vadd.f32 0.0, %v4370
        %v4372 = vpop.f32.mrb[0].mxu0
        %4373 = vdwg.mxu0
        %v4374 = vadd.f32 %v4308, %v4368
        %v4375 = vadd.f32 %v4309, %v4371
        %4376 = vrot.lane.b32.xlu0 %v3995, 121
        %v4377 = vpop.permute.xlu0 %4376
        %4378 = vrot.lane.b32.xlu0 %v3996, 121
        %v4379 = vpop.permute.xlu0 %4378
        %v4381 = vsel %vm3694, %v4377, 0
        %v4384 = vsel %vm3694, %v4379, 0
        %v4386 = vmul.bf16 %v4381, %v3709
        %v4387 = vmul.bf16 %v4384, %v3709
        %s4388 = scalar_lea.vmem [#allocation30], 48
        %v4389 = vld [vmem:[%s4388] sm:$0xf]
        %v4390 = vld [vmem:[%s4388 + $0x4] sm:$0xf]
        %v4393 = vunpack.c.l.b16 %v4389
        %v4394 = vunpack.c.l.b16 %v4390
        %v4395 = vpack.c.b16 %v4394, %v4393
        %v4397 = vsel %vm1102, %v4395, 0
        %4399 = vmatprep.subr.bf16.mxu0 0
        %4400 = vmatpush1.bf16.msra.mxu0 %v4386
        %4401 = vmatprep.subr.bf16.mxu0 0
        %4402 = vmatpush1.bf16.msra.mxu0 %v4387
        %4403 = vmatprep.subr.bf16.mxu0 0
        %4404 = vmatpush1.bf16.msra.mxu0 0
        %4405 = vmatprep.subr.bf16.mxu0 0
        %4406 = vmatpush1.bf16.msra.mxu0 0
        %4407 = vmatprep.subr.bf16.mxu0 0
        %4408 = vmatpush1.bf16.msra.mxu0 0
        %4409 = vmatprep.subr.bf16.mxu0 0
        %4410 = vmatpush1.bf16.msra.mxu0 0
        %4411 = vmatprep.subr.bf16.mxu0 0
        %4412 = vmatpush1.bf16.msra.mxu0 0
        %4413 = vmatprep.subr.bf16.mxu0 0
        %4414 = vmatpush1.bf16.msra.mxu0 0
        %4415 = vmatprep.subr.bf16.mxu0 0
        %4416 = vmatpush1.bf16.msra.mxu0 0
        %4417 = vmatprep.subr.bf16.mxu0 0
        %4418 = vmatpush1.bf16.msra.mxu0 0
        %4419 = vmatprep.subr.bf16.mxu0 0
        %4420 = vmatpush1.bf16.msra.mxu0 0
        %4421 = vmatprep.subr.bf16.mxu0 0
        %4422 = vmatpush1.bf16.msra.mxu0 0
        %4423 = vmatprep.subr.bf16.mxu0 0
        %4424 = vmatpush1.bf16.msra.mxu0 0
        %4425 = vmatprep.subr.bf16.mxu0 0
        %4426 = vmatpush1.bf16.msra.mxu0 0
        %4427 = vmatprep.subr.bf16.mxu0 0
        %4428 = vmatpush1.bf16.msra.mxu0 0
        %4429 = vmatprep.subr.bf16.mxu0 0
        %4430 = vmatpush1.bf16.msra.mxu0 0
        %4431 = vmatprep.mubr.bf16.mxu0 0
        %4432 = vmatmul.mubr.bf16.gmra.mrb[0].mxu0 %v4397
        %v4433 = vpop.f32.mrb[0].mxu0
        %v4434 = vadd.f32 0.0, %v4433
        %v4435 = vpop.f32.mrb[0].mxu0
        %v4436 = vpop.f32.mrb[0].mxu0
        %v4437 = vadd.f32 0.0, %v4436
        %v4438 = vpop.f32.mrb[0].mxu0
        %4439 = vdwg.mxu0
        %v4440 = vadd.f32 %v4374, %v4434
        %v4441 = vadd.f32 %v4375, %v4437
        %4442 = vrot.lane.b32.xlu0 %v3995, 120
        %v4443 = vpop.permute.xlu0 %4442
        %4444 = vrot.lane.b32.xlu0 %v3996, 120
        %v4445 = vpop.permute.xlu0 %4444
        %v4447 = vsel %vm3790, %v4443, 0
        %v4450 = vsel %vm3790, %v4445, 0
        %s4452 = scalar_lea.vmem [#allocation30], 56
        %v4453 = vld [vmem:[%s4452] sm:$0xf]
        %v4454 = vld [vmem:[%s4452 + $0x4] sm:$0xf]
        %v4457 = vunpack.c.l.b16 %v4453
        %v4458 = vunpack.c.l.b16 %v4454
        %v4459 = vpack.c.b16 %v4458, %v4457
        %v4461 = vsel %vm1102, %v4459, 0
        %4463 = vmatprep.subr.bf16.mxu0 0
        %4464 = vmatpush1.bf16.msra.mxu0 %v4447
        %4465 = vmatprep.subr.bf16.mxu0 0
        %4466 = vmatpush1.bf16.msra.mxu0 %v4450
        %4467 = vmatprep.subr.bf16.mxu0 0
        %4468 = vmatpush1.bf16.msra.mxu0 0
        %4469 = vmatprep.subr.bf16.mxu0 0
        %4470 = vmatpush1.bf16.msra.mxu0 0
        %4471 = vmatprep.subr.bf16.mxu0 0
        %4472 = vmatpush1.bf16.msra.mxu0 0
        %4473 = vmatprep.subr.bf16.mxu0 0
        %4474 = vmatpush1.bf16.msra.mxu0 0
        %4475 = vmatprep.subr.bf16.mxu0 0
        %4476 = vmatpush1.bf16.msra.mxu0 0
        %4477 = vmatprep.subr.bf16.mxu0 0
        %4478 = vmatpush1.bf16.msra.mxu0 0
        %4479 = vmatprep.subr.bf16.mxu0 0
        %4480 = vmatpush1.bf16.msra.mxu0 0
        %4481 = vmatprep.subr.bf16.mxu0 0
        %4482 = vmatpush1.bf16.msra.mxu0 0
        %4483 = vmatprep.subr.bf16.mxu0 0
        %4484 = vmatpush1.bf16.msra.mxu0 0
        %4485 = vmatprep.subr.bf16.mxu0 0
        %4486 = vmatpush1.bf16.msra.mxu0 0
        %4487 = vmatprep.subr.bf16.mxu0 0
        %4488 = vmatpush1.bf16.msra.mxu0 0
        %4489 = vmatprep.subr.bf16.mxu0 0
        %4490 = vmatpush1.bf16.msra.mxu0 0
        %4491 = vmatprep.subr.bf16.mxu0 0
        %4492 = vmatpush1.bf16.msra.mxu0 0
        %4493 = vmatprep.subr.bf16.mxu0 0
        %4494 = vmatpush1.bf16.msra.mxu0 0
        %4495 = vmatprep.mubr.bf16.mxu0 0
        %4496 = vmatmul.mubr.bf16.gmra.mrb[0].mxu0 %v4461
        %v4497 = vpop.f32.mrb[0].mxu0
        %v4498 = vadd.f32 0.0, %v4497
        %v4499 = vpop.f32.mrb[0].mxu0
        %v4500 = vpop.f32.mrb[0].mxu0
        %v4501 = vadd.f32 0.0, %v4500
        %v4502 = vpop.f32.mrb[0].mxu0
        %4503 = vdwg.mxu0
        %v4504 = vadd.f32 %v4440, %v4498
        %v4505 = vadd.f32 %v4441, %v4501
        %4506 = vrot.lane.b32.xlu0 %v3995, 119
        %v4507 = vpop.permute.xlu0 %4506
        %4508 = vrot.lane.b32.xlu0 %v3996, 119
        %v4509 = vpop.permute.xlu0 %4508
        %v4511 = vsel %vm3875, %v4507, 0
        %v4514 = vsel %vm3875, %v4509, 0
        %v4516 = vmul.bf16 %v4511, %v3890
        %v4517 = vmul.bf16 %v4514, %v3890
        %s4518 = scalar_lea.vmem [#allocation30], 64
        %v4519 = vld [vmem:[%s4518] sm:$0xf]
        %v4520 = vld [vmem:[%s4518 + $0x4] sm:$0xf]
        %v4523 = vunpack.c.l.b16 %v4519
        %v4524 = vunpack.c.l.b16 %v4520
        %v4525 = vpack.c.b16 %v4524, %v4523
        %v4527 = vsel %vm1102, %v4525, 0
        %4529 = vmatprep.subr.bf16.mxu0 0
        %4530 = vmatpush1.bf16.msra.mxu0 %v4516
        %4531 = vmatprep.subr.bf16.mxu0 0
        %4532 = vmatpush1.bf16.msra.mxu0 %v4517
        %4533 = vmatprep.subr.bf16.mxu0 0
        %4534 = vmatpush1.bf16.msra.mxu0 0
        %4535 = vmatprep.subr.bf16.mxu0 0
        %4536 = vmatpush1.bf16.msra.mxu0 0
        %4537 = vmatprep.subr.bf16.mxu0 0
        %4538 = vmatpush1.bf16.msra.mxu0 0
        %4539 = vmatprep.subr.bf16.mxu0 0
        %4540 = vmatpush1.bf16.msra.mxu0 0
        %4541 = vmatprep.subr.bf16.mxu0 0
        %4542 = vmatpush1.bf16.msra.mxu0 0
        %4543 = vmatprep.subr.bf16.mxu0 0
        %4544 = vmatpush1.bf16.msra.mxu0 0
        %4545 = vmatprep.subr.bf16.mxu0 0
        %4546 = vmatpush1.bf16.msra.mxu0 0
        %4547 = vmatprep.subr.bf16.mxu0 0
        %4548 = vmatpush1.bf16.msra.mxu0 0
        %4549 = vmatprep.subr.bf16.mxu0 0
        %4550 = vmatpush1.bf16.msra.mxu0 0
        %4551 = vmatprep.subr.bf16.mxu0 0
        %4552 = vmatpush1.bf16.msra.mxu0 0
        %4553 = vmatprep.subr.bf16.mxu0 0
        %4554 = vmatpush1.bf16.msra.mxu0 0
        %4555 = vmatprep.subr.bf16.mxu0 0
        %4556 = vmatpush1.bf16.msra.mxu0 0
        %4557 = vmatprep.subr.bf16.mxu0 0
        %4558 = vmatpush1.bf16.msra.mxu0 0
        %4559 = vmatprep.subr.bf16.mxu0 0
        %4560 = vmatpush1.bf16.msra.mxu0 0
        %4561 = vmatprep.mubr.bf16.mxu0 0
        %4562 = vmatmul.mubr.bf16.gmra.mrb[0].mxu0 %v4527
        %v4563 = vpop.f32.mrb[0].mxu0
        %v4564 = vadd.f32 0.0, %v4563
        %v4565 = vpop.f32.mrb[0].mxu0
        %v4566 = vpop.f32.mrb[0].mxu0
        %v4567 = vadd.f32 0.0, %v4566
        %v4568 = vpop.f32.mrb[0].mxu0
        %4569 = vdwg.mxu0
        %v4570 = vadd.f32 %v4504, %v4564
        %v4571 = vadd.f32 %v4505, %v4567
        %v4572 = vld [vmem:[#allocation31] sm:$0xff]
        %v4573 = vld [vmem:[#allocation31 + $0x8] sm:$0xff]
        %4575 = vset.pattern.permute.xlu0 0
        %4576 = vperm.xlu0 %4575, %v4572
        %v4577 = vpop.permute.xlu0 %4576
        %4580 = vset.pattern.permute.xlu0 0
        %4581 = vperm.xlu0 %4580, %v4573
        %v4582 = vpop.permute.xlu0 %4581
        %v4584 = vadd.f32 %v4570, %v4577
        %v4585 = vadd.f32 %v4571, %v4582
        %v4586 = vmax.f32 %v4584, 0.0
        %v4587 = vmax.f32 %v4585, 0.0
        %vm4588 = vcmask 523264
        %4589 = vst.msk [vmem:[%s1046] sm:$0xff] %vm4588, %v4586
        %4590 = vst.msk [vmem:[%s1046 + $0x8] sm:$0xff] %vm4588, %v4587
        %s4591 = sand.u32 %s531, 1
        %s4592 = scalar_lea.sflag [#allocation4], %s4591
        %s4593 = sand.u32 %s531, 1
        %s4594 = smul.addr %s4593, 16
        %s4595 = scalar_lea.vmem [#allocation33], %s4594
        // Predicated region
        $region197: #{tpu_custom_call.1} parent=107 // pred_check
          %p4596 = pneg %p541
        $region198: #{tpu_custom_call.1} parent=107 // pred_check_branch
          %4598 = sbr.rel (%p4596) target = $region200
        $region199: #{tpu_custom_call.1} parent=107 // pred_region
          %s4600 = ssub.s32 256, 256
          %4601 = vsyncadd %s4592, %s4600
          %s4602 = smul.addr %s46, 2
          %s4603 = smul.addr %s4602, 128
          %s4604 = scalar_lea.hbm %s22, %s4603
          %s4605 = sshll.u32 %s4595, 4
          %s4606 = int_to_ptr.vmem [resolvable:$true] %s4605
          %4611 = dma.vmem_to_hbm [thread:$0]  %s4606, 256, %s4604, %s4592, 128, 128, 8
        $region200: #{tpu_custom_call.1} parent=107 // pred_fallthru
          _
      $region108: #{tpu_custom_call.1} parent=5 // pred_fallthru
        _
      %p4612 = scmp.le.s32.totalorder 2, %s41
      // Predicated region
      $region201: #{tpu_custom_call.1} parent=5 // pred_check
        %p4613 = pneg %p4612
      $region202: #{tpu_custom_call.1} parent=5 // pred_check_branch
        %4615 = sbr.rel (%p4613) target = $region204
      $region203: #{tpu_custom_call.1} parent=5 // pred_region
        %s4616 = ssub.s32 %s41, 2
        // Predicated region
        $region205: #{tpu_custom_call.1} parent=203 // pred_check
          %p4617 = pneg %p547
        $region206: #{tpu_custom_call.1} parent=203 // pred_check_branch
          %4619 = sbr.rel (%p4617) target = $region208
        $region207: #{tpu_custom_call.1} parent=203 // pred_region
          %s4620 = sand.u32 %s532, 1
          %s4621 = scalar_lea.sflag [#allocation4], %s4620
          %s4622 = sand.u32 %s532, 1
          %s4623 = smul.addr %s4622, 16
          %s4624 = scalar_lea.vmem [#allocation33], %s4623
          %4625 = dma.done %s4621, 256
        $region208: #{tpu_custom_call.1} parent=203 // pred_fallthru
          _
      $region204: #{tpu_custom_call.1} parent=5 // pred_fallthru
        _
    $region6: #{tpu_custom_call.1} parent=1 // loop_footer
      %s45 = sadd.s32 1, %s41
    $region7: #{tpu_custom_call.1} parent=1 // loop_footer_branch
      %40 = sbr.rel target = $region3
    $region8: #{tpu_custom_call.1} parent=1 // loop_exit
      _
    %4626 = vsyncpa [#allocation3], 1
    %s4627 = scalar_lea.sflag [#allocation3], 1
    %4628 = vsyncpa %s4627, 1
    %4629 = vsyncpa [#allocation6], 1
    %4630 = vsyncpa [#allocation9], 1
    %4631 = vsyncpa [#allocation12], 1
    %4632 = vsyncpa [#allocation18], 1
    %4633 = vsyncpa [#allocation21], 1
    %4634 = vsyncpa [#allocation29], 1
    %4635 = vsyncpa [#allocation32], 1
    %4636 = vsyncpa [#allocation4], 1
    %s4637 = scalar_lea.sflag [#allocation4], 1
    %4638 = vsyncpa %s4637, 1

</llo_original>
